<compile_context>
chip_gen: v7x
topology: tpu7x:2x2x1
jax: 0.10.0
libtpu: 0.0.40
codegen_flags: <defaults>
</compile_context>

<pallas_src>
import functools

import numpy as np
import jax
import jax.numpy as jnp
from jax.experimental import pallas as pl
from jax.experimental.pallas import tpu as pltpu

NUM_BRANCHES = 7


def _elu(x):
    # ELU(alpha=1); exp argument clamped so the masked positive lane never infs.
    return jnp.where(x > 0, x, jnp.exp(jnp.minimum(x, 0.0)) - 1.0)


# --------------------------------------------------------------------------
# Fused kernel: 7x (conv1 -> ELU -> conv2 -> ELU -> maxpool) -> concat ->
#               fc1 -> ELU -> (dropout = identity) -> fc2 -> ELU -> fc3 ->
#               sigmoid
# --------------------------------------------------------------------------
def fused_kernel(x_ref, w1_ref, b1_ref, w2_ref, b2_ref,
                 fc1_w_ref, fc1_b_ref, fc2_w_ref, fc2_b_ref,
                 fc3_w_ref, fc3_b_ref, o_ref, *, pool, ks1_list, ks2_list):
    _, TB, L = x_ref.shape
    K1 = b1_ref.shape[1]
    K2 = b2_ref.shape[1]

    m_blocks = []
    for i in range(NUM_BRANCHES):
        ks1, ks2 = ks1_list[i], ks2_list[i]
        L1 = L - ks1 + 1
        L2 = L1 - ks2 + 1
        Lm = L2 - pool + 1                      # overlapping running-max length

        xb = x_ref[i]                           # (TB, L)

        # ---- conv1 (in_ch = 1): VPU shift-MAC, fully vectorized over batch.
        acc1 = xb[:, None, 0:L1] * w1_ref[i, 0][None, :, :]
        for j in range(1, ks1):
            acc1 = acc1 + xb[:, None, j:j + L1] * w1_ref[i, j][None, :, :]
        h1 = _elu(acc1 + b1_ref[i][None, :, :])            # (TB, K1, L1)

        # ---- conv2: tiny contraction (ks2*K1 <= 12) -> VPU shift-MAC; the
        #      MXU would be <1% utilized at these shapes.
        acc2 = None
        for j in range(ks2):
            for k in range(K1):
                term = h1[:, k:k + 1, j:j + L2] * w2_ref[i, j, k][None, :, :]
                acc2 = term if acc2 is None else acc2 + term
        h2 = _elu(acc2 + b2_ref[i][None, :, :])             # (TB, K2, L2)

        # ---- MaxPool1d(kernel=stride=pool): overlapping running max with
        #      unit-stride lane slices; the stride-`pool` subsampling is folded
        #      into fc1's zero-padded weight rows (see prepare_params).
        m = h2[:, :, 0:Lm]
        for r in range(1, pool):
            m = jnp.maximum(m, h2[:, :, r:r + Lm])
        m_blocks.append(m)                                   # (TB, K2, Lm)

    m_all = m_blocks[0] if NUM_BRANCHES == 1 else jnp.concatenate(m_blocks, axis=2)
    # (TB, K2, Lm_total) -> (TB, K2*Lm_total), channel-major; fc1 rows were
    # permuted at init to this exact order (no in-kernel transpose/reshape).
    feat3 = jnp.concatenate([m_all[:, c:c + 1, :] for c in range(K2)], axis=2)
    feat = feat3[:, 0, :]                                    # (TB, F2)

    # ---- FC head (dropout is the identity at inference)
    h = _elu(jnp.dot(feat, fc1_w_ref[...],
                     preferred_element_type=jnp.float32) + fc1_b_ref[...])
    h = _elu(jnp.dot(h, fc2_w_ref[...],
                     preferred_element_type=jnp.float32) + fc2_b_ref[...])
    # fc3 has output width 1 -> VPU multiply + lane reduce instead of a matvec.
    z = jnp.sum(h * fc3_w_ref[...], axis=-1, keepdims=True) + fc3_b_ref[...]
    o_ref[...] = pl.reciprocal(1.0 + jnp.exp(-z), approx=True)   # sigmoid


def forward(prepared, x, *, pool, ks1_list, ks2_list):
    # x: (B, L, 7), same indexing convention as the torch model's x[:, :, i].
    B, L, C = x.shape
    assert C == NUM_BRANCHES
    # Channel de-interleave once in the wrapper (negligible at small B).
    # TODO(synk): for very large B accept x channel-major to skip this pass.
    xT = jnp.transpose(x, (2, 0, 1)).astype(jnp.float32)     # (7, B, L)

    # Batch tiling: second-to-last block dims must equal the full dim or be a
    # multiple of 8; TB <= 128 bounds VMEM and lets v7x use both TensorCores.
    TB = B if B <= 128 else 128
    assert B % TB == 0, "pad the batch to a multiple of 128 for large B"

    weights = [prepared["conv1_w"], prepared["conv1_b"],
               prepared["conv2_w"], prepared["conv2_b"],
               prepared["fc1_w"], prepared["fc1_b"],
               prepared["fc2_w"], prepared["fc2_b"],
               prepared["fc3_w"], prepared["fc3_b"]]

    def resident(a):   # full-array block, same block every grid step
        return pl.BlockSpec(a.shape, lambda b, _nd=a.ndim: (0,) * _nd)

    out = pl.pallas_call(
        functools.partial(fused_kernel, pool=pool,
                          ks1_list=tuple(ks1_list), ks2_list=tuple(ks2_list)),
        out_shape=jax.ShapeDtypeStruct((B, 1), jnp.float32),
        grid=(B // TB,),
        in_specs=[pl.BlockSpec((NUM_BRANCHES, TB, L), lambda b: (0, b, 0))]
                 + [resident(a) for a in weights],
        out_specs=pl.BlockSpec((TB, 1), lambda b: (b, 0)),
        compiler_params=pltpu.CompilerParams(dimension_semantics=("parallel",)),
    )(xT, *weights)
    return out[:, 0]                                         # torch .squeeze()


# --------------------------------------------------------------------------
# Parameters: PyTorch-layout init + one-time layout preparation for the kernel
# --------------------------------------------------------------------------
def _uniform(key, shape, fan_in):
    bound = 1.0 / jnp.sqrt(jnp.asarray(float(fan_in)))
    return jax.random.uniform(key, shape, jnp.float32, -bound, bound)


def init_params(key, input_length, K1, K2, ks1_list, ks2_list, pool, fc_size=128):
    """Parameters with the exact shapes of the PyTorch module."""
    keys = iter(jax.random.split(key, 64))
    p = {"conv1_w": [], "conv1_b": [], "conv2_w": [], "conv2_b": []}
    out_len = 0
    for i in range(NUM_BRANCHES):
        ks1, ks2 = ks1_list[i], ks2_list[i]
        p["conv1_w"].append(_uniform(next(keys), (K1, 1, ks1), 1 * ks1))
        p["conv1_b"].append(_uniform(next(keys), (K1,), 1 * ks1))
        p["conv2_w"].append(_uniform(next(keys), (K2, K1, ks2), K1 * ks2))
        p["conv2_b"].append(_uniform(next(keys), (K2,), K1 * ks2))
        out_len += (input_length - ks1 + 1 - ks2 + 1 - pool) // pool + 1
    f_in = out_len * K2
    h1 = fc_size + 200
    p["fc1_w"] = _uniform(next(keys), (h1, f_in), f_in)      # torch (out, in)
    p["fc1_b"] = _uniform(next(keys), (h1,), f_in)
    p["fc2_w"] = _uniform(next(keys), (40, h1), h1)
    p["fc2_b"] = _uniform(next(keys), (40,), h1)
    p["fc3_w"] = _uniform(next(keys), (1, 40), 40)
    p["fc3_b"] = _uniform(next(keys), (1,), 40)
    return p


def prepare_params(p, input_length, pool, ks1_list, ks2_list):
    """One-time layout work (outside the per-call hot path):
       * conv weights packed into 4 stacked, tap-major, zero-padded tensors
       * FC weights pre-transposed to (in, out)
       * fc1 rows permuted to the kernel's (channel, branch-concat position)
         feature order AND zero-padded at non-pool-aligned positions so the
         kernel contracts the overlapping running-max slab directly.
    """
    K1 = p["conv1_w"][0].shape[0]
    K2 = p["conv2_w"][0].shape[0]
    H1 = p["fc1_w"].shape[0]
    ks1m, ks2m = max(ks1_list), max(ks2_list)

    w1s = np.zeros((NUM_BRANCHES, ks1m, K1, 1), np.float32)
    b1s = np.zeros((NUM_BRANCHES, K1, 1), np.float32)
    w2s = np.zeros((NUM_BRANCHES, ks2m, K1, K2, 1), np.float32)
    b2s = np.zeros((NUM_BRANCHES, K2, 1), np.float32)

    Lm_list, pool_len_list = [], []
    for i in range(NUM_BRANCHES):
        ks1, ks2 = ks1_list[i], ks2_list[i]
        L2 = input_length - ks1 + 1 - ks2 + 1
        pool_len_list.append((L2 - pool) // pool + 1)
        Lm_list.append(L2 - pool + 1)
        w1 = np.asarray(p["conv1_w"][i])                     # (K1, 1, ks1)
        w1s[i, :ks1, :, 0] = w1[:, 0, :].T                   # tap-major (ks1, K1)
        b1s[i, :, 0] = np.asarray(p["conv1_b"][i])
        w2 = np.asarray(p["conv2_w"][i])                     # (K2, K1, ks2)
        w2s[i, :ks2, :, :, 0] = np.transpose(w2, (2, 1, 0))  # (ks2, K1, K2)
        b2s[i, :, 0] = np.asarray(p["conv2_b"][i])

    Lm_total = sum(Lm_list)
    fc1_wT = np.asarray(p["fc1_w"]).T                        # (F_torch, H1)
    W1 = np.zeros((K2 * Lm_total, H1), np.float32)           # zero-padded rows
    off_m = off_f = 0
    for i in range(NUM_BRANCHES):
        pli, Lmi = pool_len_list[i], Lm_list[i]
        for c in range(K2):
            for t in range(pli):
                W1[c * Lm_total + off_m + t * pool, :] = fc1_wT[off_f + c * pli + t, :]
        off_m += Lmi
        off_f += K2 * pli

    return {
        "conv1_w": jnp.asarray(w1s), "conv1_b": jnp.asarray(b1s),
        "conv2_w": jnp.asarray(w2s), "conv2_b": jnp.asarray(b2s),
        "fc1_w": jnp.asarray(W1),
        "fc1_b": jnp.asarray(p["fc1_b"])[None, :],
        "fc2_w": jnp.asarray(p["fc2_w"]).T,
        "fc2_b": jnp.asarray(p["fc2_b"])[None, :],
        "fc3_w": jnp.asarray(p["fc3_w"]),                    # (1, 40) row vector
        "fc3_b": jnp.asarray(p["fc3_b"])[None, :],           # (1, 1)
    }


# --------------------------------------------------------------------------
# Pure-JAX (non-Pallas) reference of the PyTorch forward, for a numerics check
# --------------------------------------------------------------------------
def reference_forward(p, x, pool):
    B, L, _ = x.shape
    feats = []
    for i in range(NUM_BRANCHES):
        w1, b1 = p["conv1_w"][i], p["conv1_b"][i]
        w2, b2 = p["conv2_w"][i], p["conv2_b"][i]
        K1, _, ks1 = w1.shape
        K2, _, ks2 = w2.shape
        L1 = L - ks1 + 1
        L2 = L1 - ks2 + 1
        pool_len = (L2 - pool) // pool + 1
        xi = x[:, :, i]
        h1 = jnp.zeros((B, K1, L1), jnp.float32)
        for j in range(ks1):
            h1 = h1 + xi[:, None, j:j + L1] * w1[:, 0, j][None, :, None]
        h1 = jax.nn.elu(h1 + b1[None, :, None])
        h2 = jnp.zeros((B, K2, L2), jnp.float32)
        for j in range(ks2):
            h2 = h2 + jnp.einsum('bcl,oc->bol', h1[:, :, j:j + L2], w2[:, :, j])
        h2 = jax.nn.elu(h2 + b2[None, :, None])
        pooled = jnp.max(h2[:, :, :pool_len * pool].reshape(B, K2, pool_len, pool), axis=-1)
        feats.append(pooled.reshape(B, K2 * pool_len))
    feat = jnp.concatenate(feats, axis=1)
    h = jax.nn.elu(feat @ p["fc1_w"].T + p["fc1_b"])
    h = jax.nn.elu(h @ p["fc2_w"].T + p["fc2_b"])
    z = h @ p["fc3_w"].T + p["fc3_b"]
    return jax.nn.sigmoid(z)[:, 0]


if __name__ == "__main__":
    B = 2
    input_length = 16
    num_kernel_conv1 = 4
    num_kernel_conv2 = 8
    kernel_size_conv1 = [3, 2, 3, 2, 3, 2, 3]
    kernel_size_conv2 = [2, 3, 2, 3, 2, 3, 2]
    kernel_size_pooling = 2

    key = jax.random.PRNGKey(0)
    pkey, xkey = jax.random.split(key)
    torch_params = init_params(pkey, input_length, num_kernel_conv1, num_kernel_conv2,
                               kernel_size_conv1, kernel_size_conv2, kernel_size_pooling)
    params = prepare_params(torch_params, input_length, kernel_size_pooling,
                            kernel_size_conv1, kernel_size_conv2)
    x = jax.random.normal(xkey, (B, input_length, NUM_BRANCHES), jnp.float32)

    fwd = jax.jit(functools.partial(forward, pool=kernel_size_pooling,
                                    ks1_list=tuple(kernel_size_conv1),
                                    ks2_list=tuple(kernel_size_conv2)))
    out = jax.block_until_ready(fwd(params, x))

    assert out.shape == (B,), out.shape
    assert bool(jnp.all(jnp.isfinite(out)))
    # sigmoid range (small slack for the approx EUP reciprocal)
    assert bool(jnp.all((out >= -1e-3) & (out <= 1.0 + 1e-3)))

    # Numerics cross-check against a pure-JAX implementation of the torch model
    # (tolerance absorbs MXU default precision on fc1/fc2 + approx reciprocal).
    with jax.default_matmul_precision("highest"):
        ref = jax.block_until_ready(reference_forward(torch_params, x, kernel_size_pooling))
    assert bool(jnp.allclose(out, ref, atol=2e-2, rtol=2e-2)), (out, ref)

    print("KERNEL_OK")
</pallas_src>

<mosaic_0001>
module attributes {stable_mosaic.version = 11 : i64} {
  func.func @fused_kernel(%arg0: i32, %arg1: memref<7x2x16xf32, #tpu.memory_space<vmem>>, %arg2: memref<7x3x4x1xf32, #tpu.memory_space<vmem>>, %arg3: memref<7x4x1xf32, #tpu.memory_space<vmem>>, %arg4: memref<7x3x4x8x1xf32, #tpu.memory_space<vmem>>, %arg5: memref<7x8x1xf32, #tpu.memory_space<vmem>>, %arg6: memref<672x328xf32, #tpu.memory_space<vmem>>, %arg7: memref<1x328xf32, #tpu.memory_space<vmem>>, %arg8: memref<328x40xf32, #tpu.memory_space<vmem>>, %arg9: memref<1x40xf32, #tpu.memory_space<vmem>>, %arg10: memref<1x40xf32, #tpu.memory_space<vmem>>, %arg11: memref<1x1xf32, #tpu.memory_space<vmem>>, %arg12: memref<2x1xf32, #tpu.memory_space<vmem>>) attributes {dimension_semantics = [#tpu.dimension_semantics<parallel>], iteration_bounds = array<i64: 1>, scalar_prefetch = 0 : i64, scratch_operands = 0 : i64, tpu.core_type = #tpu.core_type<tc>, window_params = [{transform_indices = @transform_0, window_bounds = array<i64: 7, 2, 16>}, {pipeline_mode = #tpu.pipeline_mode<synchronous>, transform_indices = @transform_1, window_bounds = array<i64: 7, 3, 4, 1>}, {pipeline_mode = #tpu.pipeline_mode<synchronous>, transform_indices = @transform_2, window_bounds = array<i64: 7, 4, 1>}, {pipeline_mode = #tpu.pipeline_mode<synchronous>, transform_indices = @transform_3, window_bounds = array<i64: 7, 3, 4, 8, 1>}, {pipeline_mode = #tpu.pipeline_mode<synchronous>, transform_indices = @transform_4, window_bounds = array<i64: 7, 8, 1>}, {pipeline_mode = #tpu.pipeline_mode<synchronous>, transform_indices = @transform_5, window_bounds = array<i64: 672, 328>}, {pipeline_mode = #tpu.pipeline_mode<synchronous>, transform_indices = @transform_6, window_bounds = array<i64: 1, 328>}, {pipeline_mode = #tpu.pipeline_mode<synchronous>, transform_indices = @transform_7, window_bounds = array<i64: 328, 40>}, {pipeline_mode = #tpu.pipeline_mode<synchronous>, transform_indices = @transform_8, window_bounds = array<i64: 1, 40>}, {pipeline_mode = #tpu.pipeline_mode<synchronous>, transform_indices = @transform_9, window_bounds = array<i64: 1, 40>}, {pipeline_mode = #tpu.pipeline_mode<synchronous>, transform_indices = @transform_10, window_bounds = array<i64: 1, 1>}, {transform_indices = @transform_11, window_bounds = array<i64: 2, 1>}]} {
    %c0 = arith.constant 0 : index
    %c0_0 = arith.constant 0 : index
    %c0_1 = arith.constant 0 : index
    %0 = vector.load %arg1[%c0, %c0_0, %c0_1] : memref<7x2x16xf32, #tpu.memory_space<vmem>>, vector<1x2x16xf32>
    %1 = vector.shape_cast %0 : vector<1x2x16xf32> to vector<2x16xf32>
    %2 = vector.extract_strided_slice %1 {offsets = [0, 0], sizes = [2, 14], strides = [1, 1]} : vector<2x16xf32> to vector<2x14xf32>
    %3 = vector.shape_cast %2 : vector<2x14xf32> to vector<2x1x14xf32>
    %c0_2 = arith.constant 0 : index
    %c0_3 = arith.constant 0 : index
    %c0_4 = arith.constant 0 : index
    %c0_5 = arith.constant 0 : index
    %4 = vector.load %arg2[%c0_2, %c0_3, %c0_4, %c0_5] : memref<7x3x4x1xf32, #tpu.memory_space<vmem>>, vector<1x1x4x1xf32>
    %5 = vector.shape_cast %4 : vector<1x1x4x1xf32> to vector<4x1xf32>
    %6 = vector.shape_cast %5 : vector<4x1xf32> to vector<1x4x1xf32>
    %7 = vector.broadcast %3 : vector<2x1x14xf32> to vector<2x4x14xf32>
    %8 = vector.broadcast %6 : vector<1x4x1xf32> to vector<2x4x14xf32>
    %9 = arith.mulf %7, %8 : vector<2x4x14xf32>
    %10 = vector.extract_strided_slice %1 {offsets = [0, 1], sizes = [2, 14], strides = [1, 1]} : vector<2x16xf32> to vector<2x14xf32>
    %11 = vector.shape_cast %10 : vector<2x14xf32> to vector<2x1x14xf32>
    %c0_6 = arith.constant 0 : index
    %c1 = arith.constant 1 : index
    %c0_7 = arith.constant 0 : index
    %c0_8 = arith.constant 0 : index
    %12 = vector.load %arg2[%c0_6, %c1, %c0_7, %c0_8] : memref<7x3x4x1xf32, #tpu.memory_space<vmem>>, vector<1x1x4x1xf32>
    %13 = vector.shape_cast %12 : vector<1x1x4x1xf32> to vector<4x1xf32>
    %14 = vector.shape_cast %13 : vector<4x1xf32> to vector<1x4x1xf32>
    %15 = vector.broadcast %11 : vector<2x1x14xf32> to vector<2x4x14xf32>
    %16 = vector.broadcast %14 : vector<1x4x1xf32> to vector<2x4x14xf32>
    %17 = arith.mulf %15, %16 : vector<2x4x14xf32>
    %18 = arith.addf %9, %17 : vector<2x4x14xf32>
    %19 = vector.extract_strided_slice %1 {offsets = [0, 2], sizes = [2, 14], strides = [1, 1]} : vector<2x16xf32> to vector<2x14xf32>
    %20 = vector.shape_cast %19 : vector<2x14xf32> to vector<2x1x14xf32>
    %c0_9 = arith.constant 0 : index
    %c2 = arith.constant 2 : index
    %c0_10 = arith.constant 0 : index
    %c0_11 = arith.constant 0 : index
    %21 = vector.load %arg2[%c0_9, %c2, %c0_10, %c0_11] : memref<7x3x4x1xf32, #tpu.memory_space<vmem>>, vector<1x1x4x1xf32>
    %22 = vector.shape_cast %21 : vector<1x1x4x1xf32> to vector<4x1xf32>
    %23 = vector.shape_cast %22 : vector<4x1xf32> to vector<1x4x1xf32>
    %24 = vector.broadcast %20 : vector<2x1x14xf32> to vector<2x4x14xf32>
    %25 = vector.broadcast %23 : vector<1x4x1xf32> to vector<2x4x14xf32>
    %26 = arith.mulf %24, %25 : vector<2x4x14xf32>
    %27 = arith.addf %18, %26 : vector<2x4x14xf32>
    %c0_12 = arith.constant 0 : index
    %c0_13 = arith.constant 0 : index
    %c0_14 = arith.constant 0 : index
    %28 = vector.load %arg3[%c0_12, %c0_13, %c0_14] : memref<7x4x1xf32, #tpu.memory_space<vmem>>, vector<1x4x1xf32>
    %29 = vector.shape_cast %28 : vector<1x4x1xf32> to vector<4x1xf32>
    %30 = vector.shape_cast %29 : vector<4x1xf32> to vector<1x4x1xf32>
    %31 = vector.broadcast %30 : vector<1x4x1xf32> to vector<2x4x14xf32>
    %32 = arith.addf %27, %31 : vector<2x4x14xf32>
    %cst = arith.constant 0.000000e+00 : f32
    %33 = vector.broadcast %cst : f32 to vector<2x4x14xf32>
    %34 = arith.cmpf ogt, %32, %33 : vector<2x4x14xf32>
    %cst_15 = arith.constant 0.000000e+00 : f32
    %35 = vector.broadcast %cst_15 : f32 to vector<2x4x14xf32>
    %36 = arith.minimumf %32, %35 : vector<2x4x14xf32>
    %37 = math.exp %36 : vector<2x4x14xf32>
    %cst_16 = arith.constant 1.000000e+00 : f32
    %38 = vector.broadcast %cst_16 : f32 to vector<2x4x14xf32>
    %39 = arith.subf %37, %38 : vector<2x4x14xf32>
    %40 = arith.select %34, %32, %39 : vector<2x4x14xi1>, vector<2x4x14xf32>
    %41 = vector.extract_strided_slice %40 {offsets = [0, 0, 0], sizes = [2, 1, 13], strides = [1, 1, 1]} : vector<2x4x14xf32> to vector<2x1x13xf32>
    %c0_17 = arith.constant 0 : index
    %c0_18 = arith.constant 0 : index
    %c0_19 = arith.constant 0 : index
    %c0_20 = arith.constant 0 : index
    %c0_21 = arith.constant 0 : index
    %42 = vector.load %arg4[%c0_17, %c0_18, %c0_19, %c0_20, %c0_21] : memref<7x3x4x8x1xf32, #tpu.memory_space<vmem>>, vector<1x1x1x8x1xf32>
    %43 = vector.shape_cast %42 : vector<1x1x1x8x1xf32> to vector<8x1xf32>
    %44 = vector.shape_cast %43 : vector<8x1xf32> to vector<1x8x1xf32>
    %45 = vector.broadcast %41 : vector<2x1x13xf32> to vector<2x8x13xf32>
    %46 = vector.broadcast %44 : vector<1x8x1xf32> to vector<2x8x13xf32>
    %47 = arith.mulf %45, %46 : vector<2x8x13xf32>
    %48 = vector.extract_strided_slice %40 {offsets = [0, 1, 0], sizes = [2, 1, 13], strides = [1, 1, 1]} : vector<2x4x14xf32> to vector<2x1x13xf32>
    %c0_22 = arith.constant 0 : index
    %c0_23 = arith.constant 0 : index
    %c1_24 = arith.constant 1 : index
    %c0_25 = arith.constant 0 : index
    %c0_26 = arith.constant 0 : index
    %49 = vector.load %arg4[%c0_22, %c0_23, %c1_24, %c0_25, %c0_26] : memref<7x3x4x8x1xf32, #tpu.memory_space<vmem>>, vector<1x1x1x8x1xf32>
    %50 = vector.shape_cast %49 : vector<1x1x1x8x1xf32> to vector<8x1xf32>
    %51 = vector.shape_cast %50 : vector<8x1xf32> to vector<1x8x1xf32>
    %52 = vector.broadcast %48 : vector<2x1x13xf32> to vector<2x8x13xf32>
    %53 = vector.broadcast %51 : vector<1x8x1xf32> to vector<2x8x13xf32>
    %54 = arith.mulf %52, %53 : vector<2x8x13xf32>
    %55 = arith.addf %47, %54 : vector<2x8x13xf32>
    %56 = vector.extract_strided_slice %40 {offsets = [0, 2, 0], sizes = [2, 1, 13], strides = [1, 1, 1]} : vector<2x4x14xf32> to vector<2x1x13xf32>
    %c0_27 = arith.constant 0 : index
    %c0_28 = arith.constant 0 : index
    %c2_29 = arith.constant 2 : index
    %c0_30 = arith.constant 0 : index
    %c0_31 = arith.constant 0 : index
    %57 = vector.load %arg4[%c0_27, %c0_28, %c2_29, %c0_30, %c0_31] : memref<7x3x4x8x1xf32, #tpu.memory_space<vmem>>, vector<1x1x1x8x1xf32>
    %58 = vector.shape_cast %57 : vector<1x1x1x8x1xf32> to vector<8x1xf32>
    %59 = vector.shape_cast %58 : vector<8x1xf32> to vector<1x8x1xf32>
    %60 = vector.broadcast %56 : vector<2x1x13xf32> to vector<2x8x13xf32>
    %61 = vector.broadcast %59 : vector<1x8x1xf32> to vector<2x8x13xf32>
    %62 = arith.mulf %60, %61 : vector<2x8x13xf32>
    %63 = arith.addf %55, %62 : vector<2x8x13xf32>
    %64 = vector.extract_strided_slice %40 {offsets = [0, 3, 0], sizes = [2, 1, 13], strides = [1, 1, 1]} : vector<2x4x14xf32> to vector<2x1x13xf32>
    %c0_32 = arith.constant 0 : index
    %c0_33 = arith.constant 0 : index
    %c3 = arith.constant 3 : index
    %c0_34 = arith.constant 0 : index
    %c0_35 = arith.constant 0 : index
    %65 = vector.load %arg4[%c0_32, %c0_33, %c3, %c0_34, %c0_35] : memref<7x3x4x8x1xf32, #tpu.memory_space<vmem>>, vector<1x1x1x8x1xf32>
    %66 = vector.shape_cast %65 : vector<1x1x1x8x1xf32> to vector<8x1xf32>
    %67 = vector.shape_cast %66 : vector<8x1xf32> to vector<1x8x1xf32>
    %68 = vector.broadcast %64 : vector<2x1x13xf32> to vector<2x8x13xf32>
    %69 = vector.broadcast %67 : vector<1x8x1xf32> to vector<2x8x13xf32>
    %70 = arith.mulf %68, %69 : vector<2x8x13xf32>
    %71 = arith.addf %63, %70 : vector<2x8x13xf32>
    %72 = vector.extract_strided_slice %40 {offsets = [0, 0, 1], sizes = [2, 1, 13], strides = [1, 1, 1]} : vector<2x4x14xf32> to vector<2x1x13xf32>
    %c0_36 = arith.constant 0 : index
    %c1_37 = arith.constant 1 : index
    %c0_38 = arith.constant 0 : index
    %c0_39 = arith.constant 0 : index
    %c0_40 = arith.constant 0 : index
    %73 = vector.load %arg4[%c0_36, %c1_37, %c0_38, %c0_39, %c0_40] : memref<7x3x4x8x1xf32, #tpu.memory_space<vmem>>, vector<1x1x1x8x1xf32>
    %74 = vector.shape_cast %73 : vector<1x1x1x8x1xf32> to vector<8x1xf32>
    %75 = vector.shape_cast %74 : vector<8x1xf32> to vector<1x8x1xf32>
    %76 = vector.broadcast %72 : vector<2x1x13xf32> to vector<2x8x13xf32>
    %77 = vector.broadcast %75 : vector<1x8x1xf32> to vector<2x8x13xf32>
    %78 = arith.mulf %76, %77 : vector<2x8x13xf32>
    %79 = arith.addf %71, %78 : vector<2x8x13xf32>
    %80 = vector.extract_strided_slice %40 {offsets = [0, 1, 1], sizes = [2, 1, 13], strides = [1, 1, 1]} : vector<2x4x14xf32> to vector<2x1x13xf32>
    %c0_41 = arith.constant 0 : index
    %c1_42 = arith.constant 1 : index
    %c1_43 = arith.constant 1 : index
    %c0_44 = arith.constant 0 : index
    %c0_45 = arith.constant 0 : index
    %81 = vector.load %arg4[%c0_41, %c1_42, %c1_43, %c0_44, %c0_45] : memref<7x3x4x8x1xf32, #tpu.memory_space<vmem>>, vector<1x1x1x8x1xf32>
    %82 = vector.shape_cast %81 : vector<1x1x1x8x1xf32> to vector<8x1xf32>
    %83 = vector.shape_cast %82 : vector<8x1xf32> to vector<1x8x1xf32>
    %84 = vector.broadcast %80 : vector<2x1x13xf32> to vector<2x8x13xf32>
    %85 = vector.broadcast %83 : vector<1x8x1xf32> to vector<2x8x13xf32>
    %86 = arith.mulf %84, %85 : vector<2x8x13xf32>
    %87 = arith.addf %79, %86 : vector<2x8x13xf32>
    %88 = vector.extract_strided_slice %40 {offsets = [0, 2, 1], sizes = [2, 1, 13], strides = [1, 1, 1]} : vector<2x4x14xf32> to vector<2x1x13xf32>
    %c0_46 = arith.constant 0 : index
    %c1_47 = arith.constant 1 : index
    %c2_48 = arith.constant 2 : index
    %c0_49 = arith.constant 0 : index
    %c0_50 = arith.constant 0 : index
    %89 = vector.load %arg4[%c0_46, %c1_47, %c2_48, %c0_49, %c0_50] : memref<7x3x4x8x1xf32, #tpu.memory_space<vmem>>, vector<1x1x1x8x1xf32>
    %90 = vector.shape_cast %89 : vector<1x1x1x8x1xf32> to vector<8x1xf32>
    %91 = vector.shape_cast %90 : vector<8x1xf32> to vector<1x8x1xf32>
    %92 = vector.broadcast %88 : vector<2x1x13xf32> to vector<2x8x13xf32>
    %93 = vector.broadcast %91 : vector<1x8x1xf32> to vector<2x8x13xf32>
    %94 = arith.mulf %92, %93 : vector<2x8x13xf32>
    %95 = arith.addf %87, %94 : vector<2x8x13xf32>
    %96 = vector.extract_strided_slice %40 {offsets = [0, 3, 1], sizes = [2, 1, 13], strides = [1, 1, 1]} : vector<2x4x14xf32> to vector<2x1x13xf32>
    %c0_51 = arith.constant 0 : index
    %c1_52 = arith.constant 1 : index
    %c3_53 = arith.constant 3 : index
    %c0_54 = arith.constant 0 : index
    %c0_55 = arith.constant 0 : index
    %97 = vector.load %arg4[%c0_51, %c1_52, %c3_53, %c0_54, %c0_55] : memref<7x3x4x8x1xf32, #tpu.memory_space<vmem>>, vector<1x1x1x8x1xf32>
    %98 = vector.shape_cast %97 : vector<1x1x1x8x1xf32> to vector<8x1xf32>
    %99 = vector.shape_cast %98 : vector<8x1xf32> to vector<1x8x1xf32>
    %100 = vector.broadcast %96 : vector<2x1x13xf32> to vector<2x8x13xf32>
    %101 = vector.broadcast %99 : vector<1x8x1xf32> to vector<2x8x13xf32>
    %102 = arith.mulf %100, %101 : vector<2x8x13xf32>
    %103 = arith.addf %95, %102 : vector<2x8x13xf32>
    %c0_56 = arith.constant 0 : index
    %c0_57 = arith.constant 0 : index
    %c0_58 = arith.constant 0 : index
    %104 = vector.load %arg5[%c0_56, %c0_57, %c0_58] : memref<7x8x1xf32, #tpu.memory_space<vmem>>, vector<1x8x1xf32>
    %105 = vector.shape_cast %104 : vector<1x8x1xf32> to vector<8x1xf32>
    %106 = vector.shape_cast %105 : vector<8x1xf32> to vector<1x8x1xf32>
    %107 = vector.broadcast %106 : vector<1x8x1xf32> to vector<2x8x13xf32>
    %108 = arith.addf %103, %107 : vector<2x8x13xf32>
    %cst_59 = arith.constant 0.000000e+00 : f32
    %109 = vector.broadcast %cst_59 : f32 to vector<2x8x13xf32>
    %110 = arith.cmpf ogt, %108, %109 : vector<2x8x13xf32>
    %cst_60 = arith.constant 0.000000e+00 : f32
    %111 = vector.broadcast %cst_60 : f32 to vector<2x8x13xf32>
    %112 = arith.minimumf %108, %111 : vector<2x8x13xf32>
    %113 = math.exp %112 : vector<2x8x13xf32>
    %cst_61 = arith.constant 1.000000e+00 : f32
    %114 = vector.broadcast %cst_61 : f32 to vector<2x8x13xf32>
    %115 = arith.subf %113, %114 : vector<2x8x13xf32>
    %116 = arith.select %110, %108, %115 : vector<2x8x13xi1>, vector<2x8x13xf32>
    %117 = vector.extract_strided_slice %116 {offsets = [0, 0, 0], sizes = [2, 8, 12], strides = [1, 1, 1]} : vector<2x8x13xf32> to vector<2x8x12xf32>
    %118 = vector.extract_strided_slice %116 {offsets = [0, 0, 1], sizes = [2, 8, 12], strides = [1, 1, 1]} : vector<2x8x13xf32> to vector<2x8x12xf32>
    %119 = arith.maximumf %117, %118 : vector<2x8x12xf32>
    %c1_62 = arith.constant 1 : index
    %c0_63 = arith.constant 0 : index
    %c0_64 = arith.constant 0 : index
    %120 = vector.load %arg1[%c1_62, %c0_63, %c0_64] : memref<7x2x16xf32, #tpu.memory_space<vmem>>, vector<1x2x16xf32>
    %121 = vector.shape_cast %120 : vector<1x2x16xf32> to vector<2x16xf32>
    %122 = vector.extract_strided_slice %121 {offsets = [0, 0], sizes = [2, 15], strides = [1, 1]} : vector<2x16xf32> to vector<2x15xf32>
    %123 = vector.shape_cast %122 : vector<2x15xf32> to vector<2x1x15xf32>
    %c1_65 = arith.constant 1 : index
    %c0_66 = arith.constant 0 : index
    %c0_67 = arith.constant 0 : index
    %c0_68 = arith.constant 0 : index
    %124 = vector.load %arg2[%c1_65, %c0_66, %c0_67, %c0_68] : memref<7x3x4x1xf32, #tpu.memory_space<vmem>>, vector<1x1x4x1xf32>
    %125 = vector.shape_cast %124 : vector<1x1x4x1xf32> to vector<4x1xf32>
    %126 = vector.shape_cast %125 : vector<4x1xf32> to vector<1x4x1xf32>
    %127 = vector.broadcast %123 : vector<2x1x15xf32> to vector<2x4x15xf32>
    %128 = vector.broadcast %126 : vector<1x4x1xf32> to vector<2x4x15xf32>
    %129 = arith.mulf %127, %128 : vector<2x4x15xf32>
    %130 = vector.extract_strided_slice %121 {offsets = [0, 1], sizes = [2, 15], strides = [1, 1]} : vector<2x16xf32> to vector<2x15xf32>
    %131 = vector.shape_cast %130 : vector<2x15xf32> to vector<2x1x15xf32>
    %c1_69 = arith.constant 1 : index
    %c1_70 = arith.constant 1 : index
    %c0_71 = arith.constant 0 : index
    %c0_72 = arith.constant 0 : index
    %132 = vector.load %arg2[%c1_69, %c1_70, %c0_71, %c0_72] : memref<7x3x4x1xf32, #tpu.memory_space<vmem>>, vector<1x1x4x1xf32>
    %133 = vector.shape_cast %132 : vector<1x1x4x1xf32> to vector<4x1xf32>
    %134 = vector.shape_cast %133 : vector<4x1xf32> to vector<1x4x1xf32>
    %135 = vector.broadcast %131 : vector<2x1x15xf32> to vector<2x4x15xf32>
    %136 = vector.broadcast %134 : vector<1x4x1xf32> to vector<2x4x15xf32>
    %137 = arith.mulf %135, %136 : vector<2x4x15xf32>
    %138 = arith.addf %129, %137 : vector<2x4x15xf32>
    %c1_73 = arith.constant 1 : index
    %c0_74 = arith.constant 0 : index
    %c0_75 = arith.constant 0 : index
    %139 = vector.load %arg3[%c1_73, %c0_74, %c0_75] : memref<7x4x1xf32, #tpu.memory_space<vmem>>, vector<1x4x1xf32>
    %140 = vector.shape_cast %139 : vector<1x4x1xf32> to vector<4x1xf32>
    %141 = vector.shape_cast %140 : vector<4x1xf32> to vector<1x4x1xf32>
    %142 = vector.broadcast %141 : vector<1x4x1xf32> to vector<2x4x15xf32>
    %143 = arith.addf %138, %142 : vector<2x4x15xf32>
    %cst_76 = arith.constant 0.000000e+00 : f32
    %144 = vector.broadcast %cst_76 : f32 to vector<2x4x15xf32>
    %145 = arith.cmpf ogt, %143, %144 : vector<2x4x15xf32>
    %cst_77 = arith.constant 0.000000e+00 : f32
    %146 = vector.broadcast %cst_77 : f32 to vector<2x4x15xf32>
    %147 = arith.minimumf %143, %146 : vector<2x4x15xf32>
    %148 = math.exp %147 : vector<2x4x15xf32>
    %cst_78 = arith.constant 1.000000e+00 : f32
    %149 = vector.broadcast %cst_78 : f32 to vector<2x4x15xf32>
    %150 = arith.subf %148, %149 : vector<2x4x15xf32>
    %151 = arith.select %145, %143, %150 : vector<2x4x15xi1>, vector<2x4x15xf32>
    %152 = vector.extract_strided_slice %151 {offsets = [0, 0, 0], sizes = [2, 1, 13], strides = [1, 1, 1]} : vector<2x4x15xf32> to vector<2x1x13xf32>
    %c1_79 = arith.constant 1 : index
    %c0_80 = arith.constant 0 : index
    %c0_81 = arith.constant 0 : index
    %c0_82 = arith.constant 0 : index
    %c0_83 = arith.constant 0 : index
    %153 = vector.load %arg4[%c1_79, %c0_80, %c0_81, %c0_82, %c0_83] : memref<7x3x4x8x1xf32, #tpu.memory_space<vmem>>, vector<1x1x1x8x1xf32>
    %154 = vector.shape_cast %153 : vector<1x1x1x8x1xf32> to vector<8x1xf32>
    %155 = vector.shape_cast %154 : vector<8x1xf32> to vector<1x8x1xf32>
    %156 = vector.broadcast %152 : vector<2x1x13xf32> to vector<2x8x13xf32>
    %157 = vector.broadcast %155 : vector<1x8x1xf32> to vector<2x8x13xf32>
    %158 = arith.mulf %156, %157 : vector<2x8x13xf32>
    %159 = vector.extract_strided_slice %151 {offsets = [0, 1, 0], sizes = [2, 1, 13], strides = [1, 1, 1]} : vector<2x4x15xf32> to vector<2x1x13xf32>
    %c1_84 = arith.constant 1 : index
    %c0_85 = arith.constant 0 : index
    %c1_86 = arith.constant 1 : index
    %c0_87 = arith.constant 0 : index
    %c0_88 = arith.constant 0 : index
    %160 = vector.load %arg4[%c1_84, %c0_85, %c1_86, %c0_87, %c0_88] : memref<7x3x4x8x1xf32, #tpu.memory_space<vmem>>, vector<1x1x1x8x1xf32>
    %161 = vector.shape_cast %160 : vector<1x1x1x8x1xf32> to vector<8x1xf32>
    %162 = vector.shape_cast %161 : vector<8x1xf32> to vector<1x8x1xf32>
    %163 = vector.broadcast %159 : vector<2x1x13xf32> to vector<2x8x13xf32>
    %164 = vector.broadcast %162 : vector<1x8x1xf32> to vector<2x8x13xf32>
    %165 = arith.mulf %163, %164 : vector<2x8x13xf32>
    %166 = arith.addf %158, %165 : vector<2x8x13xf32>
    %167 = vector.extract_strided_slice %151 {offsets = [0, 2, 0], sizes = [2, 1, 13], strides = [1, 1, 1]} : vector<2x4x15xf32> to vector<2x1x13xf32>
    %c1_89 = arith.constant 1 : index
    %c0_90 = arith.constant 0 : index
    %c2_91 = arith.constant 2 : index
    %c0_92 = arith.constant 0 : index
    %c0_93 = arith.constant 0 : index
    %168 = vector.load %arg4[%c1_89, %c0_90, %c2_91, %c0_92, %c0_93] : memref<7x3x4x8x1xf32, #tpu.memory_space<vmem>>, vector<1x1x1x8x1xf32>
    %169 = vector.shape_cast %168 : vector<1x1x1x8x1xf32> to vector<8x1xf32>
    %170 = vector.shape_cast %169 : vector<8x1xf32> to vector<1x8x1xf32>
    %171 = vector.broadcast %167 : vector<2x1x13xf32> to vector<2x8x13xf32>
    %172 = vector.broadcast %170 : vector<1x8x1xf32> to vector<2x8x13xf32>
    %173 = arith.mulf %171, %172 : vector<2x8x13xf32>
    %174 = arith.addf %166, %173 : vector<2x8x13xf32>
    %175 = vector.extract_strided_slice %151 {offsets = [0, 3, 0], sizes = [2, 1, 13], strides = [1, 1, 1]} : vector<2x4x15xf32> to vector<2x1x13xf32>
    %c1_94 = arith.constant 1 : index
    %c0_95 = arith.constant 0 : index
    %c3_96 = arith.constant 3 : index
    %c0_97 = arith.constant 0 : index
    %c0_98 = arith.constant 0 : index
    %176 = vector.load %arg4[%c1_94, %c0_95, %c3_96, %c0_97, %c0_98] : memref<7x3x4x8x1xf32, #tpu.memory_space<vmem>>, vector<1x1x1x8x1xf32>
    %177 = vector.shape_cast %176 : vector<1x1x1x8x1xf32> to vector<8x1xf32>
    %178 = vector.shape_cast %177 : vector<8x1xf32> to vector<1x8x1xf32>
    %179 = vector.broadcast %175 : vector<2x1x13xf32> to vector<2x8x13xf32>
    %180 = vector.broadcast %178 : vector<1x8x1xf32> to vector<2x8x13xf32>
    %181 = arith.mulf %179, %180 : vector<2x8x13xf32>
    %182 = arith.addf %174, %181 : vector<2x8x13xf32>
    %183 = vector.extract_strided_slice %151 {offsets = [0, 0, 1], sizes = [2, 1, 13], strides = [1, 1, 1]} : vector<2x4x15xf32> to vector<2x1x13xf32>
    %c1_99 = arith.constant 1 : index
    %c1_100 = arith.constant 1 : index
    %c0_101 = arith.constant 0 : index
    %c0_102 = arith.constant 0 : index
    %c0_103 = arith.constant 0 : index
    %184 = vector.load %arg4[%c1_99, %c1_100, %c0_101, %c0_102, %c0_103] : memref<7x3x4x8x1xf32, #tpu.memory_space<vmem>>, vector<1x1x1x8x1xf32>
    %185 = vector.shape_cast %184 : vector<1x1x1x8x1xf32> to vector<8x1xf32>
    %186 = vector.shape_cast %185 : vector<8x1xf32> to vector<1x8x1xf32>
    %187 = vector.broadcast %183 : vector<2x1x13xf32> to vector<2x8x13xf32>
    %188 = vector.broadcast %186 : vector<1x8x1xf32> to vector<2x8x13xf32>
    %189 = arith.mulf %187, %188 : vector<2x8x13xf32>
    %190 = arith.addf %182, %189 : vector<2x8x13xf32>
    %191 = vector.extract_strided_slice %151 {offsets = [0, 1, 1], sizes = [2, 1, 13], strides = [1, 1, 1]} : vector<2x4x15xf32> to vector<2x1x13xf32>
    %c1_104 = arith.constant 1 : index
    %c1_105 = arith.constant 1 : index
    %c1_106 = arith.constant 1 : index
    %c0_107 = arith.constant 0 : index
    %c0_108 = arith.constant 0 : index
    %192 = vector.load %arg4[%c1_104, %c1_105, %c1_106, %c0_107, %c0_108] : memref<7x3x4x8x1xf32, #tpu.memory_space<vmem>>, vector<1x1x1x8x1xf32>
    %193 = vector.shape_cast %192 : vector<1x1x1x8x1xf32> to vector<8x1xf32>
    %194 = vector.shape_cast %193 : vector<8x1xf32> to vector<1x8x1xf32>
    %195 = vector.broadcast %191 : vector<2x1x13xf32> to vector<2x8x13xf32>
    %196 = vector.broadcast %194 : vector<1x8x1xf32> to vector<2x8x13xf32>
    %197 = arith.mulf %195, %196 : vector<2x8x13xf32>
    %198 = arith.addf %190, %197 : vector<2x8x13xf32>
    %199 = vector.extract_strided_slice %151 {offsets = [0, 2, 1], sizes = [2, 1, 13], strides = [1, 1, 1]} : vector<2x4x15xf32> to vector<2x1x13xf32>
    %c1_109 = arith.constant 1 : index
    %c1_110 = arith.constant 1 : index
    %c2_111 = arith.constant 2 : index
    %c0_112 = arith.constant 0 : index
    %c0_113 = arith.constant 0 : index
    %200 = vector.load %arg4[%c1_109, %c1_110, %c2_111, %c0_112, %c0_113] : memref<7x3x4x8x1xf32, #tpu.memory_space<vmem>>, vector<1x1x1x8x1xf32>
    %201 = vector.shape_cast %200 : vector<1x1x1x8x1xf32> to vector<8x1xf32>
    %202 = vector.shape_cast %201 : vector<8x1xf32> to vector<1x8x1xf32>
    %203 = vector.broadcast %199 : vector<2x1x13xf32> to vector<2x8x13xf32>
    %204 = vector.broadcast %202 : vector<1x8x1xf32> to vector<2x8x13xf32>
    %205 = arith.mulf %203, %204 : vector<2x8x13xf32>
    %206 = arith.addf %198, %205 : vector<2x8x13xf32>
    %207 = vector.extract_strided_slice %151 {offsets = [0, 3, 1], sizes = [2, 1, 13], strides = [1, 1, 1]} : vector<2x4x15xf32> to vector<2x1x13xf32>
    %c1_114 = arith.constant 1 : index
    %c1_115 = arith.constant 1 : index
    %c3_116 = arith.constant 3 : index
    %c0_117 = arith.constant 0 : index
    %c0_118 = arith.constant 0 : index
    %208 = vector.load %arg4[%c1_114, %c1_115, %c3_116, %c0_117, %c0_118] : memref<7x3x4x8x1xf32, #tpu.memory_space<vmem>>, vector<1x1x1x8x1xf32>
    %209 = vector.shape_cast %208 : vector<1x1x1x8x1xf32> to vector<8x1xf32>
    %210 = vector.shape_cast %209 : vector<8x1xf32> to vector<1x8x1xf32>
    %211 = vector.broadcast %207 : vector<2x1x13xf32> to vector<2x8x13xf32>
    %212 = vector.broadcast %210 : vector<1x8x1xf32> to vector<2x8x13xf32>
    %213 = arith.mulf %211, %212 : vector<2x8x13xf32>
    %214 = arith.addf %206, %213 : vector<2x8x13xf32>
    %215 = vector.extract_strided_slice %151 {offsets = [0, 0, 2], sizes = [2, 1, 13], strides = [1, 1, 1]} : vector<2x4x15xf32> to vector<2x1x13xf32>
    %c1_119 = arith.constant 1 : index
    %c2_120 = arith.constant 2 : index
    %c0_121 = arith.constant 0 : index
    %c0_122 = arith.constant 0 : index
    %c0_123 = arith.constant 0 : index
    %216 = vector.load %arg4[%c1_119, %c2_120, %c0_121, %c0_122, %c0_123] : memref<7x3x4x8x1xf32, #tpu.memory_space<vmem>>, vector<1x1x1x8x1xf32>
    %217 = vector.shape_cast %216 : vector<1x1x1x8x1xf32> to vector<8x1xf32>
    %218 = vector.shape_cast %217 : vector<8x1xf32> to vector<1x8x1xf32>
    %219 = vector.broadcast %215 : vector<2x1x13xf32> to vector<2x8x13xf32>
    %220 = vector.broadcast %218 : vector<1x8x1xf32> to vector<2x8x13xf32>
    %221 = arith.mulf %219, %220 : vector<2x8x13xf32>
    %222 = arith.addf %214, %221 : vector<2x8x13xf32>
    %223 = vector.extract_strided_slice %151 {offsets = [0, 1, 2], sizes = [2, 1, 13], strides = [1, 1, 1]} : vector<2x4x15xf32> to vector<2x1x13xf32>
    %c1_124 = arith.constant 1 : index
    %c2_125 = arith.constant 2 : index
    %c1_126 = arith.constant 1 : index
    %c0_127 = arith.constant 0 : index
    %c0_128 = arith.constant 0 : index
    %224 = vector.load %arg4[%c1_124, %c2_125, %c1_126, %c0_127, %c0_128] : memref<7x3x4x8x1xf32, #tpu.memory_space<vmem>>, vector<1x1x1x8x1xf32>
    %225 = vector.shape_cast %224 : vector<1x1x1x8x1xf32> to vector<8x1xf32>
    %226 = vector.shape_cast %225 : vector<8x1xf32> to vector<1x8x1xf32>
    %227 = vector.broadcast %223 : vector<2x1x13xf32> to vector<2x8x13xf32>
    %228 = vector.broadcast %226 : vector<1x8x1xf32> to vector<2x8x13xf32>
    %229 = arith.mulf %227, %228 : vector<2x8x13xf32>
    %230 = arith.addf %222, %229 : vector<2x8x13xf32>
    %231 = vector.extract_strided_slice %151 {offsets = [0, 2, 2], sizes = [2, 1, 13], strides = [1, 1, 1]} : vector<2x4x15xf32> to vector<2x1x13xf32>
    %c1_129 = arith.constant 1 : index
    %c2_130 = arith.constant 2 : index
    %c2_131 = arith.constant 2 : index
    %c0_132 = arith.constant 0 : index
    %c0_133 = arith.constant 0 : index
    %232 = vector.load %arg4[%c1_129, %c2_130, %c2_131, %c0_132, %c0_133] : memref<7x3x4x8x1xf32, #tpu.memory_space<vmem>>, vector<1x1x1x8x1xf32>
    %233 = vector.shape_cast %232 : vector<1x1x1x8x1xf32> to vector<8x1xf32>
    %234 = vector.shape_cast %233 : vector<8x1xf32> to vector<1x8x1xf32>
    %235 = vector.broadcast %231 : vector<2x1x13xf32> to vector<2x8x13xf32>
    %236 = vector.broadcast %234 : vector<1x8x1xf32> to vector<2x8x13xf32>
    %237 = arith.mulf %235, %236 : vector<2x8x13xf32>
    %238 = arith.addf %230, %237 : vector<2x8x13xf32>
    %239 = vector.extract_strided_slice %151 {offsets = [0, 3, 2], sizes = [2, 1, 13], strides = [1, 1, 1]} : vector<2x4x15xf32> to vector<2x1x13xf32>
    %c1_134 = arith.constant 1 : index
    %c2_135 = arith.constant 2 : index
    %c3_136 = arith.constant 3 : index
    %c0_137 = arith.constant 0 : index
    %c0_138 = arith.constant 0 : index
    %240 = vector.load %arg4[%c1_134, %c2_135, %c3_136, %c0_137, %c0_138] : memref<7x3x4x8x1xf32, #tpu.memory_space<vmem>>, vector<1x1x1x8x1xf32>
    %241 = vector.shape_cast %240 : vector<1x1x1x8x1xf32> to vector<8x1xf32>
    %242 = vector.shape_cast %241 : vector<8x1xf32> to vector<1x8x1xf32>
    %243 = vector.broadcast %239 : vector<2x1x13xf32> to vector<2x8x13xf32>
    %244 = vector.broadcast %242 : vector<1x8x1xf32> to vector<2x8x13xf32>
    %245 = arith.mulf %243, %244 : vector<2x8x13xf32>
    %246 = arith.addf %238, %245 : vector<2x8x13xf32>
    %c1_139 = arith.constant 1 : index
    %c0_140 = arith.constant 0 : index
    %c0_141 = arith.constant 0 : index
    %247 = vector.load %arg5[%c1_139, %c0_140, %c0_141] : memref<7x8x1xf32, #tpu.memory_space<vmem>>, vector<1x8x1xf32>
    %248 = vector.shape_cast %247 : vector<1x8x1xf32> to vector<8x1xf32>
    %249 = vector.shape_cast %248 : vector<8x1xf32> to vector<1x8x1xf32>
    %250 = vector.broadcast %249 : vector<1x8x1xf32> to vector<2x8x13xf32>
    %251 = arith.addf %246, %250 : vector<2x8x13xf32>
    %cst_142 = arith.constant 0.000000e+00 : f32
    %252 = vector.broadcast %cst_142 : f32 to vector<2x8x13xf32>
    %253 = arith.cmpf ogt, %251, %252 : vector<2x8x13xf32>
    %cst_143 = arith.constant 0.000000e+00 : f32
    %254 = vector.broadcast %cst_143 : f32 to vector<2x8x13xf32>
    %255 = arith.minimumf %251, %254 : vector<2x8x13xf32>
    %256 = math.exp %255 : vector<2x8x13xf32>
    %cst_144 = arith.constant 1.000000e+00 : f32
    %257 = vector.broadcast %cst_144 : f32 to vector<2x8x13xf32>
    %258 = arith.subf %256, %257 : vector<2x8x13xf32>
    %259 = arith.select %253, %251, %258 : vector<2x8x13xi1>, vector<2x8x13xf32>
    %260 = vector.extract_strided_slice %259 {offsets = [0, 0, 0], sizes = [2, 8, 12], strides = [1, 1, 1]} : vector<2x8x13xf32> to vector<2x8x12xf32>
    %261 = vector.extract_strided_slice %259 {offsets = [0, 0, 1], sizes = [2, 8, 12], strides = [1, 1, 1]} : vector<2x8x13xf32> to vector<2x8x12xf32>
    %262 = arith.maximumf %260, %261 : vector<2x8x12xf32>
    %c2_145 = arith.constant 2 : index
    %c0_146 = arith.constant 0 : index
    %c0_147 = arith.constant 0 : index
    %263 = vector.load %arg1[%c2_145, %c0_146, %c0_147] : memref<7x2x16xf32, #tpu.memory_space<vmem>>, vector<1x2x16xf32>
    %264 = vector.shape_cast %263 : vector<1x2x16xf32> to vector<2x16xf32>
    %265 = vector.extract_strided_slice %264 {offsets = [0, 0], sizes = [2, 14], strides = [1, 1]} : vector<2x16xf32> to vector<2x14xf32>
    %266 = vector.shape_cast %265 : vector<2x14xf32> to vector<2x1x14xf32>
    %c2_148 = arith.constant 2 : index
    %c0_149 = arith.constant 0 : index
    %c0_150 = arith.constant 0 : index
    %c0_151 = arith.constant 0 : index
    %267 = vector.load %arg2[%c2_148, %c0_149, %c0_150, %c0_151] : memref<7x3x4x1xf32, #tpu.memory_space<vmem>>, vector<1x1x4x1xf32>
    %268 = vector.shape_cast %267 : vector<1x1x4x1xf32> to vector<4x1xf32>
    %269 = vector.shape_cast %268 : vector<4x1xf32> to vector<1x4x1xf32>
    %270 = vector.broadcast %266 : vector<2x1x14xf32> to vector<2x4x14xf32>
    %271 = vector.broadcast %269 : vector<1x4x1xf32> to vector<2x4x14xf32>
    %272 = arith.mulf %270, %271 : vector<2x4x14xf32>
    %273 = vector.extract_strided_slice %264 {offsets = [0, 1], sizes = [2, 14], strides = [1, 1]} : vector<2x16xf32> to vector<2x14xf32>
    %274 = vector.shape_cast %273 : vector<2x14xf32> to vector<2x1x14xf32>
    %c2_152 = arith.constant 2 : index
    %c1_153 = arith.constant 1 : index
    %c0_154 = arith.constant 0 : index
    %c0_155 = arith.constant 0 : index
    %275 = vector.load %arg2[%c2_152, %c1_153, %c0_154, %c0_155] : memref<7x3x4x1xf32, #tpu.memory_space<vmem>>, vector<1x1x4x1xf32>
    %276 = vector.shape_cast %275 : vector<1x1x4x1xf32> to vector<4x1xf32>
    %277 = vector.shape_cast %276 : vector<4x1xf32> to vector<1x4x1xf32>
    %278 = vector.broadcast %274 : vector<2x1x14xf32> to vector<2x4x14xf32>
    %279 = vector.broadcast %277 : vector<1x4x1xf32> to vector<2x4x14xf32>
    %280 = arith.mulf %278, %279 : vector<2x4x14xf32>
    %281 = arith.addf %272, %280 : vector<2x4x14xf32>
    %282 = vector.extract_strided_slice %264 {offsets = [0, 2], sizes = [2, 14], strides = [1, 1]} : vector<2x16xf32> to vector<2x14xf32>
    %283 = vector.shape_cast %282 : vector<2x14xf32> to vector<2x1x14xf32>
    %c2_156 = arith.constant 2 : index
    %c2_157 = arith.constant 2 : index
    %c0_158 = arith.constant 0 : index
    %c0_159 = arith.constant 0 : index
    %284 = vector.load %arg2[%c2_156, %c2_157, %c0_158, %c0_159] : memref<7x3x4x1xf32, #tpu.memory_space<vmem>>, vector<1x1x4x1xf32>
    %285 = vector.shape_cast %284 : vector<1x1x4x1xf32> to vector<4x1xf32>
    %286 = vector.shape_cast %285 : vector<4x1xf32> to vector<1x4x1xf32>
    %287 = vector.broadcast %283 : vector<2x1x14xf32> to vector<2x4x14xf32>
    %288 = vector.broadcast %286 : vector<1x4x1xf32> to vector<2x4x14xf32>
    %289 = arith.mulf %287, %288 : vector<2x4x14xf32>
    %290 = arith.addf %281, %289 : vector<2x4x14xf32>
    %c2_160 = arith.constant 2 : index
    %c0_161 = arith.constant 0 : index
    %c0_162 = arith.constant 0 : index
    %291 = vector.load %arg3[%c2_160, %c0_161, %c0_162] : memref<7x4x1xf32, #tpu.memory_space<vmem>>, vector<1x4x1xf32>
    %292 = vector.shape_cast %291 : vector<1x4x1xf32> to vector<4x1xf32>
    %293 = vector.shape_cast %292 : vector<4x1xf32> to vector<1x4x1xf32>
    %294 = vector.broadcast %293 : vector<1x4x1xf32> to vector<2x4x14xf32>
    %295 = arith.addf %290, %294 : vector<2x4x14xf32>
    %cst_163 = arith.constant 0.000000e+00 : f32
    %296 = vector.broadcast %cst_163 : f32 to vector<2x4x14xf32>
    %297 = arith.cmpf ogt, %295, %296 : vector<2x4x14xf32>
    %cst_164 = arith.constant 0.000000e+00 : f32
    %298 = vector.broadcast %cst_164 : f32 to vector<2x4x14xf32>
    %299 = arith.minimumf %295, %298 : vector<2x4x14xf32>
    %300 = math.exp %299 : vector<2x4x14xf32>
    %cst_165 = arith.constant 1.000000e+00 : f32
    %301 = vector.broadcast %cst_165 : f32 to vector<2x4x14xf32>
    %302 = arith.subf %300, %301 : vector<2x4x14xf32>
    %303 = arith.select %297, %295, %302 : vector<2x4x14xi1>, vector<2x4x14xf32>
    %304 = vector.extract_strided_slice %303 {offsets = [0, 0, 0], sizes = [2, 1, 13], strides = [1, 1, 1]} : vector<2x4x14xf32> to vector<2x1x13xf32>
    %c2_166 = arith.constant 2 : index
    %c0_167 = arith.constant 0 : index
    %c0_168 = arith.constant 0 : index
    %c0_169 = arith.constant 0 : index
    %c0_170 = arith.constant 0 : index
    %305 = vector.load %arg4[%c2_166, %c0_167, %c0_168, %c0_169, %c0_170] : memref<7x3x4x8x1xf32, #tpu.memory_space<vmem>>, vector<1x1x1x8x1xf32>
    %306 = vector.shape_cast %305 : vector<1x1x1x8x1xf32> to vector<8x1xf32>
    %307 = vector.shape_cast %306 : vector<8x1xf32> to vector<1x8x1xf32>
    %308 = vector.broadcast %304 : vector<2x1x13xf32> to vector<2x8x13xf32>
    %309 = vector.broadcast %307 : vector<1x8x1xf32> to vector<2x8x13xf32>
    %310 = arith.mulf %308, %309 : vector<2x8x13xf32>
    %311 = vector.extract_strided_slice %303 {offsets = [0, 1, 0], sizes = [2, 1, 13], strides = [1, 1, 1]} : vector<2x4x14xf32> to vector<2x1x13xf32>
    %c2_171 = arith.constant 2 : index
    %c0_172 = arith.constant 0 : index
    %c1_173 = arith.constant 1 : index
    %c0_174 = arith.constant 0 : index
    %c0_175 = arith.constant 0 : index
    %312 = vector.load %arg4[%c2_171, %c0_172, %c1_173, %c0_174, %c0_175] : memref<7x3x4x8x1xf32, #tpu.memory_space<vmem>>, vector<1x1x1x8x1xf32>
    %313 = vector.shape_cast %312 : vector<1x1x1x8x1xf32> to vector<8x1xf32>
    %314 = vector.shape_cast %313 : vector<8x1xf32> to vector<1x8x1xf32>
    %315 = vector.broadcast %311 : vector<2x1x13xf32> to vector<2x8x13xf32>
    %316 = vector.broadcast %314 : vector<1x8x1xf32> to vector<2x8x13xf32>
    %317 = arith.mulf %315, %316 : vector<2x8x13xf32>
    %318 = arith.addf %310, %317 : vector<2x8x13xf32>
    %319 = vector.extract_strided_slice %303 {offsets = [0, 2, 0], sizes = [2, 1, 13], strides = [1, 1, 1]} : vector<2x4x14xf32> to vector<2x1x13xf32>
    %c2_176 = arith.constant 2 : index
    %c0_177 = arith.constant 0 : index
    %c2_178 = arith.constant 2 : index
    %c0_179 = arith.constant 0 : index
    %c0_180 = arith.constant 0 : index
    %320 = vector.load %arg4[%c2_176, %c0_177, %c2_178, %c0_179, %c0_180] : memref<7x3x4x8x1xf32, #tpu.memory_space<vmem>>, vector<1x1x1x8x1xf32>
    %321 = vector.shape_cast %320 : vector<1x1x1x8x1xf32> to vector<8x1xf32>
    %322 = vector.shape_cast %321 : vector<8x1xf32> to vector<1x8x1xf32>
    %323 = vector.broadcast %319 : vector<2x1x13xf32> to vector<2x8x13xf32>
    %324 = vector.broadcast %322 : vector<1x8x1xf32> to vector<2x8x13xf32>
    %325 = arith.mulf %323, %324 : vector<2x8x13xf32>
    %326 = arith.addf %318, %325 : vector<2x8x13xf32>
    %327 = vector.extract_strided_slice %303 {offsets = [0, 3, 0], sizes = [2, 1, 13], strides = [1, 1, 1]} : vector<2x4x14xf32> to vector<2x1x13xf32>
    %c2_181 = arith.constant 2 : index
    %c0_182 = arith.constant 0 : index
    %c3_183 = arith.constant 3 : index
    %c0_184 = arith.constant 0 : index
    %c0_185 = arith.constant 0 : index
    %328 = vector.load %arg4[%c2_181, %c0_182, %c3_183, %c0_184, %c0_185] : memref<7x3x4x8x1xf32, #tpu.memory_space<vmem>>, vector<1x1x1x8x1xf32>
    %329 = vector.shape_cast %328 : vector<1x1x1x8x1xf32> to vector<8x1xf32>
    %330 = vector.shape_cast %329 : vector<8x1xf32> to vector<1x8x1xf32>
    %331 = vector.broadcast %327 : vector<2x1x13xf32> to vector<2x8x13xf32>
    %332 = vector.broadcast %330 : vector<1x8x1xf32> to vector<2x8x13xf32>
    %333 = arith.mulf %331, %332 : vector<2x8x13xf32>
    %334 = arith.addf %326, %333 : vector<2x8x13xf32>
    %335 = vector.extract_strided_slice %303 {offsets = [0, 0, 1], sizes = [2, 1, 13], strides = [1, 1, 1]} : vector<2x4x14xf32> to vector<2x1x13xf32>
    %c2_186 = arith.constant 2 : index
    %c1_187 = arith.constant 1 : index
    %c0_188 = arith.constant 0 : index
    %c0_189 = arith.constant 0 : index
    %c0_190 = arith.constant 0 : index
    %336 = vector.load %arg4[%c2_186, %c1_187, %c0_188, %c0_189, %c0_190] : memref<7x3x4x8x1xf32, #tpu.memory_space<vmem>>, vector<1x1x1x8x1xf32>
    %337 = vector.shape_cast %336 : vector<1x1x1x8x1xf32> to vector<8x1xf32>
    %338 = vector.shape_cast %337 : vector<8x1xf32> to vector<1x8x1xf32>
    %339 = vector.broadcast %335 : vector<2x1x13xf32> to vector<2x8x13xf32>
    %340 = vector.broadcast %338 : vector<1x8x1xf32> to vector<2x8x13xf32>
    %341 = arith.mulf %339, %340 : vector<2x8x13xf32>
    %342 = arith.addf %334, %341 : vector<2x8x13xf32>
    %343 = vector.extract_strided_slice %303 {offsets = [0, 1, 1], sizes = [2, 1, 13], strides = [1, 1, 1]} : vector<2x4x14xf32> to vector<2x1x13xf32>
    %c2_191 = arith.constant 2 : index
    %c1_192 = arith.constant 1 : index
    %c1_193 = arith.constant 1 : index
    %c0_194 = arith.constant 0 : index
    %c0_195 = arith.constant 0 : index
    %344 = vector.load %arg4[%c2_191, %c1_192, %c1_193, %c0_194, %c0_195] : memref<7x3x4x8x1xf32, #tpu.memory_space<vmem>>, vector<1x1x1x8x1xf32>
    %345 = vector.shape_cast %344 : vector<1x1x1x8x1xf32> to vector<8x1xf32>
    %346 = vector.shape_cast %345 : vector<8x1xf32> to vector<1x8x1xf32>
    %347 = vector.broadcast %343 : vector<2x1x13xf32> to vector<2x8x13xf32>
    %348 = vector.broadcast %346 : vector<1x8x1xf32> to vector<2x8x13xf32>
    %349 = arith.mulf %347, %348 : vector<2x8x13xf32>
    %350 = arith.addf %342, %349 : vector<2x8x13xf32>
    %351 = vector.extract_strided_slice %303 {offsets = [0, 2, 1], sizes = [2, 1, 13], strides = [1, 1, 1]} : vector<2x4x14xf32> to vector<2x1x13xf32>
    %c2_196 = arith.constant 2 : index
    %c1_197 = arith.constant 1 : index
    %c2_198 = arith.constant 2 : index
    %c0_199 = arith.constant 0 : index
    %c0_200 = arith.constant 0 : index
    %352 = vector.load %arg4[%c2_196, %c1_197, %c2_198, %c0_199, %c0_200] : memref<7x3x4x8x1xf32, #tpu.memory_space<vmem>>, vector<1x1x1x8x1xf32>
    %353 = vector.shape_cast %352 : vector<1x1x1x8x1xf32> to vector<8x1xf32>
    %354 = vector.shape_cast %353 : vector<8x1xf32> to vector<1x8x1xf32>
    %355 = vector.broadcast %351 : vector<2x1x13xf32> to vector<2x8x13xf32>
    %356 = vector.broadcast %354 : vector<1x8x1xf32> to vector<2x8x13xf32>
    %357 = arith.mulf %355, %356 : vector<2x8x13xf32>
    %358 = arith.addf %350, %357 : vector<2x8x13xf32>
    %359 = vector.extract_strided_slice %303 {offsets = [0, 3, 1], sizes = [2, 1, 13], strides = [1, 1, 1]} : vector<2x4x14xf32> to vector<2x1x13xf32>
    %c2_201 = arith.constant 2 : index
    %c1_202 = arith.constant 1 : index
    %c3_203 = arith.constant 3 : index
    %c0_204 = arith.constant 0 : index
    %c0_205 = arith.constant 0 : index
    %360 = vector.load %arg4[%c2_201, %c1_202, %c3_203, %c0_204, %c0_205] : memref<7x3x4x8x1xf32, #tpu.memory_space<vmem>>, vector<1x1x1x8x1xf32>
    %361 = vector.shape_cast %360 : vector<1x1x1x8x1xf32> to vector<8x1xf32>
    %362 = vector.shape_cast %361 : vector<8x1xf32> to vector<1x8x1xf32>
    %363 = vector.broadcast %359 : vector<2x1x13xf32> to vector<2x8x13xf32>
    %364 = vector.broadcast %362 : vector<1x8x1xf32> to vector<2x8x13xf32>
    %365 = arith.mulf %363, %364 : vector<2x8x13xf32>
    %366 = arith.addf %358, %365 : vector<2x8x13xf32>
    %c2_206 = arith.constant 2 : index
    %c0_207 = arith.constant 0 : index
    %c0_208 = arith.constant 0 : index
    %367 = vector.load %arg5[%c2_206, %c0_207, %c0_208] : memref<7x8x1xf32, #tpu.memory_space<vmem>>, vector<1x8x1xf32>
    %368 = vector.shape_cast %367 : vector<1x8x1xf32> to vector<8x1xf32>
    %369 = vector.shape_cast %368 : vector<8x1xf32> to vector<1x8x1xf32>
    %370 = vector.broadcast %369 : vector<1x8x1xf32> to vector<2x8x13xf32>
    %371 = arith.addf %366, %370 : vector<2x8x13xf32>
    %cst_209 = arith.constant 0.000000e+00 : f32
    %372 = vector.broadcast %cst_209 : f32 to vector<2x8x13xf32>
    %373 = arith.cmpf ogt, %371, %372 : vector<2x8x13xf32>
    %cst_210 = arith.constant 0.000000e+00 : f32
    %374 = vector.broadcast %cst_210 : f32 to vector<2x8x13xf32>
    %375 = arith.minimumf %371, %374 : vector<2x8x13xf32>
    %376 = math.exp %375 : vector<2x8x13xf32>
    %cst_211 = arith.constant 1.000000e+00 : f32
    %377 = vector.broadcast %cst_211 : f32 to vector<2x8x13xf32>
    %378 = arith.subf %376, %377 : vector<2x8x13xf32>
    %379 = arith.select %373, %371, %378 : vector<2x8x13xi1>, vector<2x8x13xf32>
    %380 = vector.extract_strided_slice %379 {offsets = [0, 0, 0], sizes = [2, 8, 12], strides = [1, 1, 1]} : vector<2x8x13xf32> to vector<2x8x12xf32>
    %381 = vector.extract_strided_slice %379 {offsets = [0, 0, 1], sizes = [2, 8, 12], strides = [1, 1, 1]} : vector<2x8x13xf32> to vector<2x8x12xf32>
    %382 = arith.maximumf %380, %381 : vector<2x8x12xf32>
    %c3_212 = arith.constant 3 : index
    %c0_213 = arith.constant 0 : index
    %c0_214 = arith.constant 0 : index
    %383 = vector.load %arg1[%c3_212, %c0_213, %c0_214] : memref<7x2x16xf32, #tpu.memory_space<vmem>>, vector<1x2x16xf32>
    %384 = vector.shape_cast %383 : vector<1x2x16xf32> to vector<2x16xf32>
    %385 = vector.extract_strided_slice %384 {offsets = [0, 0], sizes = [2, 15], strides = [1, 1]} : vector<2x16xf32> to vector<2x15xf32>
    %386 = vector.shape_cast %385 : vector<2x15xf32> to vector<2x1x15xf32>
    %c3_215 = arith.constant 3 : index
    %c0_216 = arith.constant 0 : index
    %c0_217 = arith.constant 0 : index
    %c0_218 = arith.constant 0 : index
    %387 = vector.load %arg2[%c3_215, %c0_216, %c0_217, %c0_218] : memref<7x3x4x1xf32, #tpu.memory_space<vmem>>, vector<1x1x4x1xf32>
    %388 = vector.shape_cast %387 : vector<1x1x4x1xf32> to vector<4x1xf32>
    %389 = vector.shape_cast %388 : vector<4x1xf32> to vector<1x4x1xf32>
    %390 = vector.broadcast %386 : vector<2x1x15xf32> to vector<2x4x15xf32>
    %391 = vector.broadcast %389 : vector<1x4x1xf32> to vector<2x4x15xf32>
    %392 = arith.mulf %390, %391 : vector<2x4x15xf32>
    %393 = vector.extract_strided_slice %384 {offsets = [0, 1], sizes = [2, 15], strides = [1, 1]} : vector<2x16xf32> to vector<2x15xf32>
    %394 = vector.shape_cast %393 : vector<2x15xf32> to vector<2x1x15xf32>
    %c3_219 = arith.constant 3 : index
    %c1_220 = arith.constant 1 : index
    %c0_221 = arith.constant 0 : index
    %c0_222 = arith.constant 0 : index
    %395 = vector.load %arg2[%c3_219, %c1_220, %c0_221, %c0_222] : memref<7x3x4x1xf32, #tpu.memory_space<vmem>>, vector<1x1x4x1xf32>
    %396 = vector.shape_cast %395 : vector<1x1x4x1xf32> to vector<4x1xf32>
    %397 = vector.shape_cast %396 : vector<4x1xf32> to vector<1x4x1xf32>
    %398 = vector.broadcast %394 : vector<2x1x15xf32> to vector<2x4x15xf32>
    %399 = vector.broadcast %397 : vector<1x4x1xf32> to vector<2x4x15xf32>
    %400 = arith.mulf %398, %399 : vector<2x4x15xf32>
    %401 = arith.addf %392, %400 : vector<2x4x15xf32>
    %c3_223 = arith.constant 3 : index
    %c0_224 = arith.constant 0 : index
    %c0_225 = arith.constant 0 : index
    %402 = vector.load %arg3[%c3_223, %c0_224, %c0_225] : memref<7x4x1xf32, #tpu.memory_space<vmem>>, vector<1x4x1xf32>
    %403 = vector.shape_cast %402 : vector<1x4x1xf32> to vector<4x1xf32>
    %404 = vector.shape_cast %403 : vector<4x1xf32> to vector<1x4x1xf32>
    %405 = vector.broadcast %404 : vector<1x4x1xf32> to vector<2x4x15xf32>
    %406 = arith.addf %401, %405 : vector<2x4x15xf32>
    %cst_226 = arith.constant 0.000000e+00 : f32
    %407 = vector.broadcast %cst_226 : f32 to vector<2x4x15xf32>
    %408 = arith.cmpf ogt, %406, %407 : vector<2x4x15xf32>
    %cst_227 = arith.constant 0.000000e+00 : f32
    %409 = vector.broadcast %cst_227 : f32 to vector<2x4x15xf32>
    %410 = arith.minimumf %406, %409 : vector<2x4x15xf32>
    %411 = math.exp %410 : vector<2x4x15xf32>
    %cst_228 = arith.constant 1.000000e+00 : f32
    %412 = vector.broadcast %cst_228 : f32 to vector<2x4x15xf32>
    %413 = arith.subf %411, %412 : vector<2x4x15xf32>
    %414 = arith.select %408, %406, %413 : vector<2x4x15xi1>, vector<2x4x15xf32>
    %415 = vector.extract_strided_slice %414 {offsets = [0, 0, 0], sizes = [2, 1, 13], strides = [1, 1, 1]} : vector<2x4x15xf32> to vector<2x1x13xf32>
    %c3_229 = arith.constant 3 : index
    %c0_230 = arith.constant 0 : index
    %c0_231 = arith.constant 0 : index
    %c0_232 = arith.constant 0 : index
    %c0_233 = arith.constant 0 : index
    %416 = vector.load %arg4[%c3_229, %c0_230, %c0_231, %c0_232, %c0_233] : memref<7x3x4x8x1xf32, #tpu.memory_space<vmem>>, vector<1x1x1x8x1xf32>
    %417 = vector.shape_cast %416 : vector<1x1x1x8x1xf32> to vector<8x1xf32>
    %418 = vector.shape_cast %417 : vector<8x1xf32> to vector<1x8x1xf32>
    %419 = vector.broadcast %415 : vector<2x1x13xf32> to vector<2x8x13xf32>
    %420 = vector.broadcast %418 : vector<1x8x1xf32> to vector<2x8x13xf32>
    %421 = arith.mulf %419, %420 : vector<2x8x13xf32>
    %422 = vector.extract_strided_slice %414 {offsets = [0, 1, 0], sizes = [2, 1, 13], strides = [1, 1, 1]} : vector<2x4x15xf32> to vector<2x1x13xf32>
    %c3_234 = arith.constant 3 : index
    %c0_235 = arith.constant 0 : index
    %c1_236 = arith.constant 1 : index
    %c0_237 = arith.constant 0 : index
    %c0_238 = arith.constant 0 : index
    %423 = vector.load %arg4[%c3_234, %c0_235, %c1_236, %c0_237, %c0_238] : memref<7x3x4x8x1xf32, #tpu.memory_space<vmem>>, vector<1x1x1x8x1xf32>
    %424 = vector.shape_cast %423 : vector<1x1x1x8x1xf32> to vector<8x1xf32>
    %425 = vector.shape_cast %424 : vector<8x1xf32> to vector<1x8x1xf32>
    %426 = vector.broadcast %422 : vector<2x1x13xf32> to vector<2x8x13xf32>
    %427 = vector.broadcast %425 : vector<1x8x1xf32> to vector<2x8x13xf32>
    %428 = arith.mulf %426, %427 : vector<2x8x13xf32>
    %429 = arith.addf %421, %428 : vector<2x8x13xf32>
    %430 = vector.extract_strided_slice %414 {offsets = [0, 2, 0], sizes = [2, 1, 13], strides = [1, 1, 1]} : vector<2x4x15xf32> to vector<2x1x13xf32>
    %c3_239 = arith.constant 3 : index
    %c0_240 = arith.constant 0 : index
    %c2_241 = arith.constant 2 : index
    %c0_242 = arith.constant 0 : index
    %c0_243 = arith.constant 0 : index
    %431 = vector.load %arg4[%c3_239, %c0_240, %c2_241, %c0_242, %c0_243] : memref<7x3x4x8x1xf32, #tpu.memory_space<vmem>>, vector<1x1x1x8x1xf32>
    %432 = vector.shape_cast %431 : vector<1x1x1x8x1xf32> to vector<8x1xf32>
    %433 = vector.shape_cast %432 : vector<8x1xf32> to vector<1x8x1xf32>
    %434 = vector.broadcast %430 : vector<2x1x13xf32> to vector<2x8x13xf32>
    %435 = vector.broadcast %433 : vector<1x8x1xf32> to vector<2x8x13xf32>
    %436 = arith.mulf %434, %435 : vector<2x8x13xf32>
    %437 = arith.addf %429, %436 : vector<2x8x13xf32>
    %438 = vector.extract_strided_slice %414 {offsets = [0, 3, 0], sizes = [2, 1, 13], strides = [1, 1, 1]} : vector<2x4x15xf32> to vector<2x1x13xf32>
    %c3_244 = arith.constant 3 : index
    %c0_245 = arith.constant 0 : index
    %c3_246 = arith.constant 3 : index
    %c0_247 = arith.constant 0 : index
    %c0_248 = arith.constant 0 : index
    %439 = vector.load %arg4[%c3_244, %c0_245, %c3_246, %c0_247, %c0_248] : memref<7x3x4x8x1xf32, #tpu.memory_space<vmem>>, vector<1x1x1x8x1xf32>
    %440 = vector.shape_cast %439 : vector<1x1x1x8x1xf32> to vector<8x1xf32>
    %441 = vector.shape_cast %440 : vector<8x1xf32> to vector<1x8x1xf32>
    %442 = vector.broadcast %438 : vector<2x1x13xf32> to vector<2x8x13xf32>
    %443 = vector.broadcast %441 : vector<1x8x1xf32> to vector<2x8x13xf32>
    %444 = arith.mulf %442, %443 : vector<2x8x13xf32>
    %445 = arith.addf %437, %444 : vector<2x8x13xf32>
    %446 = vector.extract_strided_slice %414 {offsets = [0, 0, 1], sizes = [2, 1, 13], strides = [1, 1, 1]} : vector<2x4x15xf32> to vector<2x1x13xf32>
    %c3_249 = arith.constant 3 : index
    %c1_250 = arith.constant 1 : index
    %c0_251 = arith.constant 0 : index
    %c0_252 = arith.constant 0 : index
    %c0_253 = arith.constant 0 : index
    %447 = vector.load %arg4[%c3_249, %c1_250, %c0_251, %c0_252, %c0_253] : memref<7x3x4x8x1xf32, #tpu.memory_space<vmem>>, vector<1x1x1x8x1xf32>
    %448 = vector.shape_cast %447 : vector<1x1x1x8x1xf32> to vector<8x1xf32>
    %449 = vector.shape_cast %448 : vector<8x1xf32> to vector<1x8x1xf32>
    %450 = vector.broadcast %446 : vector<2x1x13xf32> to vector<2x8x13xf32>
    %451 = vector.broadcast %449 : vector<1x8x1xf32> to vector<2x8x13xf32>
    %452 = arith.mulf %450, %451 : vector<2x8x13xf32>
    %453 = arith.addf %445, %452 : vector<2x8x13xf32>
    %454 = vector.extract_strided_slice %414 {offsets = [0, 1, 1], sizes = [2, 1, 13], strides = [1, 1, 1]} : vector<2x4x15xf32> to vector<2x1x13xf32>
    %c3_254 = arith.constant 3 : index
    %c1_255 = arith.constant 1 : index
    %c1_256 = arith.constant 1 : index
    %c0_257 = arith.constant 0 : index
    %c0_258 = arith.constant 0 : index
    %455 = vector.load %arg4[%c3_254, %c1_255, %c1_256, %c0_257, %c0_258] : memref<7x3x4x8x1xf32, #tpu.memory_space<vmem>>, vector<1x1x1x8x1xf32>
    %456 = vector.shape_cast %455 : vector<1x1x1x8x1xf32> to vector<8x1xf32>
    %457 = vector.shape_cast %456 : vector<8x1xf32> to vector<1x8x1xf32>
    %458 = vector.broadcast %454 : vector<2x1x13xf32> to vector<2x8x13xf32>
    %459 = vector.broadcast %457 : vector<1x8x1xf32> to vector<2x8x13xf32>
    %460 = arith.mulf %458, %459 : vector<2x8x13xf32>
    %461 = arith.addf %453, %460 : vector<2x8x13xf32>
    %462 = vector.extract_strided_slice %414 {offsets = [0, 2, 1], sizes = [2, 1, 13], strides = [1, 1, 1]} : vector<2x4x15xf32> to vector<2x1x13xf32>
    %c3_259 = arith.constant 3 : index
    %c1_260 = arith.constant 1 : index
    %c2_261 = arith.constant 2 : index
    %c0_262 = arith.constant 0 : index
    %c0_263 = arith.constant 0 : index
    %463 = vector.load %arg4[%c3_259, %c1_260, %c2_261, %c0_262, %c0_263] : memref<7x3x4x8x1xf32, #tpu.memory_space<vmem>>, vector<1x1x1x8x1xf32>
    %464 = vector.shape_cast %463 : vector<1x1x1x8x1xf32> to vector<8x1xf32>
    %465 = vector.shape_cast %464 : vector<8x1xf32> to vector<1x8x1xf32>
    %466 = vector.broadcast %462 : vector<2x1x13xf32> to vector<2x8x13xf32>
    %467 = vector.broadcast %465 : vector<1x8x1xf32> to vector<2x8x13xf32>
    %468 = arith.mulf %466, %467 : vector<2x8x13xf32>
    %469 = arith.addf %461, %468 : vector<2x8x13xf32>
    %470 = vector.extract_strided_slice %414 {offsets = [0, 3, 1], sizes = [2, 1, 13], strides = [1, 1, 1]} : vector<2x4x15xf32> to vector<2x1x13xf32>
    %c3_264 = arith.constant 3 : index
    %c1_265 = arith.constant 1 : index
    %c3_266 = arith.constant 3 : index
    %c0_267 = arith.constant 0 : index
    %c0_268 = arith.constant 0 : index
    %471 = vector.load %arg4[%c3_264, %c1_265, %c3_266, %c0_267, %c0_268] : memref<7x3x4x8x1xf32, #tpu.memory_space<vmem>>, vector<1x1x1x8x1xf32>
    %472 = vector.shape_cast %471 : vector<1x1x1x8x1xf32> to vector<8x1xf32>
    %473 = vector.shape_cast %472 : vector<8x1xf32> to vector<1x8x1xf32>
    %474 = vector.broadcast %470 : vector<2x1x13xf32> to vector<2x8x13xf32>
    %475 = vector.broadcast %473 : vector<1x8x1xf32> to vector<2x8x13xf32>
    %476 = arith.mulf %474, %475 : vector<2x8x13xf32>
    %477 = arith.addf %469, %476 : vector<2x8x13xf32>
    %478 = vector.extract_strided_slice %414 {offsets = [0, 0, 2], sizes = [2, 1, 13], strides = [1, 1, 1]} : vector<2x4x15xf32> to vector<2x1x13xf32>
    %c3_269 = arith.constant 3 : index
    %c2_270 = arith.constant 2 : index
    %c0_271 = arith.constant 0 : index
    %c0_272 = arith.constant 0 : index
    %c0_273 = arith.constant 0 : index
    %479 = vector.load %arg4[%c3_269, %c2_270, %c0_271, %c0_272, %c0_273] : memref<7x3x4x8x1xf32, #tpu.memory_space<vmem>>, vector<1x1x1x8x1xf32>
    %480 = vector.shape_cast %479 : vector<1x1x1x8x1xf32> to vector<8x1xf32>
    %481 = vector.shape_cast %480 : vector<8x1xf32> to vector<1x8x1xf32>
    %482 = vector.broadcast %478 : vector<2x1x13xf32> to vector<2x8x13xf32>
    %483 = vector.broadcast %481 : vector<1x8x1xf32> to vector<2x8x13xf32>
    %484 = arith.mulf %482, %483 : vector<2x8x13xf32>
    %485 = arith.addf %477, %484 : vector<2x8x13xf32>
    %486 = vector.extract_strided_slice %414 {offsets = [0, 1, 2], sizes = [2, 1, 13], strides = [1, 1, 1]} : vector<2x4x15xf32> to vector<2x1x13xf32>
    %c3_274 = arith.constant 3 : index
    %c2_275 = arith.constant 2 : index
    %c1_276 = arith.constant 1 : index
    %c0_277 = arith.constant 0 : index
    %c0_278 = arith.constant 0 : index
    %487 = vector.load %arg4[%c3_274, %c2_275, %c1_276, %c0_277, %c0_278] : memref<7x3x4x8x1xf32, #tpu.memory_space<vmem>>, vector<1x1x1x8x1xf32>
    %488 = vector.shape_cast %487 : vector<1x1x1x8x1xf32> to vector<8x1xf32>
    %489 = vector.shape_cast %488 : vector<8x1xf32> to vector<1x8x1xf32>
    %490 = vector.broadcast %486 : vector<2x1x13xf32> to vector<2x8x13xf32>
    %491 = vector.broadcast %489 : vector<1x8x1xf32> to vector<2x8x13xf32>
    %492 = arith.mulf %490, %491 : vector<2x8x13xf32>
    %493 = arith.addf %485, %492 : vector<2x8x13xf32>
    %494 = vector.extract_strided_slice %414 {offsets = [0, 2, 2], sizes = [2, 1, 13], strides = [1, 1, 1]} : vector<2x4x15xf32> to vector<2x1x13xf32>
    %c3_279 = arith.constant 3 : index
    %c2_280 = arith.constant 2 : index
    %c2_281 = arith.constant 2 : index
    %c0_282 = arith.constant 0 : index
    %c0_283 = arith.constant 0 : index
    %495 = vector.load %arg4[%c3_279, %c2_280, %c2_281, %c0_282, %c0_283] : memref<7x3x4x8x1xf32, #tpu.memory_space<vmem>>, vector<1x1x1x8x1xf32>
    %496 = vector.shape_cast %495 : vector<1x1x1x8x1xf32> to vector<8x1xf32>
    %497 = vector.shape_cast %496 : vector<8x1xf32> to vector<1x8x1xf32>
    %498 = vector.broadcast %494 : vector<2x1x13xf32> to vector<2x8x13xf32>
    %499 = vector.broadcast %497 : vector<1x8x1xf32> to vector<2x8x13xf32>
    %500 = arith.mulf %498, %499 : vector<2x8x13xf32>
    %501 = arith.addf %493, %500 : vector<2x8x13xf32>
    %502 = vector.extract_strided_slice %414 {offsets = [0, 3, 2], sizes = [2, 1, 13], strides = [1, 1, 1]} : vector<2x4x15xf32> to vector<2x1x13xf32>
    %c3_284 = arith.constant 3 : index
    %c2_285 = arith.constant 2 : index
    %c3_286 = arith.constant 3 : index
    %c0_287 = arith.constant 0 : index
    %c0_288 = arith.constant 0 : index
    %503 = vector.load %arg4[%c3_284, %c2_285, %c3_286, %c0_287, %c0_288] : memref<7x3x4x8x1xf32, #tpu.memory_space<vmem>>, vector<1x1x1x8x1xf32>
    %504 = vector.shape_cast %503 : vector<1x1x1x8x1xf32> to vector<8x1xf32>
    %505 = vector.shape_cast %504 : vector<8x1xf32> to vector<1x8x1xf32>
    %506 = vector.broadcast %502 : vector<2x1x13xf32> to vector<2x8x13xf32>
    %507 = vector.broadcast %505 : vector<1x8x1xf32> to vector<2x8x13xf32>
    %508 = arith.mulf %506, %507 : vector<2x8x13xf32>
    %509 = arith.addf %501, %508 : vector<2x8x13xf32>
    %c3_289 = arith.constant 3 : index
    %c0_290 = arith.constant 0 : index
    %c0_291 = arith.constant 0 : index
    %510 = vector.load %arg5[%c3_289, %c0_290, %c0_291] : memref<7x8x1xf32, #tpu.memory_space<vmem>>, vector<1x8x1xf32>
    %511 = vector.shape_cast %510 : vector<1x8x1xf32> to vector<8x1xf32>
    %512 = vector.shape_cast %511 : vector<8x1xf32> to vector<1x8x1xf32>
    %513 = vector.broadcast %512 : vector<1x8x1xf32> to vector<2x8x13xf32>
    %514 = arith.addf %509, %513 : vector<2x8x13xf32>
    %cst_292 = arith.constant 0.000000e+00 : f32
    %515 = vector.broadcast %cst_292 : f32 to vector<2x8x13xf32>
    %516 = arith.cmpf ogt, %514, %515 : vector<2x8x13xf32>
    %cst_293 = arith.constant 0.000000e+00 : f32
    %517 = vector.broadcast %cst_293 : f32 to vector<2x8x13xf32>
    %518 = arith.minimumf %514, %517 : vector<2x8x13xf32>
    %519 = math.exp %518 : vector<2x8x13xf32>
    %cst_294 = arith.constant 1.000000e+00 : f32
    %520 = vector.broadcast %cst_294 : f32 to vector<2x8x13xf32>
    %521 = arith.subf %519, %520 : vector<2x8x13xf32>
    %522 = arith.select %516, %514, %521 : vector<2x8x13xi1>, vector<2x8x13xf32>
    %523 = vector.extract_strided_slice %522 {offsets = [0, 0, 0], sizes = [2, 8, 12], strides = [1, 1, 1]} : vector<2x8x13xf32> to vector<2x8x12xf32>
    %524 = vector.extract_strided_slice %522 {offsets = [0, 0, 1], sizes = [2, 8, 12], strides = [1, 1, 1]} : vector<2x8x13xf32> to vector<2x8x12xf32>
    %525 = arith.maximumf %523, %524 : vector<2x8x12xf32>
    %c4 = arith.constant 4 : index
    %c0_295 = arith.constant 0 : index
    %c0_296 = arith.constant 0 : index
    %526 = vector.load %arg1[%c4, %c0_295, %c0_296] : memref<7x2x16xf32, #tpu.memory_space<vmem>>, vector<1x2x16xf32>
    %527 = vector.shape_cast %526 : vector<1x2x16xf32> to vector<2x16xf32>
    %528 = vector.extract_strided_slice %527 {offsets = [0, 0], sizes = [2, 14], strides = [1, 1]} : vector<2x16xf32> to vector<2x14xf32>
    %529 = vector.shape_cast %528 : vector<2x14xf32> to vector<2x1x14xf32>
    %c4_297 = arith.constant 4 : index
    %c0_298 = arith.constant 0 : index
    %c0_299 = arith.constant 0 : index
    %c0_300 = arith.constant 0 : index
    %530 = vector.load %arg2[%c4_297, %c0_298, %c0_299, %c0_300] : memref<7x3x4x1xf32, #tpu.memory_space<vmem>>, vector<1x1x4x1xf32>
    %531 = vector.shape_cast %530 : vector<1x1x4x1xf32> to vector<4x1xf32>
    %532 = vector.shape_cast %531 : vector<4x1xf32> to vector<1x4x1xf32>
    %533 = vector.broadcast %529 : vector<2x1x14xf32> to vector<2x4x14xf32>
    %534 = vector.broadcast %532 : vector<1x4x1xf32> to vector<2x4x14xf32>
    %535 = arith.mulf %533, %534 : vector<2x4x14xf32>
    %536 = vector.extract_strided_slice %527 {offsets = [0, 1], sizes = [2, 14], strides = [1, 1]} : vector<2x16xf32> to vector<2x14xf32>
    %537 = vector.shape_cast %536 : vector<2x14xf32> to vector<2x1x14xf32>
    %c4_301 = arith.constant 4 : index
    %c1_302 = arith.constant 1 : index
    %c0_303 = arith.constant 0 : index
    %c0_304 = arith.constant 0 : index
    %538 = vector.load %arg2[%c4_301, %c1_302, %c0_303, %c0_304] : memref<7x3x4x1xf32, #tpu.memory_space<vmem>>, vector<1x1x4x1xf32>
    %539 = vector.shape_cast %538 : vector<1x1x4x1xf32> to vector<4x1xf32>
    %540 = vector.shape_cast %539 : vector<4x1xf32> to vector<1x4x1xf32>
    %541 = vector.broadcast %537 : vector<2x1x14xf32> to vector<2x4x14xf32>
    %542 = vector.broadcast %540 : vector<1x4x1xf32> to vector<2x4x14xf32>
    %543 = arith.mulf %541, %542 : vector<2x4x14xf32>
    %544 = arith.addf %535, %543 : vector<2x4x14xf32>
    %545 = vector.extract_strided_slice %527 {offsets = [0, 2], sizes = [2, 14], strides = [1, 1]} : vector<2x16xf32> to vector<2x14xf32>
    %546 = vector.shape_cast %545 : vector<2x14xf32> to vector<2x1x14xf32>
    %c4_305 = arith.constant 4 : index
    %c2_306 = arith.constant 2 : index
    %c0_307 = arith.constant 0 : index
    %c0_308 = arith.constant 0 : index
    %547 = vector.load %arg2[%c4_305, %c2_306, %c0_307, %c0_308] : memref<7x3x4x1xf32, #tpu.memory_space<vmem>>, vector<1x1x4x1xf32>
    %548 = vector.shape_cast %547 : vector<1x1x4x1xf32> to vector<4x1xf32>
    %549 = vector.shape_cast %548 : vector<4x1xf32> to vector<1x4x1xf32>
    %550 = vector.broadcast %546 : vector<2x1x14xf32> to vector<2x4x14xf32>
    %551 = vector.broadcast %549 : vector<1x4x1xf32> to vector<2x4x14xf32>
    %552 = arith.mulf %550, %551 : vector<2x4x14xf32>
    %553 = arith.addf %544, %552 : vector<2x4x14xf32>
    %c4_309 = arith.constant 4 : index
    %c0_310 = arith.constant 0 : index
    %c0_311 = arith.constant 0 : index
    %554 = vector.load %arg3[%c4_309, %c0_310, %c0_311] : memref<7x4x1xf32, #tpu.memory_space<vmem>>, vector<1x4x1xf32>
    %555 = vector.shape_cast %554 : vector<1x4x1xf32> to vector<4x1xf32>
    %556 = vector.shape_cast %555 : vector<4x1xf32> to vector<1x4x1xf32>
    %557 = vector.broadcast %556 : vector<1x4x1xf32> to vector<2x4x14xf32>
    %558 = arith.addf %553, %557 : vector<2x4x14xf32>
    %cst_312 = arith.constant 0.000000e+00 : f32
    %559 = vector.broadcast %cst_312 : f32 to vector<2x4x14xf32>
    %560 = arith.cmpf ogt, %558, %559 : vector<2x4x14xf32>
    %cst_313 = arith.constant 0.000000e+00 : f32
    %561 = vector.broadcast %cst_313 : f32 to vector<2x4x14xf32>
    %562 = arith.minimumf %558, %561 : vector<2x4x14xf32>
    %563 = math.exp %562 : vector<2x4x14xf32>
    %cst_314 = arith.constant 1.000000e+00 : f32
    %564 = vector.broadcast %cst_314 : f32 to vector<2x4x14xf32>
    %565 = arith.subf %563, %564 : vector<2x4x14xf32>
    %566 = arith.select %560, %558, %565 : vector<2x4x14xi1>, vector<2x4x14xf32>
    %567 = vector.extract_strided_slice %566 {offsets = [0, 0, 0], sizes = [2, 1, 13], strides = [1, 1, 1]} : vector<2x4x14xf32> to vector<2x1x13xf32>
    %c4_315 = arith.constant 4 : index
    %c0_316 = arith.constant 0 : index
    %c0_317 = arith.constant 0 : index
    %c0_318 = arith.constant 0 : index
    %c0_319 = arith.constant 0 : index
    %568 = vector.load %arg4[%c4_315, %c0_316, %c0_317, %c0_318, %c0_319] : memref<7x3x4x8x1xf32, #tpu.memory_space<vmem>>, vector<1x1x1x8x1xf32>
    %569 = vector.shape_cast %568 : vector<1x1x1x8x1xf32> to vector<8x1xf32>
    %570 = vector.shape_cast %569 : vector<8x1xf32> to vector<1x8x1xf32>
    %571 = vector.broadcast %567 : vector<2x1x13xf32> to vector<2x8x13xf32>
    %572 = vector.broadcast %570 : vector<1x8x1xf32> to vector<2x8x13xf32>
    %573 = arith.mulf %571, %572 : vector<2x8x13xf32>
    %574 = vector.extract_strided_slice %566 {offsets = [0, 1, 0], sizes = [2, 1, 13], strides = [1, 1, 1]} : vector<2x4x14xf32> to vector<2x1x13xf32>
    %c4_320 = arith.constant 4 : index
    %c0_321 = arith.constant 0 : index
    %c1_322 = arith.constant 1 : index
    %c0_323 = arith.constant 0 : index
    %c0_324 = arith.constant 0 : index
    %575 = vector.load %arg4[%c4_320, %c0_321, %c1_322, %c0_323, %c0_324] : memref<7x3x4x8x1xf32, #tpu.memory_space<vmem>>, vector<1x1x1x8x1xf32>
    %576 = vector.shape_cast %575 : vector<1x1x1x8x1xf32> to vector<8x1xf32>
    %577 = vector.shape_cast %576 : vector<8x1xf32> to vector<1x8x1xf32>
    %578 = vector.broadcast %574 : vector<2x1x13xf32> to vector<2x8x13xf32>
    %579 = vector.broadcast %577 : vector<1x8x1xf32> to vector<2x8x13xf32>
    %580 = arith.mulf %578, %579 : vector<2x8x13xf32>
    %581 = arith.addf %573, %580 : vector<2x8x13xf32>
    %582 = vector.extract_strided_slice %566 {offsets = [0, 2, 0], sizes = [2, 1, 13], strides = [1, 1, 1]} : vector<2x4x14xf32> to vector<2x1x13xf32>
    %c4_325 = arith.constant 4 : index
    %c0_326 = arith.constant 0 : index
    %c2_327 = arith.constant 2 : index
    %c0_328 = arith.constant 0 : index
    %c0_329 = arith.constant 0 : index
    %583 = vector.load %arg4[%c4_325, %c0_326, %c2_327, %c0_328, %c0_329] : memref<7x3x4x8x1xf32, #tpu.memory_space<vmem>>, vector<1x1x1x8x1xf32>
    %584 = vector.shape_cast %583 : vector<1x1x1x8x1xf32> to vector<8x1xf32>
    %585 = vector.shape_cast %584 : vector<8x1xf32> to vector<1x8x1xf32>
    %586 = vector.broadcast %582 : vector<2x1x13xf32> to vector<2x8x13xf32>
    %587 = vector.broadcast %585 : vector<1x8x1xf32> to vector<2x8x13xf32>
    %588 = arith.mulf %586, %587 : vector<2x8x13xf32>
    %589 = arith.addf %581, %588 : vector<2x8x13xf32>
    %590 = vector.extract_strided_slice %566 {offsets = [0, 3, 0], sizes = [2, 1, 13], strides = [1, 1, 1]} : vector<2x4x14xf32> to vector<2x1x13xf32>
    %c4_330 = arith.constant 4 : index
    %c0_331 = arith.constant 0 : index
    %c3_332 = arith.constant 3 : index
    %c0_333 = arith.constant 0 : index
    %c0_334 = arith.constant 0 : index
    %591 = vector.load %arg4[%c4_330, %c0_331, %c3_332, %c0_333, %c0_334] : memref<7x3x4x8x1xf32, #tpu.memory_space<vmem>>, vector<1x1x1x8x1xf32>
    %592 = vector.shape_cast %591 : vector<1x1x1x8x1xf32> to vector<8x1xf32>
    %593 = vector.shape_cast %592 : vector<8x1xf32> to vector<1x8x1xf32>
    %594 = vector.broadcast %590 : vector<2x1x13xf32> to vector<2x8x13xf32>
    %595 = vector.broadcast %593 : vector<1x8x1xf32> to vector<2x8x13xf32>
    %596 = arith.mulf %594, %595 : vector<2x8x13xf32>
    %597 = arith.addf %589, %596 : vector<2x8x13xf32>
    %598 = vector.extract_strided_slice %566 {offsets = [0, 0, 1], sizes = [2, 1, 13], strides = [1, 1, 1]} : vector<2x4x14xf32> to vector<2x1x13xf32>
    %c4_335 = arith.constant 4 : index
    %c1_336 = arith.constant 1 : index
    %c0_337 = arith.constant 0 : index
    %c0_338 = arith.constant 0 : index
    %c0_339 = arith.constant 0 : index
    %599 = vector.load %arg4[%c4_335, %c1_336, %c0_337, %c0_338, %c0_339] : memref<7x3x4x8x1xf32, #tpu.memory_space<vmem>>, vector<1x1x1x8x1xf32>
    %600 = vector.shape_cast %599 : vector<1x1x1x8x1xf32> to vector<8x1xf32>
    %601 = vector.shape_cast %600 : vector<8x1xf32> to vector<1x8x1xf32>
    %602 = vector.broadcast %598 : vector<2x1x13xf32> to vector<2x8x13xf32>
    %603 = vector.broadcast %601 : vector<1x8x1xf32> to vector<2x8x13xf32>
    %604 = arith.mulf %602, %603 : vector<2x8x13xf32>
    %605 = arith.addf %597, %604 : vector<2x8x13xf32>
    %606 = vector.extract_strided_slice %566 {offsets = [0, 1, 1], sizes = [2, 1, 13], strides = [1, 1, 1]} : vector<2x4x14xf32> to vector<2x1x13xf32>
    %c4_340 = arith.constant 4 : index
    %c1_341 = arith.constant 1 : index
    %c1_342 = arith.constant 1 : index
    %c0_343 = arith.constant 0 : index
    %c0_344 = arith.constant 0 : index
    %607 = vector.load %arg4[%c4_340, %c1_341, %c1_342, %c0_343, %c0_344] : memref<7x3x4x8x1xf32, #tpu.memory_space<vmem>>, vector<1x1x1x8x1xf32>
    %608 = vector.shape_cast %607 : vector<1x1x1x8x1xf32> to vector<8x1xf32>
    %609 = vector.shape_cast %608 : vector<8x1xf32> to vector<1x8x1xf32>
    %610 = vector.broadcast %606 : vector<2x1x13xf32> to vector<2x8x13xf32>
    %611 = vector.broadcast %609 : vector<1x8x1xf32> to vector<2x8x13xf32>
    %612 = arith.mulf %610, %611 : vector<2x8x13xf32>
    %613 = arith.addf %605, %612 : vector<2x8x13xf32>
    %614 = vector.extract_strided_slice %566 {offsets = [0, 2, 1], sizes = [2, 1, 13], strides = [1, 1, 1]} : vector<2x4x14xf32> to vector<2x1x13xf32>
    %c4_345 = arith.constant 4 : index
    %c1_346 = arith.constant 1 : index
    %c2_347 = arith.constant 2 : index
    %c0_348 = arith.constant 0 : index
    %c0_349 = arith.constant 0 : index
    %615 = vector.load %arg4[%c4_345, %c1_346, %c2_347, %c0_348, %c0_349] : memref<7x3x4x8x1xf32, #tpu.memory_space<vmem>>, vector<1x1x1x8x1xf32>
    %616 = vector.shape_cast %615 : vector<1x1x1x8x1xf32> to vector<8x1xf32>
    %617 = vector.shape_cast %616 : vector<8x1xf32> to vector<1x8x1xf32>
    %618 = vector.broadcast %614 : vector<2x1x13xf32> to vector<2x8x13xf32>
    %619 = vector.broadcast %617 : vector<1x8x1xf32> to vector<2x8x13xf32>
    %620 = arith.mulf %618, %619 : vector<2x8x13xf32>
    %621 = arith.addf %613, %620 : vector<2x8x13xf32>
    %622 = vector.extract_strided_slice %566 {offsets = [0, 3, 1], sizes = [2, 1, 13], strides = [1, 1, 1]} : vector<2x4x14xf32> to vector<2x1x13xf32>
    %c4_350 = arith.constant 4 : index
    %c1_351 = arith.constant 1 : index
    %c3_352 = arith.constant 3 : index
    %c0_353 = arith.constant 0 : index
    %c0_354 = arith.constant 0 : index
    %623 = vector.load %arg4[%c4_350, %c1_351, %c3_352, %c0_353, %c0_354] : memref<7x3x4x8x1xf32, #tpu.memory_space<vmem>>, vector<1x1x1x8x1xf32>
    %624 = vector.shape_cast %623 : vector<1x1x1x8x1xf32> to vector<8x1xf32>
    %625 = vector.shape_cast %624 : vector<8x1xf32> to vector<1x8x1xf32>
    %626 = vector.broadcast %622 : vector<2x1x13xf32> to vector<2x8x13xf32>
    %627 = vector.broadcast %625 : vector<1x8x1xf32> to vector<2x8x13xf32>
    %628 = arith.mulf %626, %627 : vector<2x8x13xf32>
    %629 = arith.addf %621, %628 : vector<2x8x13xf32>
    %c4_355 = arith.constant 4 : index
    %c0_356 = arith.constant 0 : index
    %c0_357 = arith.constant 0 : index
    %630 = vector.load %arg5[%c4_355, %c0_356, %c0_357] : memref<7x8x1xf32, #tpu.memory_space<vmem>>, vector<1x8x1xf32>
    %631 = vector.shape_cast %630 : vector<1x8x1xf32> to vector<8x1xf32>
    %632 = vector.shape_cast %631 : vector<8x1xf32> to vector<1x8x1xf32>
    %633 = vector.broadcast %632 : vector<1x8x1xf32> to vector<2x8x13xf32>
    %634 = arith.addf %629, %633 : vector<2x8x13xf32>
    %cst_358 = arith.constant 0.000000e+00 : f32
    %635 = vector.broadcast %cst_358 : f32 to vector<2x8x13xf32>
    %636 = arith.cmpf ogt, %634, %635 : vector<2x8x13xf32>
    %cst_359 = arith.constant 0.000000e+00 : f32
    %637 = vector.broadcast %cst_359 : f32 to vector<2x8x13xf32>
    %638 = arith.minimumf %634, %637 : vector<2x8x13xf32>
    %639 = math.exp %638 : vector<2x8x13xf32>
    %cst_360 = arith.constant 1.000000e+00 : f32
    %640 = vector.broadcast %cst_360 : f32 to vector<2x8x13xf32>
    %641 = arith.subf %639, %640 : vector<2x8x13xf32>
    %642 = arith.select %636, %634, %641 : vector<2x8x13xi1>, vector<2x8x13xf32>
    %643 = vector.extract_strided_slice %642 {offsets = [0, 0, 0], sizes = [2, 8, 12], strides = [1, 1, 1]} : vector<2x8x13xf32> to vector<2x8x12xf32>
    %644 = vector.extract_strided_slice %642 {offsets = [0, 0, 1], sizes = [2, 8, 12], strides = [1, 1, 1]} : vector<2x8x13xf32> to vector<2x8x12xf32>
    %645 = arith.maximumf %643, %644 : vector<2x8x12xf32>
    %c5 = arith.constant 5 : index
    %c0_361 = arith.constant 0 : index
    %c0_362 = arith.constant 0 : index
    %646 = vector.load %arg1[%c5, %c0_361, %c0_362] : memref<7x2x16xf32, #tpu.memory_space<vmem>>, vector<1x2x16xf32>
    %647 = vector.shape_cast %646 : vector<1x2x16xf32> to vector<2x16xf32>
    %648 = vector.extract_strided_slice %647 {offsets = [0, 0], sizes = [2, 15], strides = [1, 1]} : vector<2x16xf32> to vector<2x15xf32>
    %649 = vector.shape_cast %648 : vector<2x15xf32> to vector<2x1x15xf32>
    %c5_363 = arith.constant 5 : index
    %c0_364 = arith.constant 0 : index
    %c0_365 = arith.constant 0 : index
    %c0_366 = arith.constant 0 : index
    %650 = vector.load %arg2[%c5_363, %c0_364, %c0_365, %c0_366] : memref<7x3x4x1xf32, #tpu.memory_space<vmem>>, vector<1x1x4x1xf32>
    %651 = vector.shape_cast %650 : vector<1x1x4x1xf32> to vector<4x1xf32>
    %652 = vector.shape_cast %651 : vector<4x1xf32> to vector<1x4x1xf32>
    %653 = vector.broadcast %649 : vector<2x1x15xf32> to vector<2x4x15xf32>
    %654 = vector.broadcast %652 : vector<1x4x1xf32> to vector<2x4x15xf32>
    %655 = arith.mulf %653, %654 : vector<2x4x15xf32>
    %656 = vector.extract_strided_slice %647 {offsets = [0, 1], sizes = [2, 15], strides = [1, 1]} : vector<2x16xf32> to vector<2x15xf32>
    %657 = vector.shape_cast %656 : vector<2x15xf32> to vector<2x1x15xf32>
    %c5_367 = arith.constant 5 : index
    %c1_368 = arith.constant 1 : index
    %c0_369 = arith.constant 0 : index
    %c0_370 = arith.constant 0 : index
    %658 = vector.load %arg2[%c5_367, %c1_368, %c0_369, %c0_370] : memref<7x3x4x1xf32, #tpu.memory_space<vmem>>, vector<1x1x4x1xf32>
    %659 = vector.shape_cast %658 : vector<1x1x4x1xf32> to vector<4x1xf32>
    %660 = vector.shape_cast %659 : vector<4x1xf32> to vector<1x4x1xf32>
    %661 = vector.broadcast %657 : vector<2x1x15xf32> to vector<2x4x15xf32>
    %662 = vector.broadcast %660 : vector<1x4x1xf32> to vector<2x4x15xf32>
    %663 = arith.mulf %661, %662 : vector<2x4x15xf32>
    %664 = arith.addf %655, %663 : vector<2x4x15xf32>
    %c5_371 = arith.constant 5 : index
    %c0_372 = arith.constant 0 : index
    %c0_373 = arith.constant 0 : index
    %665 = vector.load %arg3[%c5_371, %c0_372, %c0_373] : memref<7x4x1xf32, #tpu.memory_space<vmem>>, vector<1x4x1xf32>
    %666 = vector.shape_cast %665 : vector<1x4x1xf32> to vector<4x1xf32>
    %667 = vector.shape_cast %666 : vector<4x1xf32> to vector<1x4x1xf32>
    %668 = vector.broadcast %667 : vector<1x4x1xf32> to vector<2x4x15xf32>
    %669 = arith.addf %664, %668 : vector<2x4x15xf32>
    %cst_374 = arith.constant 0.000000e+00 : f32
    %670 = vector.broadcast %cst_374 : f32 to vector<2x4x15xf32>
    %671 = arith.cmpf ogt, %669, %670 : vector<2x4x15xf32>
    %cst_375 = arith.constant 0.000000e+00 : f32
    %672 = vector.broadcast %cst_375 : f32 to vector<2x4x15xf32>
    %673 = arith.minimumf %669, %672 : vector<2x4x15xf32>
    %674 = math.exp %673 : vector<2x4x15xf32>
    %cst_376 = arith.constant 1.000000e+00 : f32
    %675 = vector.broadcast %cst_376 : f32 to vector<2x4x15xf32>
    %676 = arith.subf %674, %675 : vector<2x4x15xf32>
    %677 = arith.select %671, %669, %676 : vector<2x4x15xi1>, vector<2x4x15xf32>
    %678 = vector.extract_strided_slice %677 {offsets = [0, 0, 0], sizes = [2, 1, 13], strides = [1, 1, 1]} : vector<2x4x15xf32> to vector<2x1x13xf32>
    %c5_377 = arith.constant 5 : index
    %c0_378 = arith.constant 0 : index
    %c0_379 = arith.constant 0 : index
    %c0_380 = arith.constant 0 : index
    %c0_381 = arith.constant 0 : index
    %679 = vector.load %arg4[%c5_377, %c0_378, %c0_379, %c0_380, %c0_381] : memref<7x3x4x8x1xf32, #tpu.memory_space<vmem>>, vector<1x1x1x8x1xf32>
    %680 = vector.shape_cast %679 : vector<1x1x1x8x1xf32> to vector<8x1xf32>
    %681 = vector.shape_cast %680 : vector<8x1xf32> to vector<1x8x1xf32>
    %682 = vector.broadcast %678 : vector<2x1x13xf32> to vector<2x8x13xf32>
    %683 = vector.broadcast %681 : vector<1x8x1xf32> to vector<2x8x13xf32>
    %684 = arith.mulf %682, %683 : vector<2x8x13xf32>
    %685 = vector.extract_strided_slice %677 {offsets = [0, 1, 0], sizes = [2, 1, 13], strides = [1, 1, 1]} : vector<2x4x15xf32> to vector<2x1x13xf32>
    %c5_382 = arith.constant 5 : index
    %c0_383 = arith.constant 0 : index
    %c1_384 = arith.constant 1 : index
    %c0_385 = arith.constant 0 : index
    %c0_386 = arith.constant 0 : index
    %686 = vector.load %arg4[%c5_382, %c0_383, %c1_384, %c0_385, %c0_386] : memref<7x3x4x8x1xf32, #tpu.memory_space<vmem>>, vector<1x1x1x8x1xf32>
    %687 = vector.shape_cast %686 : vector<1x1x1x8x1xf32> to vector<8x1xf32>
    %688 = vector.shape_cast %687 : vector<8x1xf32> to vector<1x8x1xf32>
    %689 = vector.broadcast %685 : vector<2x1x13xf32> to vector<2x8x13xf32>
    %690 = vector.broadcast %688 : vector<1x8x1xf32> to vector<2x8x13xf32>
    %691 = arith.mulf %689, %690 : vector<2x8x13xf32>
    %692 = arith.addf %684, %691 : vector<2x8x13xf32>
    %693 = vector.extract_strided_slice %677 {offsets = [0, 2, 0], sizes = [2, 1, 13], strides = [1, 1, 1]} : vector<2x4x15xf32> to vector<2x1x13xf32>
    %c5_387 = arith.constant 5 : index
    %c0_388 = arith.constant 0 : index
    %c2_389 = arith.constant 2 : index
    %c0_390 = arith.constant 0 : index
    %c0_391 = arith.constant 0 : index
    %694 = vector.load %arg4[%c5_387, %c0_388, %c2_389, %c0_390, %c0_391] : memref<7x3x4x8x1xf32, #tpu.memory_space<vmem>>, vector<1x1x1x8x1xf32>
    %695 = vector.shape_cast %694 : vector<1x1x1x8x1xf32> to vector<8x1xf32>
    %696 = vector.shape_cast %695 : vector<8x1xf32> to vector<1x8x1xf32>
    %697 = vector.broadcast %693 : vector<2x1x13xf32> to vector<2x8x13xf32>
    %698 = vector.broadcast %696 : vector<1x8x1xf32> to vector<2x8x13xf32>
    %699 = arith.mulf %697, %698 : vector<2x8x13xf32>
    %700 = arith.addf %692, %699 : vector<2x8x13xf32>
    %701 = vector.extract_strided_slice %677 {offsets = [0, 3, 0], sizes = [2, 1, 13], strides = [1, 1, 1]} : vector<2x4x15xf32> to vector<2x1x13xf32>
    %c5_392 = arith.constant 5 : index
    %c0_393 = arith.constant 0 : index
    %c3_394 = arith.constant 3 : index
    %c0_395 = arith.constant 0 : index
    %c0_396 = arith.constant 0 : index
    %702 = vector.load %arg4[%c5_392, %c0_393, %c3_394, %c0_395, %c0_396] : memref<7x3x4x8x1xf32, #tpu.memory_space<vmem>>, vector<1x1x1x8x1xf32>
    %703 = vector.shape_cast %702 : vector<1x1x1x8x1xf32> to vector<8x1xf32>
    %704 = vector.shape_cast %703 : vector<8x1xf32> to vector<1x8x1xf32>
    %705 = vector.broadcast %701 : vector<2x1x13xf32> to vector<2x8x13xf32>
    %706 = vector.broadcast %704 : vector<1x8x1xf32> to vector<2x8x13xf32>
    %707 = arith.mulf %705, %706 : vector<2x8x13xf32>
    %708 = arith.addf %700, %707 : vector<2x8x13xf32>
    %709 = vector.extract_strided_slice %677 {offsets = [0, 0, 1], sizes = [2, 1, 13], strides = [1, 1, 1]} : vector<2x4x15xf32> to vector<2x1x13xf32>
    %c5_397 = arith.constant 5 : index
    %c1_398 = arith.constant 1 : index
    %c0_399 = arith.constant 0 : index
    %c0_400 = arith.constant 0 : index
    %c0_401 = arith.constant 0 : index
    %710 = vector.load %arg4[%c5_397, %c1_398, %c0_399, %c0_400, %c0_401] : memref<7x3x4x8x1xf32, #tpu.memory_space<vmem>>, vector<1x1x1x8x1xf32>
    %711 = vector.shape_cast %710 : vector<1x1x1x8x1xf32> to vector<8x1xf32>
    %712 = vector.shape_cast %711 : vector<8x1xf32> to vector<1x8x1xf32>
    %713 = vector.broadcast %709 : vector<2x1x13xf32> to vector<2x8x13xf32>
    %714 = vector.broadcast %712 : vector<1x8x1xf32> to vector<2x8x13xf32>
    %715 = arith.mulf %713, %714 : vector<2x8x13xf32>
    %716 = arith.addf %708, %715 : vector<2x8x13xf32>
    %717 = vector.extract_strided_slice %677 {offsets = [0, 1, 1], sizes = [2, 1, 13], strides = [1, 1, 1]} : vector<2x4x15xf32> to vector<2x1x13xf32>
    %c5_402 = arith.constant 5 : index
    %c1_403 = arith.constant 1 : index
    %c1_404 = arith.constant 1 : index
    %c0_405 = arith.constant 0 : index
    %c0_406 = arith.constant 0 : index
    %718 = vector.load %arg4[%c5_402, %c1_403, %c1_404, %c0_405, %c0_406] : memref<7x3x4x8x1xf32, #tpu.memory_space<vmem>>, vector<1x1x1x8x1xf32>
    %719 = vector.shape_cast %718 : vector<1x1x1x8x1xf32> to vector<8x1xf32>
    %720 = vector.shape_cast %719 : vector<8x1xf32> to vector<1x8x1xf32>
    %721 = vector.broadcast %717 : vector<2x1x13xf32> to vector<2x8x13xf32>
    %722 = vector.broadcast %720 : vector<1x8x1xf32> to vector<2x8x13xf32>
    %723 = arith.mulf %721, %722 : vector<2x8x13xf32>
    %724 = arith.addf %716, %723 : vector<2x8x13xf32>
    %725 = vector.extract_strided_slice %677 {offsets = [0, 2, 1], sizes = [2, 1, 13], strides = [1, 1, 1]} : vector<2x4x15xf32> to vector<2x1x13xf32>
    %c5_407 = arith.constant 5 : index
    %c1_408 = arith.constant 1 : index
    %c2_409 = arith.constant 2 : index
    %c0_410 = arith.constant 0 : index
    %c0_411 = arith.constant 0 : index
    %726 = vector.load %arg4[%c5_407, %c1_408, %c2_409, %c0_410, %c0_411] : memref<7x3x4x8x1xf32, #tpu.memory_space<vmem>>, vector<1x1x1x8x1xf32>
    %727 = vector.shape_cast %726 : vector<1x1x1x8x1xf32> to vector<8x1xf32>
    %728 = vector.shape_cast %727 : vector<8x1xf32> to vector<1x8x1xf32>
    %729 = vector.broadcast %725 : vector<2x1x13xf32> to vector<2x8x13xf32>
    %730 = vector.broadcast %728 : vector<1x8x1xf32> to vector<2x8x13xf32>
    %731 = arith.mulf %729, %730 : vector<2x8x13xf32>
    %732 = arith.addf %724, %731 : vector<2x8x13xf32>
    %733 = vector.extract_strided_slice %677 {offsets = [0, 3, 1], sizes = [2, 1, 13], strides = [1, 1, 1]} : vector<2x4x15xf32> to vector<2x1x13xf32>
    %c5_412 = arith.constant 5 : index
    %c1_413 = arith.constant 1 : index
    %c3_414 = arith.constant 3 : index
    %c0_415 = arith.constant 0 : index
    %c0_416 = arith.constant 0 : index
    %734 = vector.load %arg4[%c5_412, %c1_413, %c3_414, %c0_415, %c0_416] : memref<7x3x4x8x1xf32, #tpu.memory_space<vmem>>, vector<1x1x1x8x1xf32>
    %735 = vector.shape_cast %734 : vector<1x1x1x8x1xf32> to vector<8x1xf32>
    %736 = vector.shape_cast %735 : vector<8x1xf32> to vector<1x8x1xf32>
    %737 = vector.broadcast %733 : vector<2x1x13xf32> to vector<2x8x13xf32>
    %738 = vector.broadcast %736 : vector<1x8x1xf32> to vector<2x8x13xf32>
    %739 = arith.mulf %737, %738 : vector<2x8x13xf32>
    %740 = arith.addf %732, %739 : vector<2x8x13xf32>
    %741 = vector.extract_strided_slice %677 {offsets = [0, 0, 2], sizes = [2, 1, 13], strides = [1, 1, 1]} : vector<2x4x15xf32> to vector<2x1x13xf32>
    %c5_417 = arith.constant 5 : index
    %c2_418 = arith.constant 2 : index
    %c0_419 = arith.constant 0 : index
    %c0_420 = arith.constant 0 : index
    %c0_421 = arith.constant 0 : index
    %742 = vector.load %arg4[%c5_417, %c2_418, %c0_419, %c0_420, %c0_421] : memref<7x3x4x8x1xf32, #tpu.memory_space<vmem>>, vector<1x1x1x8x1xf32>
    %743 = vector.shape_cast %742 : vector<1x1x1x8x1xf32> to vector<8x1xf32>
    %744 = vector.shape_cast %743 : vector<8x1xf32> to vector<1x8x1xf32>
    %745 = vector.broadcast %741 : vector<2x1x13xf32> to vector<2x8x13xf32>
    %746 = vector.broadcast %744 : vector<1x8x1xf32> to vector<2x8x13xf32>
    %747 = arith.mulf %745, %746 : vector<2x8x13xf32>
    %748 = arith.addf %740, %747 : vector<2x8x13xf32>
    %749 = vector.extract_strided_slice %677 {offsets = [0, 1, 2], sizes = [2, 1, 13], strides = [1, 1, 1]} : vector<2x4x15xf32> to vector<2x1x13xf32>
    %c5_422 = arith.constant 5 : index
    %c2_423 = arith.constant 2 : index
    %c1_424 = arith.constant 1 : index
    %c0_425 = arith.constant 0 : index
    %c0_426 = arith.constant 0 : index
    %750 = vector.load %arg4[%c5_422, %c2_423, %c1_424, %c0_425, %c0_426] : memref<7x3x4x8x1xf32, #tpu.memory_space<vmem>>, vector<1x1x1x8x1xf32>
    %751 = vector.shape_cast %750 : vector<1x1x1x8x1xf32> to vector<8x1xf32>
    %752 = vector.shape_cast %751 : vector<8x1xf32> to vector<1x8x1xf32>
    %753 = vector.broadcast %749 : vector<2x1x13xf32> to vector<2x8x13xf32>
    %754 = vector.broadcast %752 : vector<1x8x1xf32> to vector<2x8x13xf32>
    %755 = arith.mulf %753, %754 : vector<2x8x13xf32>
    %756 = arith.addf %748, %755 : vector<2x8x13xf32>
    %757 = vector.extract_strided_slice %677 {offsets = [0, 2, 2], sizes = [2, 1, 13], strides = [1, 1, 1]} : vector<2x4x15xf32> to vector<2x1x13xf32>
    %c5_427 = arith.constant 5 : index
    %c2_428 = arith.constant 2 : index
    %c2_429 = arith.constant 2 : index
    %c0_430 = arith.constant 0 : index
    %c0_431 = arith.constant 0 : index
    %758 = vector.load %arg4[%c5_427, %c2_428, %c2_429, %c0_430, %c0_431] : memref<7x3x4x8x1xf32, #tpu.memory_space<vmem>>, vector<1x1x1x8x1xf32>
    %759 = vector.shape_cast %758 : vector<1x1x1x8x1xf32> to vector<8x1xf32>
    %760 = vector.shape_cast %759 : vector<8x1xf32> to vector<1x8x1xf32>
    %761 = vector.broadcast %757 : vector<2x1x13xf32> to vector<2x8x13xf32>
    %762 = vector.broadcast %760 : vector<1x8x1xf32> to vector<2x8x13xf32>
    %763 = arith.mulf %761, %762 : vector<2x8x13xf32>
    %764 = arith.addf %756, %763 : vector<2x8x13xf32>
    %765 = vector.extract_strided_slice %677 {offsets = [0, 3, 2], sizes = [2, 1, 13], strides = [1, 1, 1]} : vector<2x4x15xf32> to vector<2x1x13xf32>
    %c5_432 = arith.constant 5 : index
    %c2_433 = arith.constant 2 : index
    %c3_434 = arith.constant 3 : index
    %c0_435 = arith.constant 0 : index
    %c0_436 = arith.constant 0 : index
    %766 = vector.load %arg4[%c5_432, %c2_433, %c3_434, %c0_435, %c0_436] : memref<7x3x4x8x1xf32, #tpu.memory_space<vmem>>, vector<1x1x1x8x1xf32>
    %767 = vector.shape_cast %766 : vector<1x1x1x8x1xf32> to vector<8x1xf32>
    %768 = vector.shape_cast %767 : vector<8x1xf32> to vector<1x8x1xf32>
    %769 = vector.broadcast %765 : vector<2x1x13xf32> to vector<2x8x13xf32>
    %770 = vector.broadcast %768 : vector<1x8x1xf32> to vector<2x8x13xf32>
    %771 = arith.mulf %769, %770 : vector<2x8x13xf32>
    %772 = arith.addf %764, %771 : vector<2x8x13xf32>
    %c5_437 = arith.constant 5 : index
    %c0_438 = arith.constant 0 : index
    %c0_439 = arith.constant 0 : index
    %773 = vector.load %arg5[%c5_437, %c0_438, %c0_439] : memref<7x8x1xf32, #tpu.memory_space<vmem>>, vector<1x8x1xf32>
    %774 = vector.shape_cast %773 : vector<1x8x1xf32> to vector<8x1xf32>
    %775 = vector.shape_cast %774 : vector<8x1xf32> to vector<1x8x1xf32>
    %776 = vector.broadcast %775 : vector<1x8x1xf32> to vector<2x8x13xf32>
    %777 = arith.addf %772, %776 : vector<2x8x13xf32>
    %cst_440 = arith.constant 0.000000e+00 : f32
    %778 = vector.broadcast %cst_440 : f32 to vector<2x8x13xf32>
    %779 = arith.cmpf ogt, %777, %778 : vector<2x8x13xf32>
    %cst_441 = arith.constant 0.000000e+00 : f32
    %780 = vector.broadcast %cst_441 : f32 to vector<2x8x13xf32>
    %781 = arith.minimumf %777, %780 : vector<2x8x13xf32>
    %782 = math.exp %781 : vector<2x8x13xf32>
    %cst_442 = arith.constant 1.000000e+00 : f32
    %783 = vector.broadcast %cst_442 : f32 to vector<2x8x13xf32>
    %784 = arith.subf %782, %783 : vector<2x8x13xf32>
    %785 = arith.select %779, %777, %784 : vector<2x8x13xi1>, vector<2x8x13xf32>
    %786 = vector.extract_strided_slice %785 {offsets = [0, 0, 0], sizes = [2, 8, 12], strides = [1, 1, 1]} : vector<2x8x13xf32> to vector<2x8x12xf32>
    %787 = vector.extract_strided_slice %785 {offsets = [0, 0, 1], sizes = [2, 8, 12], strides = [1, 1, 1]} : vector<2x8x13xf32> to vector<2x8x12xf32>
    %788 = arith.maximumf %786, %787 : vector<2x8x12xf32>
    %c6 = arith.constant 6 : index
    %c0_443 = arith.constant 0 : index
    %c0_444 = arith.constant 0 : index
    %789 = vector.load %arg1[%c6, %c0_443, %c0_444] : memref<7x2x16xf32, #tpu.memory_space<vmem>>, vector<1x2x16xf32>
    %790 = vector.shape_cast %789 : vector<1x2x16xf32> to vector<2x16xf32>
    %791 = vector.extract_strided_slice %790 {offsets = [0, 0], sizes = [2, 14], strides = [1, 1]} : vector<2x16xf32> to vector<2x14xf32>
    %792 = vector.shape_cast %791 : vector<2x14xf32> to vector<2x1x14xf32>
    %c6_445 = arith.constant 6 : index
    %c0_446 = arith.constant 0 : index
    %c0_447 = arith.constant 0 : index
    %c0_448 = arith.constant 0 : index
    %793 = vector.load %arg2[%c6_445, %c0_446, %c0_447, %c0_448] : memref<7x3x4x1xf32, #tpu.memory_space<vmem>>, vector<1x1x4x1xf32>
    %794 = vector.shape_cast %793 : vector<1x1x4x1xf32> to vector<4x1xf32>
    %795 = vector.shape_cast %794 : vector<4x1xf32> to vector<1x4x1xf32>
    %796 = vector.broadcast %792 : vector<2x1x14xf32> to vector<2x4x14xf32>
    %797 = vector.broadcast %795 : vector<1x4x1xf32> to vector<2x4x14xf32>
    %798 = arith.mulf %796, %797 : vector<2x4x14xf32>
    %799 = vector.extract_strided_slice %790 {offsets = [0, 1], sizes = [2, 14], strides = [1, 1]} : vector<2x16xf32> to vector<2x14xf32>
    %800 = vector.shape_cast %799 : vector<2x14xf32> to vector<2x1x14xf32>
    %c6_449 = arith.constant 6 : index
    %c1_450 = arith.constant 1 : index
    %c0_451 = arith.constant 0 : index
    %c0_452 = arith.constant 0 : index
    %801 = vector.load %arg2[%c6_449, %c1_450, %c0_451, %c0_452] : memref<7x3x4x1xf32, #tpu.memory_space<vmem>>, vector<1x1x4x1xf32>
    %802 = vector.shape_cast %801 : vector<1x1x4x1xf32> to vector<4x1xf32>
    %803 = vector.shape_cast %802 : vector<4x1xf32> to vector<1x4x1xf32>
    %804 = vector.broadcast %800 : vector<2x1x14xf32> to vector<2x4x14xf32>
    %805 = vector.broadcast %803 : vector<1x4x1xf32> to vector<2x4x14xf32>
    %806 = arith.mulf %804, %805 : vector<2x4x14xf32>
    %807 = arith.addf %798, %806 : vector<2x4x14xf32>
    %808 = vector.extract_strided_slice %790 {offsets = [0, 2], sizes = [2, 14], strides = [1, 1]} : vector<2x16xf32> to vector<2x14xf32>
    %809 = vector.shape_cast %808 : vector<2x14xf32> to vector<2x1x14xf32>
    %c6_453 = arith.constant 6 : index
    %c2_454 = arith.constant 2 : index
    %c0_455 = arith.constant 0 : index
    %c0_456 = arith.constant 0 : index
    %810 = vector.load %arg2[%c6_453, %c2_454, %c0_455, %c0_456] : memref<7x3x4x1xf32, #tpu.memory_space<vmem>>, vector<1x1x4x1xf32>
    %811 = vector.shape_cast %810 : vector<1x1x4x1xf32> to vector<4x1xf32>
    %812 = vector.shape_cast %811 : vector<4x1xf32> to vector<1x4x1xf32>
    %813 = vector.broadcast %809 : vector<2x1x14xf32> to vector<2x4x14xf32>
    %814 = vector.broadcast %812 : vector<1x4x1xf32> to vector<2x4x14xf32>
    %815 = arith.mulf %813, %814 : vector<2x4x14xf32>
    %816 = arith.addf %807, %815 : vector<2x4x14xf32>
    %c6_457 = arith.constant 6 : index
    %c0_458 = arith.constant 0 : index
    %c0_459 = arith.constant 0 : index
    %817 = vector.load %arg3[%c6_457, %c0_458, %c0_459] : memref<7x4x1xf32, #tpu.memory_space<vmem>>, vector<1x4x1xf32>
    %818 = vector.shape_cast %817 : vector<1x4x1xf32> to vector<4x1xf32>
    %819 = vector.shape_cast %818 : vector<4x1xf32> to vector<1x4x1xf32>
    %820 = vector.broadcast %819 : vector<1x4x1xf32> to vector<2x4x14xf32>
    %821 = arith.addf %816, %820 : vector<2x4x14xf32>
    %cst_460 = arith.constant 0.000000e+00 : f32
    %822 = vector.broadcast %cst_460 : f32 to vector<2x4x14xf32>
    %823 = arith.cmpf ogt, %821, %822 : vector<2x4x14xf32>
    %cst_461 = arith.constant 0.000000e+00 : f32
    %824 = vector.broadcast %cst_461 : f32 to vector<2x4x14xf32>
    %825 = arith.minimumf %821, %824 : vector<2x4x14xf32>
    %826 = math.exp %825 : vector<2x4x14xf32>
    %cst_462 = arith.constant 1.000000e+00 : f32
    %827 = vector.broadcast %cst_462 : f32 to vector<2x4x14xf32>
    %828 = arith.subf %826, %827 : vector<2x4x14xf32>
    %829 = arith.select %823, %821, %828 : vector<2x4x14xi1>, vector<2x4x14xf32>
    %830 = vector.extract_strided_slice %829 {offsets = [0, 0, 0], sizes = [2, 1, 13], strides = [1, 1, 1]} : vector<2x4x14xf32> to vector<2x1x13xf32>
    %c6_463 = arith.constant 6 : index
    %c0_464 = arith.constant 0 : index
    %c0_465 = arith.constant 0 : index
    %c0_466 = arith.constant 0 : index
    %c0_467 = arith.constant 0 : index
    %831 = vector.load %arg4[%c6_463, %c0_464, %c0_465, %c0_466, %c0_467] : memref<7x3x4x8x1xf32, #tpu.memory_space<vmem>>, vector<1x1x1x8x1xf32>
    %832 = vector.shape_cast %831 : vector<1x1x1x8x1xf32> to vector<8x1xf32>
    %833 = vector.shape_cast %832 : vector<8x1xf32> to vector<1x8x1xf32>
    %834 = vector.broadcast %830 : vector<2x1x13xf32> to vector<2x8x13xf32>
    %835 = vector.broadcast %833 : vector<1x8x1xf32> to vector<2x8x13xf32>
    %836 = arith.mulf %834, %835 : vector<2x8x13xf32>
    %837 = vector.extract_strided_slice %829 {offsets = [0, 1, 0], sizes = [2, 1, 13], strides = [1, 1, 1]} : vector<2x4x14xf32> to vector<2x1x13xf32>
    %c6_468 = arith.constant 6 : index
    %c0_469 = arith.constant 0 : index
    %c1_470 = arith.constant 1 : index
    %c0_471 = arith.constant 0 : index
    %c0_472 = arith.constant 0 : index
    %838 = vector.load %arg4[%c6_468, %c0_469, %c1_470, %c0_471, %c0_472] : memref<7x3x4x8x1xf32, #tpu.memory_space<vmem>>, vector<1x1x1x8x1xf32>
    %839 = vector.shape_cast %838 : vector<1x1x1x8x1xf32> to vector<8x1xf32>
    %840 = vector.shape_cast %839 : vector<8x1xf32> to vector<1x8x1xf32>
    %841 = vector.broadcast %837 : vector<2x1x13xf32> to vector<2x8x13xf32>
    %842 = vector.broadcast %840 : vector<1x8x1xf32> to vector<2x8x13xf32>
    %843 = arith.mulf %841, %842 : vector<2x8x13xf32>
    %844 = arith.addf %836, %843 : vector<2x8x13xf32>
    %845 = vector.extract_strided_slice %829 {offsets = [0, 2, 0], sizes = [2, 1, 13], strides = [1, 1, 1]} : vector<2x4x14xf32> to vector<2x1x13xf32>
    %c6_473 = arith.constant 6 : index
    %c0_474 = arith.constant 0 : index
    %c2_475 = arith.constant 2 : index
    %c0_476 = arith.constant 0 : index
    %c0_477 = arith.constant 0 : index
    %846 = vector.load %arg4[%c6_473, %c0_474, %c2_475, %c0_476, %c0_477] : memref<7x3x4x8x1xf32, #tpu.memory_space<vmem>>, vector<1x1x1x8x1xf32>
    %847 = vector.shape_cast %846 : vector<1x1x1x8x1xf32> to vector<8x1xf32>
    %848 = vector.shape_cast %847 : vector<8x1xf32> to vector<1x8x1xf32>
    %849 = vector.broadcast %845 : vector<2x1x13xf32> to vector<2x8x13xf32>
    %850 = vector.broadcast %848 : vector<1x8x1xf32> to vector<2x8x13xf32>
    %851 = arith.mulf %849, %850 : vector<2x8x13xf32>
    %852 = arith.addf %844, %851 : vector<2x8x13xf32>
    %853 = vector.extract_strided_slice %829 {offsets = [0, 3, 0], sizes = [2, 1, 13], strides = [1, 1, 1]} : vector<2x4x14xf32> to vector<2x1x13xf32>
    %c6_478 = arith.constant 6 : index
    %c0_479 = arith.constant 0 : index
    %c3_480 = arith.constant 3 : index
    %c0_481 = arith.constant 0 : index
    %c0_482 = arith.constant 0 : index
    %854 = vector.load %arg4[%c6_478, %c0_479, %c3_480, %c0_481, %c0_482] : memref<7x3x4x8x1xf32, #tpu.memory_space<vmem>>, vector<1x1x1x8x1xf32>
    %855 = vector.shape_cast %854 : vector<1x1x1x8x1xf32> to vector<8x1xf32>
    %856 = vector.shape_cast %855 : vector<8x1xf32> to vector<1x8x1xf32>
    %857 = vector.broadcast %853 : vector<2x1x13xf32> to vector<2x8x13xf32>
    %858 = vector.broadcast %856 : vector<1x8x1xf32> to vector<2x8x13xf32>
    %859 = arith.mulf %857, %858 : vector<2x8x13xf32>
    %860 = arith.addf %852, %859 : vector<2x8x13xf32>
    %861 = vector.extract_strided_slice %829 {offsets = [0, 0, 1], sizes = [2, 1, 13], strides = [1, 1, 1]} : vector<2x4x14xf32> to vector<2x1x13xf32>
    %c6_483 = arith.constant 6 : index
    %c1_484 = arith.constant 1 : index
    %c0_485 = arith.constant 0 : index
    %c0_486 = arith.constant 0 : index
    %c0_487 = arith.constant 0 : index
    %862 = vector.load %arg4[%c6_483, %c1_484, %c0_485, %c0_486, %c0_487] : memref<7x3x4x8x1xf32, #tpu.memory_space<vmem>>, vector<1x1x1x8x1xf32>
    %863 = vector.shape_cast %862 : vector<1x1x1x8x1xf32> to vector<8x1xf32>
    %864 = vector.shape_cast %863 : vector<8x1xf32> to vector<1x8x1xf32>
    %865 = vector.broadcast %861 : vector<2x1x13xf32> to vector<2x8x13xf32>
    %866 = vector.broadcast %864 : vector<1x8x1xf32> to vector<2x8x13xf32>
    %867 = arith.mulf %865, %866 : vector<2x8x13xf32>
    %868 = arith.addf %860, %867 : vector<2x8x13xf32>
    %869 = vector.extract_strided_slice %829 {offsets = [0, 1, 1], sizes = [2, 1, 13], strides = [1, 1, 1]} : vector<2x4x14xf32> to vector<2x1x13xf32>
    %c6_488 = arith.constant 6 : index
    %c1_489 = arith.constant 1 : index
    %c1_490 = arith.constant 1 : index
    %c0_491 = arith.constant 0 : index
    %c0_492 = arith.constant 0 : index
    %870 = vector.load %arg4[%c6_488, %c1_489, %c1_490, %c0_491, %c0_492] : memref<7x3x4x8x1xf32, #tpu.memory_space<vmem>>, vector<1x1x1x8x1xf32>
    %871 = vector.shape_cast %870 : vector<1x1x1x8x1xf32> to vector<8x1xf32>
    %872 = vector.shape_cast %871 : vector<8x1xf32> to vector<1x8x1xf32>
    %873 = vector.broadcast %869 : vector<2x1x13xf32> to vector<2x8x13xf32>
    %874 = vector.broadcast %872 : vector<1x8x1xf32> to vector<2x8x13xf32>
    %875 = arith.mulf %873, %874 : vector<2x8x13xf32>
    %876 = arith.addf %868, %875 : vector<2x8x13xf32>
    %877 = vector.extract_strided_slice %829 {offsets = [0, 2, 1], sizes = [2, 1, 13], strides = [1, 1, 1]} : vector<2x4x14xf32> to vector<2x1x13xf32>
    %c6_493 = arith.constant 6 : index
    %c1_494 = arith.constant 1 : index
    %c2_495 = arith.constant 2 : index
    %c0_496 = arith.constant 0 : index
    %c0_497 = arith.constant 0 : index
    %878 = vector.load %arg4[%c6_493, %c1_494, %c2_495, %c0_496, %c0_497] : memref<7x3x4x8x1xf32, #tpu.memory_space<vmem>>, vector<1x1x1x8x1xf32>
    %879 = vector.shape_cast %878 : vector<1x1x1x8x1xf32> to vector<8x1xf32>
    %880 = vector.shape_cast %879 : vector<8x1xf32> to vector<1x8x1xf32>
    %881 = vector.broadcast %877 : vector<2x1x13xf32> to vector<2x8x13xf32>
    %882 = vector.broadcast %880 : vector<1x8x1xf32> to vector<2x8x13xf32>
    %883 = arith.mulf %881, %882 : vector<2x8x13xf32>
    %884 = arith.addf %876, %883 : vector<2x8x13xf32>
    %885 = vector.extract_strided_slice %829 {offsets = [0, 3, 1], sizes = [2, 1, 13], strides = [1, 1, 1]} : vector<2x4x14xf32> to vector<2x1x13xf32>
    %c6_498 = arith.constant 6 : index
    %c1_499 = arith.constant 1 : index
    %c3_500 = arith.constant 3 : index
    %c0_501 = arith.constant 0 : index
    %c0_502 = arith.constant 0 : index
    %886 = vector.load %arg4[%c6_498, %c1_499, %c3_500, %c0_501, %c0_502] : memref<7x3x4x8x1xf32, #tpu.memory_space<vmem>>, vector<1x1x1x8x1xf32>
    %887 = vector.shape_cast %886 : vector<1x1x1x8x1xf32> to vector<8x1xf32>
    %888 = vector.shape_cast %887 : vector<8x1xf32> to vector<1x8x1xf32>
    %889 = vector.broadcast %885 : vector<2x1x13xf32> to vector<2x8x13xf32>
    %890 = vector.broadcast %888 : vector<1x8x1xf32> to vector<2x8x13xf32>
    %891 = arith.mulf %889, %890 : vector<2x8x13xf32>
    %892 = arith.addf %884, %891 : vector<2x8x13xf32>
    %c6_503 = arith.constant 6 : index
    %c0_504 = arith.constant 0 : index
    %c0_505 = arith.constant 0 : index
    %893 = vector.load %arg5[%c6_503, %c0_504, %c0_505] : memref<7x8x1xf32, #tpu.memory_space<vmem>>, vector<1x8x1xf32>
    %894 = vector.shape_cast %893 : vector<1x8x1xf32> to vector<8x1xf32>
    %895 = vector.shape_cast %894 : vector<8x1xf32> to vector<1x8x1xf32>
    %896 = vector.broadcast %895 : vector<1x8x1xf32> to vector<2x8x13xf32>
    %897 = arith.addf %892, %896 : vector<2x8x13xf32>
    %cst_506 = arith.constant 0.000000e+00 : f32
    %898 = vector.broadcast %cst_506 : f32 to vector<2x8x13xf32>
    %899 = arith.cmpf ogt, %897, %898 : vector<2x8x13xf32>
    %cst_507 = arith.constant 0.000000e+00 : f32
    %900 = vector.broadcast %cst_507 : f32 to vector<2x8x13xf32>
    %901 = arith.minimumf %897, %900 : vector<2x8x13xf32>
    %902 = math.exp %901 : vector<2x8x13xf32>
    %cst_508 = arith.constant 1.000000e+00 : f32
    %903 = vector.broadcast %cst_508 : f32 to vector<2x8x13xf32>
    %904 = arith.subf %902, %903 : vector<2x8x13xf32>
    %905 = arith.select %899, %897, %904 : vector<2x8x13xi1>, vector<2x8x13xf32>
    %906 = vector.extract_strided_slice %905 {offsets = [0, 0, 0], sizes = [2, 8, 12], strides = [1, 1, 1]} : vector<2x8x13xf32> to vector<2x8x12xf32>
    %907 = vector.extract_strided_slice %905 {offsets = [0, 0, 1], sizes = [2, 8, 12], strides = [1, 1, 1]} : vector<2x8x13xf32> to vector<2x8x12xf32>
    %908 = arith.maximumf %906, %907 : vector<2x8x12xf32>
    %909 = tpu.concatenate %119, %262, %382, %525, %645, %788, %908 in 2 : vector<2x8x12xf32>, vector<2x8x12xf32>, vector<2x8x12xf32>, vector<2x8x12xf32>, vector<2x8x12xf32>, vector<2x8x12xf32>, vector<2x8x12xf32> -> vector<2x8x84xf32>
    %910 = vector.extract_strided_slice %909 {offsets = [0, 0, 0], sizes = [2, 1, 84], strides = [1, 1, 1]} : vector<2x8x84xf32> to vector<2x1x84xf32>
    %911 = vector.extract_strided_slice %909 {offsets = [0, 1, 0], sizes = [2, 1, 84], strides = [1, 1, 1]} : vector<2x8x84xf32> to vector<2x1x84xf32>
    %912 = vector.extract_strided_slice %909 {offsets = [0, 2, 0], sizes = [2, 1, 84], strides = [1, 1, 1]} : vector<2x8x84xf32> to vector<2x1x84xf32>
    %913 = vector.extract_strided_slice %909 {offsets = [0, 3, 0], sizes = [2, 1, 84], strides = [1, 1, 1]} : vector<2x8x84xf32> to vector<2x1x84xf32>
    %914 = vector.extract_strided_slice %909 {offsets = [0, 4, 0], sizes = [2, 1, 84], strides = [1, 1, 1]} : vector<2x8x84xf32> to vector<2x1x84xf32>
    %915 = vector.extract_strided_slice %909 {offsets = [0, 5, 0], sizes = [2, 1, 84], strides = [1, 1, 1]} : vector<2x8x84xf32> to vector<2x1x84xf32>
    %916 = vector.extract_strided_slice %909 {offsets = [0, 6, 0], sizes = [2, 1, 84], strides = [1, 1, 1]} : vector<2x8x84xf32> to vector<2x1x84xf32>
    %917 = vector.extract_strided_slice %909 {offsets = [0, 7, 0], sizes = [2, 1, 84], strides = [1, 1, 1]} : vector<2x8x84xf32> to vector<2x1x84xf32>
    %918 = tpu.concatenate %910, %911, %912, %913, %914, %915, %916, %917 in 2 : vector<2x1x84xf32>, vector<2x1x84xf32>, vector<2x1x84xf32>, vector<2x1x84xf32>, vector<2x1x84xf32>, vector<2x1x84xf32>, vector<2x1x84xf32>, vector<2x1x84xf32> -> vector<2x1x672xf32>
    %919 = vector.shape_cast %918 : vector<2x1x672xf32> to vector<2x672xf32>
    %c0_509 = arith.constant 0 : index
    %c0_510 = arith.constant 0 : index
    %920 = vector.load %arg6[%c0_509, %c0_510] : memref<672x328xf32, #tpu.memory_space<vmem>>, vector<672x328xf32>
    %cst_511 = arith.constant dense<0.000000e+00> : vector<2x328xf32>
    %921 = tpu.matmul %919, %920, %cst_511 {dimension_numbers = #tpu.dot_dimension_numbers<[1], [0], [0], [1], [0, 0, 1, 1], [], []>} : vector<2x672xf32>, vector<672x328xf32>, vector<2x328xf32> -> vector<2x328xf32>
    %c0_512 = arith.constant 0 : index
    %c0_513 = arith.constant 0 : index
    %922 = vector.load %arg7[%c0_512, %c0_513] : memref<1x328xf32, #tpu.memory_space<vmem>>, vector<1x328xf32>
    %923 = vector.broadcast %922 : vector<1x328xf32> to vector<2x328xf32>
    %924 = arith.addf %921, %923 : vector<2x328xf32>
    %cst_514 = arith.constant 0.000000e+00 : f32
    %925 = vector.broadcast %cst_514 : f32 to vector<2x328xf32>
    %926 = arith.cmpf ogt, %924, %925 : vector<2x328xf32>
    %cst_515 = arith.constant 0.000000e+00 : f32
    %927 = vector.broadcast %cst_515 : f32 to vector<2x328xf32>
    %928 = arith.minimumf %924, %927 : vector<2x328xf32>
    %929 = math.exp %928 : vector<2x328xf32>
    %cst_516 = arith.constant 1.000000e+00 : f32
    %930 = vector.broadcast %cst_516 : f32 to vector<2x328xf32>
    %931 = arith.subf %929, %930 : vector<2x328xf32>
    %932 = arith.select %926, %924, %931 : vector<2x328xi1>, vector<2x328xf32>
    %c0_517 = arith.constant 0 : index
    %c0_518 = arith.constant 0 : index
    %933 = vector.load %arg8[%c0_517, %c0_518] : memref<328x40xf32, #tpu.memory_space<vmem>>, vector<328x40xf32>
    %cst_519 = arith.constant dense<0.000000e+00> : vector<2x40xf32>
    %934 = tpu.matmul %932, %933, %cst_519 {dimension_numbers = #tpu.dot_dimension_numbers<[1], [0], [0], [1], [0, 0, 1, 1], [], []>} : vector<2x328xf32>, vector<328x40xf32>, vector<2x40xf32> -> vector<2x40xf32>
    %c0_520 = arith.constant 0 : index
    %c0_521 = arith.constant 0 : index
    %935 = vector.load %arg9[%c0_520, %c0_521] : memref<1x40xf32, #tpu.memory_space<vmem>>, vector<1x40xf32>
    %936 = vector.broadcast %935 : vector<1x40xf32> to vector<2x40xf32>
    %937 = arith.addf %934, %936 : vector<2x40xf32>
    %cst_522 = arith.constant 0.000000e+00 : f32
    %938 = vector.broadcast %cst_522 : f32 to vector<2x40xf32>
    %939 = arith.cmpf ogt, %937, %938 : vector<2x40xf32>
    %cst_523 = arith.constant 0.000000e+00 : f32
    %940 = vector.broadcast %cst_523 : f32 to vector<2x40xf32>
    %941 = arith.minimumf %937, %940 : vector<2x40xf32>
    %942 = math.exp %941 : vector<2x40xf32>
    %cst_524 = arith.constant 1.000000e+00 : f32
    %943 = vector.broadcast %cst_524 : f32 to vector<2x40xf32>
    %944 = arith.subf %942, %943 : vector<2x40xf32>
    %945 = arith.select %939, %937, %944 : vector<2x40xi1>, vector<2x40xf32>
    %c0_525 = arith.constant 0 : index
    %c0_526 = arith.constant 0 : index
    %946 = vector.load %arg10[%c0_525, %c0_526] : memref<1x40xf32, #tpu.memory_space<vmem>>, vector<1x40xf32>
    %947 = vector.broadcast %946 : vector<1x40xf32> to vector<2x40xf32>
    %948 = arith.mulf %945, %947 : vector<2x40xf32>
    %cst_527 = arith.constant dense<0.000000e+00> : vector<2xf32>
    %949 = vector.multi_reduction <add>, %948, %cst_527 [1] : vector<2x40xf32> to vector<2xf32>
    %950 = vector.shape_cast %949 : vector<2xf32> to vector<2x1xf32>
    %c0_528 = arith.constant 0 : index
    %c0_529 = arith.constant 0 : index
    %951 = vector.load %arg11[%c0_528, %c0_529] : memref<1x1xf32, #tpu.memory_space<vmem>>, vector<1x1xf32>
    %952 = vector.broadcast %951 : vector<1x1xf32> to vector<2x1xf32>
    %953 = arith.addf %950, %952 : vector<2x1xf32>
    %cst_530 = arith.constant 0.000000e+00 : f32
    %954 = vector.broadcast %cst_530 : f32 to vector<2x1xf32>
    %955 = arith.subf %954, %953 : vector<2x1xf32>
    %956 = math.exp %955 : vector<2x1xf32>
    %cst_531 = arith.constant 1.000000e+00 : f32
    %957 = vector.broadcast %cst_531 : f32 to vector<2x1xf32>
    %958 = arith.addf %957, %956 : vector<2x1xf32>
    %959 = tpu.reciprocal %958 {approx = true} : vector<2x1xf32> -> vector<2x1xf32>
    %c0_532 = arith.constant 0 : index
    %c0_533 = arith.constant 0 : index
    %960 = vector.load %arg12[%c0_532, %c0_533] : memref<2x1xf32, #tpu.memory_space<vmem>>, vector<2x1xf32>
    tpu.vector_store %arg12[%c0_532, %c0_533], %959 {strides = array<i32>} : memref<2x1xf32, #tpu.memory_space<vmem>>, vector<2x1xf32>,
    return
  }
  func.func @transform_0(%arg0: i32) -> (i32, i32, i32) {
    %c0_i32 = arith.constant 0 : i32
    %c0_i32_0 = arith.constant 0 : i32
    %c0_i32_1 = arith.constant 0 : i32
    return %c0_i32, %arg0, %c0_i32_0 : i32, i32, i32
  }
  func.func @transform_1(%arg0: i32) -> (i32, i32, i32, i32) {
    %c0_i32 = arith.constant 0 : i32
    %c0_i32_0 = arith.constant 0 : i32
    %c0_i32_1 = arith.constant 0 : i32
    %c0_i32_2 = arith.constant 0 : i32
    %c0_i32_3 = arith.constant 0 : i32
    return %c0_i32, %c0_i32_0, %c0_i32_1, %c0_i32_2 : i32, i32, i32, i32
  }
  func.func @transform_2(%arg0: i32) -> (i32, i32, i32) {
    %c0_i32 = arith.constant 0 : i32
    %c0_i32_0 = arith.constant 0 : i32
    %c0_i32_1 = arith.constant 0 : i32
    %c0_i32_2 = arith.constant 0 : i32
    return %c0_i32, %c0_i32_0, %c0_i32_1 : i32, i32, i32
  }
  func.func @transform_3(%arg0: i32) -> (i32, i32, i32, i32, i32) {
    %c0_i32 = arith.constant 0 : i32
    %c0_i32_0 = arith.constant 0 : i32
    %c0_i32_1 = arith.constant 0 : i32
    %c0_i32_2 = arith.constant 0 : i32
    %c0_i32_3 = arith.constant 0 : i32
    %c0_i32_4 = arith.constant 0 : i32
    return %c0_i32, %c0_i32_0, %c0_i32_1, %c0_i32_2, %c0_i32_3 : i32, i32, i32, i32, i32
  }
  func.func @transform_4(%arg0: i32) -> (i32, i32, i32) {
    %c0_i32 = arith.constant 0 : i32
    %c0_i32_0 = arith.constant 0 : i32
    %c0_i32_1 = arith.constant 0 : i32
    %c0_i32_2 = arith.constant 0 : i32
    return %c0_i32, %c0_i32_0, %c0_i32_1 : i32, i32, i32
  }
  func.func @transform_5(%arg0: i32) -> (i32, i32) {
    %c0_i32 = arith.constant 0 : i32
    %c0_i32_0 = arith.constant 0 : i32
    %c0_i32_1 = arith.constant 0 : i32
    return %c0_i32, %c0_i32_0 : i32, i32
  }
  func.func @transform_6(%arg0: i32) -> (i32, i32) {
    %c0_i32 = arith.constant 0 : i32
    %c0_i32_0 = arith.constant 0 : i32
    %c0_i32_1 = arith.constant 0 : i32
    return %c0_i32, %c0_i32_0 : i32, i32
  }
  func.func @transform_7(%arg0: i32) -> (i32, i32) {
    %c0_i32 = arith.constant 0 : i32
    %c0_i32_0 = arith.constant 0 : i32
    %c0_i32_1 = arith.constant 0 : i32
    return %c0_i32, %c0_i32_0 : i32, i32
  }
  func.func @transform_8(%arg0: i32) -> (i32, i32) {
    %c0_i32 = arith.constant 0 : i32
    %c0_i32_0 = arith.constant 0 : i32
    %c0_i32_1 = arith.constant 0 : i32
    return %c0_i32, %c0_i32_0 : i32, i32
  }
  func.func @transform_9(%arg0: i32) -> (i32, i32) {
    %c0_i32 = arith.constant 0 : i32
    %c0_i32_0 = arith.constant 0 : i32
    %c0_i32_1 = arith.constant 0 : i32
    return %c0_i32, %c0_i32_0 : i32, i32
  }
  func.func @transform_10(%arg0: i32) -> (i32, i32) {
    %c0_i32 = arith.constant 0 : i32
    %c0_i32_0 = arith.constant 0 : i32
    %c0_i32_1 = arith.constant 0 : i32
    return %c0_i32, %c0_i32_0 : i32, i32
  }
  func.func @transform_11(%arg0: i32) -> (i32, i32) {
    %c0_i32 = arith.constant 0 : i32
    %c0_i32_0 = arith.constant 0 : i32
    return %arg0, %c0_i32 : i32, i32
  }
}

</mosaic_0001>

<llo_original>
// kernel: forward.1
$region0: #{forward.1}
  #allocation0 [shape = 'u32[]', space=smem, size = 0x4, offset = 0x4, fixed_abs, tag = 'smem constant byte address 0x4 - core index']
  #allocation1 [shape = 'u32[144,128]{1,0:T(1,128)}', space=vmem, size = 0x12000, scoped, tag = 'internal scratch']
  #allocation2 [shape = 'f32[1,1]{1,0:T(1,128)S(1)}', space=vmem, size = 0x200, scoped, tag = 'scoped memory for forward.1']
  %s0 = inlined_call_operand.vmem [shape: f32[7,2,16], index: 0, kind: input, shape index: {}]
  %s1 = inlined_call_operand.vmem [shape: f32[7,3,4,1], index: 1, kind: input, shape index: {}]
  %s2 = inlined_call_operand.vmem [shape: f32[7,4,1], index: 2, kind: input, shape index: {}]
  %s3 = inlined_call_operand.vmem [shape: f32[7,3,4,8,1], index: 3, kind: input, shape index: {}]
  %s4 = inlined_call_operand.vmem [shape: f32[7,8,1], index: 4, kind: input, shape index: {}]
  %s5 = inlined_call_operand.vmem [shape: f32[672,328], index: 5, kind: input, shape index: {}]
  %s6 = inlined_call_operand.vmem [shape: f32[1,328], index: 6, kind: input, shape index: {}]
  %s7 = inlined_call_operand.vmem [shape: f32[328,40], index: 7, kind: input, shape index: {}]
  %s8 = inlined_call_operand.vmem [shape: f32[1,40], index: 8, kind: input, shape index: {}]
  %s9 = inlined_call_operand.vmem [shape: f32[1,40], index: 9, kind: input, shape index: {}]
  %s10 = inlined_call_operand.<no memory space> [shape: f32[1,1], index: 10, kind: input, shape index: {}]
  %s11 = inlined_call_operand.vmem [shape: f32[2,1], index: 11, kind: output, shape index: {}]
  %s12 = sld [smem:[#allocation0]]
  $region54: #{forward.1} parent=0
    _
  %s14 = ssub.s32 1, %s12
  %s15 = scalar_select 0, %s14, %s12
  %v16 = vstv %s10
  %17 = vst [vmem:[#allocation2] sm:$0x1] %v16
  // Predicated region
  $region2: #{forward.1} parent=0 // pred_check
    _
  $region3: #{forward.1} parent=0 // pred_check_branch
    %19 = sbr.rel (0) target = $region5
  $region4: #{forward.1} parent=0 // pred_region
    _
  $region5: #{forward.1} parent=0 // pred_fallthru
    _
  // Predicated region
  $region6: #{forward.1} parent=0 // pred_check
    _
  $region7: #{forward.1} parent=0 // pred_check_branch
    %21 = sbr.rel (0) target = $region9
  $region8: #{forward.1} parent=0 // pred_region
    _
  $region9: #{forward.1} parent=0 // pred_fallthru
    _
  // Predicated region
  $region10: #{forward.1} parent=0 // pred_check
    _
  $region11: #{forward.1} parent=0 // pred_check_branch
    %23 = sbr.rel (0) target = $region13
  $region12: #{forward.1} parent=0 // pred_region
    _
  $region13: #{forward.1} parent=0 // pred_fallthru
    _
  // Predicated region
  $region14: #{forward.1} parent=0 // pred_check
    _
  $region15: #{forward.1} parent=0 // pred_check_branch
    %25 = sbr.rel (0) target = $region17
  $region16: #{forward.1} parent=0 // pred_region
    _
  $region17: #{forward.1} parent=0 // pred_fallthru
    _
  // Predicated region
  $region18: #{forward.1} parent=0 // pred_check
    _
  $region19: #{forward.1} parent=0 // pred_check_branch
    %27 = sbr.rel (0) target = $region21
  $region20: #{forward.1} parent=0 // pred_region
    _
  $region21: #{forward.1} parent=0 // pred_fallthru
    _
  // Predicated region
  $region22: #{forward.1} parent=0 // pred_check
    _
  $region23: #{forward.1} parent=0 // pred_check_branch
    %29 = sbr.rel (0) target = $region25
  $region24: #{forward.1} parent=0 // pred_region
    _
  $region25: #{forward.1} parent=0 // pred_fallthru
    _
  // Predicated region
  $region26: #{forward.1} parent=0 // pred_check
    _
  $region27: #{forward.1} parent=0 // pred_check_branch
    %31 = sbr.rel (0) target = $region29
  $region28: #{forward.1} parent=0 // pred_region
    _
  $region29: #{forward.1} parent=0 // pred_fallthru
    _
  // Predicated region
  $region30: #{forward.1} parent=0 // pred_check
    _
  $region31: #{forward.1} parent=0 // pred_check_branch
    %33 = sbr.rel (0) target = $region33
  $region32: #{forward.1} parent=0 // pred_region
    _
  $region33: #{forward.1} parent=0 // pred_fallthru
    _
  // Predicated region
  $region34: #{forward.1} parent=0 // pred_check
    _
  $region35: #{forward.1} parent=0 // pred_check_branch
    %35 = sbr.rel (0) target = $region37
  $region36: #{forward.1} parent=0 // pred_region
    _
  $region37: #{forward.1} parent=0 // pred_fallthru
    _
  // Predicated region
  $region38: #{forward.1} parent=0 // pred_check
    _
  $region39: #{forward.1} parent=0 // pred_check_branch
    %37 = sbr.rel (0) target = $region41
  $region40: #{forward.1} parent=0 // pred_region
    _
  $region41: #{forward.1} parent=0 // pred_fallthru
    _
  // Predicated region
  $region42: #{forward.1} parent=0 // pred_check
    _
  $region43: #{forward.1} parent=0 // pred_check_branch
    %39 = sbr.rel (0) target = $region45
  $region44: #{forward.1} parent=0 // pred_region
    _
  $region45: #{forward.1} parent=0 // pred_fallthru
    _
  %v40 = vld [vmem:[%s0] sm:$0x3]
  %v43 = vunpack.c.l.s4 1966171168
  %v44 = vunpack.c.0.s8 %v43
  %v45 = vlaneseq
  %v46 = vshrl.u32 %v45, 7
  %v47 = vsub.s32 %v44, %v46
  %v48 = vrot.slane %v40, %v47
  %v49 = vcombine.high %v48, %v48
  %v51 = vunpack.c.l.s4 1966171168
  %v52 = vunpack.c.0.s8 %v51
  %v53 = vlaneseq
  %v54 = vshrl.u32 %v53, 7
  %v55 = vsub.s32 %v52, %v54
  %v56 = vrot.slane %v48, %v55
  %v58 = vunpack.c.l.s4 1966171168
  %v59 = vunpack.c.0.s8 %v58
  %v60 = vlaneseq
  %v61 = vshrl.u32 %v60, 7
  %v62 = vsub.s32 %v59, %v61
  %v63 = vrot.slane %v49, %v62
  %v64 = vld [vmem:[%s1] sm:$0xf]
  %v65 = vlaneseq
  %v66 = vshrl.u32 %v65, 7
  %v67 = vsub.s32 0, %v66
  %v68 = vrot.slane %v56, %v67
  %v69 = vlaneseq
  %v70 = vshrl.u32 %v69, 7
  %v71 = vsub.s32 0, %v70
  %v72 = vrot.slane %v63, %v71
  %76 = vset.pattern.permute.xlu0 0
  %77 = vperm.xlu0 %76, %v64
  %v78 = vpop.permute.xlu0 %77
  %v80 = vmul.f32 %v68, %v78
  %v81 = vmul.f32 %v72, %v78
  %s82 = scalar_lea.vmem %s1, 4
  %v83 = vld [vmem:[%s82] sm:$0xf]
  %85 = vset.pattern.permute.xlu0 0
  %86 = vperm.xlu0 %85, %v83
  %v87 = vpop.permute.xlu0 %86
  %v89 = vmul.f32 %v68, %v87
  %v90 = vmul.f32 %v72, %v87
  %93 = vrot.lane.b32.xlu0 %v89, 127
  %v94 = vpop.permute.xlu0 %93
  %95 = vrot.lane.b32.xlu0 %v90, 127
  %v96 = vpop.permute.xlu0 %95
  %v99 = vadd.f32 %v80, %v94
  %v100 = vadd.f32 %v81, %v96
  %s101 = scalar_lea.vmem %s1, 8
  %v102 = vld [vmem:[%s101] sm:$0xf]
  %104 = vset.pattern.permute.xlu0 0
  %105 = vperm.xlu0 %104, %v102
  %v106 = vpop.permute.xlu0 %105
  %v108 = vmul.f32 %v68, %v106
  %v109 = vmul.f32 %v72, %v106
  %112 = vrot.lane.b32.xlu0 %v108, 126
  %v113 = vpop.permute.xlu0 %112
  %114 = vrot.lane.b32.xlu0 %v109, 126
  %v115 = vpop.permute.xlu0 %114
  %v118 = vadd.f32 %v99, %v113
  %v119 = vadd.f32 %v100, %v115
  %v120 = vld [vmem:[%s2] sm:$0xf]
  %122 = vset.pattern.permute.xlu0 0
  %123 = vperm.xlu0 %122, %v120
  %v124 = vpop.permute.xlu0 %123
  %v126 = vadd.f32 %v118, %v124
  %v127 = vadd.f32 %v119, %v124
  %vm128 = vcmp.gt.f32.partialorder %v126, 0.0
  %vm129 = vcmp.gt.f32.partialorder %v127, 0.0
  %v130 = vmin.f32 %v126, 0.0
  %v131 = vmin.f32 %v127, 0.0
  %v132 = vmul.f32 %v130, 1.442695
  %v133 = vpow.pop %v132
  %v134 = vmul.f32 %v131, 1.442695
  %v135 = vpow.pop %v134
  %v136 = vsub.f32 %v133, 1.0
  %v137 = vsub.f32 %v135, 1.0
  %v138 = vsel %vm128, %v126, %v136
  %v139 = vsel %vm129, %v127, %v137
  %v140 = vld [vmem:[%s3] sm:$0xff]
  %v141 = vlaneseq
  %v142 = vshrl.u32 %v141, 7
  %v143 = vsub.s32 0, %v142
  %v144 = vrot.slane %v138, %v143
  %v145 = vlaneseq
  %v146 = vshrl.u32 %v145, 7
  %v147 = vsub.s32 0, %v146
  %v148 = vrot.slane %v139, %v147
  %150 = vset.pattern.permute.xlu0 0
  %151 = vperm.xlu0 %150, %v140
  %v152 = vpop.permute.xlu0 %151
  %v154 = vmul.f32 %v144, %v152
  %v155 = vmul.f32 %v148, %v152
  %s156 = scalar_lea.vmem %s3, 8
  %v157 = vld [vmem:[%s156] sm:$0xff]
  %v158 = vlaneseq
  %v159 = vshrl.u32 %v158, 7
  %v160 = vsub.s32 1, %v159
  %v161 = vrot.slane %v138, %v160
  %v162 = vlaneseq
  %v163 = vshrl.u32 %v162, 7
  %v164 = vsub.s32 1, %v163
  %v165 = vrot.slane %v139, %v164
  %167 = vset.pattern.permute.xlu0 0
  %168 = vperm.xlu0 %167, %v157
  %v169 = vpop.permute.xlu0 %168
  %v171 = vmul.f32 %v161, %v169
  %v172 = vmul.f32 %v165, %v169
  %v173 = vadd.f32 %v154, %v171
  %v174 = vadd.f32 %v155, %v172
  %s175 = scalar_lea.vmem %s3, 16
  %v176 = vld [vmem:[%s175] sm:$0xff]
  %v177 = vlaneseq
  %v178 = vshrl.u32 %v177, 7
  %v179 = vsub.s32 2, %v178
  %v180 = vrot.slane %v138, %v179
  %v181 = vlaneseq
  %v182 = vshrl.u32 %v181, 7
  %v183 = vsub.s32 2, %v182
  %v184 = vrot.slane %v139, %v183
  %186 = vset.pattern.permute.xlu0 0
  %187 = vperm.xlu0 %186, %v176
  %v188 = vpop.permute.xlu0 %187
  %v190 = vmul.f32 %v180, %v188
  %v191 = vmul.f32 %v184, %v188
  %v192 = vadd.f32 %v173, %v190
  %v193 = vadd.f32 %v174, %v191
  %s194 = scalar_lea.vmem %s3, 24
  %v195 = vld [vmem:[%s194] sm:$0xff]
  %v196 = vlaneseq
  %v197 = vshrl.u32 %v196, 7
  %v198 = vsub.s32 3, %v197
  %v199 = vrot.slane %v138, %v198
  %v200 = vlaneseq
  %v201 = vshrl.u32 %v200, 7
  %v202 = vsub.s32 3, %v201
  %v203 = vrot.slane %v139, %v202
  %205 = vset.pattern.permute.xlu0 0
  %206 = vperm.xlu0 %205, %v195
  %v207 = vpop.permute.xlu0 %206
  %v209 = vmul.f32 %v199, %v207
  %v210 = vmul.f32 %v203, %v207
  %v211 = vadd.f32 %v192, %v209
  %v212 = vadd.f32 %v193, %v210
  %s213 = scalar_lea.vmem %s3, 32
  %v214 = vld [vmem:[%s213] sm:$0xff]
  %216 = vset.pattern.permute.xlu0 0
  %217 = vperm.xlu0 %216, %v214
  %v218 = vpop.permute.xlu0 %217
  %v220 = vmul.f32 %v144, %v218
  %v221 = vmul.f32 %v148, %v218
  %224 = vrot.lane.b32.xlu0 %v220, 127
  %v225 = vpop.permute.xlu0 %224
  %226 = vrot.lane.b32.xlu0 %v221, 127
  %v227 = vpop.permute.xlu0 %226
  %v230 = vadd.f32 %v211, %v225
  %v231 = vadd.f32 %v212, %v227
  %s232 = scalar_lea.vmem %s3, 40
  %v233 = vld [vmem:[%s232] sm:$0xff]
  %235 = vset.pattern.permute.xlu0 0
  %236 = vperm.xlu0 %235, %v233
  %v237 = vpop.permute.xlu0 %236
  %v239 = vmul.f32 %v161, %v237
  %v240 = vmul.f32 %v165, %v237
  %243 = vrot.lane.b32.xlu0 %v239, 127
  %v244 = vpop.permute.xlu0 %243
  %245 = vrot.lane.b32.xlu0 %v240, 127
  %v246 = vpop.permute.xlu0 %245
  %v249 = vadd.f32 %v230, %v244
  %v250 = vadd.f32 %v231, %v246
  %s251 = scalar_lea.vmem %s3, 48
  %v252 = vld [vmem:[%s251] sm:$0xff]
  %254 = vset.pattern.permute.xlu0 0
  %255 = vperm.xlu0 %254, %v252
  %v256 = vpop.permute.xlu0 %255
  %v258 = vmul.f32 %v180, %v256
  %v259 = vmul.f32 %v184, %v256
  %262 = vrot.lane.b32.xlu0 %v258, 127
  %v263 = vpop.permute.xlu0 %262
  %264 = vrot.lane.b32.xlu0 %v259, 127
  %v265 = vpop.permute.xlu0 %264
  %v268 = vadd.f32 %v249, %v263
  %v269 = vadd.f32 %v250, %v265
  %s270 = scalar_lea.vmem %s3, 56
  %v271 = vld [vmem:[%s270] sm:$0xff]
  %273 = vset.pattern.permute.xlu0 0
  %274 = vperm.xlu0 %273, %v271
  %v275 = vpop.permute.xlu0 %274
  %v277 = vmul.f32 %v199, %v275
  %v278 = vmul.f32 %v203, %v275
  %281 = vrot.lane.b32.xlu0 %v277, 127
  %v282 = vpop.permute.xlu0 %281
  %283 = vrot.lane.b32.xlu0 %v278, 127
  %v284 = vpop.permute.xlu0 %283
  %v287 = vadd.f32 %v268, %v282
  %v288 = vadd.f32 %v269, %v284
  %v289 = vld [vmem:[%s4] sm:$0xff]
  %291 = vset.pattern.permute.xlu0 0
  %292 = vperm.xlu0 %291, %v289
  %v293 = vpop.permute.xlu0 %292
  %v295 = vadd.f32 %v287, %v293
  %v296 = vadd.f32 %v288, %v293
  %vm297 = vcmp.gt.f32.partialorder %v295, 0.0
  %vm298 = vcmp.gt.f32.partialorder %v296, 0.0
  %v299 = vmin.f32 %v295, 0.0
  %v300 = vmin.f32 %v296, 0.0
  %v301 = vmul.f32 %v299, 1.442695
  %v302 = vpow.pop %v301
  %v303 = vmul.f32 %v300, 1.442695
  %v304 = vpow.pop %v303
  %v305 = vsub.f32 %v302, 1.0
  %v306 = vsub.f32 %v304, 1.0
  %v307 = vsel %vm297, %v295, %v305
  %v308 = vsel %vm298, %v296, %v306
  %311 = vrot.lane.b32.xlu0 %v307, 127
  %v312 = vpop.permute.xlu0 %311
  %313 = vrot.lane.b32.xlu0 %v308, 127
  %v314 = vpop.permute.xlu0 %313
  %v317 = vmax.f32 %v307, %v312
  %v318 = vmax.f32 %v308, %v314
  %s319 = scalar_lea.vmem %s0, 2
  %v320 = vld [vmem:[%s319] sm:$0x3]
  %v323 = vunpack.c.l.s4 1966171168
  %v324 = vunpack.c.0.s8 %v323
  %v325 = vlaneseq
  %v326 = vshrl.u32 %v325, 7
  %v327 = vsub.s32 %v324, %v326
  %v328 = vrot.slane %v320, %v327
  %v329 = vcombine.high %v328, %v328
  %v331 = vunpack.c.l.s4 1966171168
  %v332 = vunpack.c.0.s8 %v331
  %v333 = vlaneseq
  %v334 = vshrl.u32 %v333, 7
  %v335 = vsub.s32 %v332, %v334
  %v336 = vrot.slane %v328, %v335
  %v338 = vunpack.c.l.s4 1966171168
  %v339 = vunpack.c.0.s8 %v338
  %v340 = vlaneseq
  %v341 = vshrl.u32 %v340, 7
  %v342 = vsub.s32 %v339, %v341
  %v343 = vrot.slane %v329, %v342
  %s344 = scalar_lea.vmem %s1, 12
  %v345 = vld [vmem:[%s344] sm:$0xf]
  %v346 = vlaneseq
  %v347 = vshrl.u32 %v346, 7
  %v348 = vsub.s32 0, %v347
  %v349 = vrot.slane %v336, %v348
  %v350 = vlaneseq
  %v351 = vshrl.u32 %v350, 7
  %v352 = vsub.s32 0, %v351
  %v353 = vrot.slane %v343, %v352
  %357 = vset.pattern.permute.xlu0 0
  %358 = vperm.xlu0 %357, %v345
  %v359 = vpop.permute.xlu0 %358
  %v361 = vmul.f32 %v349, %v359
  %v362 = vmul.f32 %v353, %v359
  %s363 = scalar_lea.vmem %s1, 16
  %v364 = vld [vmem:[%s363] sm:$0xf]
  %366 = vset.pattern.permute.xlu0 0
  %367 = vperm.xlu0 %366, %v364
  %v368 = vpop.permute.xlu0 %367
  %v370 = vmul.f32 %v349, %v368
  %v371 = vmul.f32 %v353, %v368
  %374 = vrot.lane.b32.xlu0 %v370, 127
  %v375 = vpop.permute.xlu0 %374
  %376 = vrot.lane.b32.xlu0 %v371, 127
  %v377 = vpop.permute.xlu0 %376
  %v380 = vadd.f32 %v361, %v375
  %v381 = vadd.f32 %v362, %v377
  %s382 = scalar_lea.vmem %s2, 4
  %v383 = vld [vmem:[%s382] sm:$0xf]
  %385 = vset.pattern.permute.xlu0 0
  %386 = vperm.xlu0 %385, %v383
  %v387 = vpop.permute.xlu0 %386
  %v389 = vadd.f32 %v380, %v387
  %v390 = vadd.f32 %v381, %v387
  %vm391 = vcmp.gt.f32.partialorder %v389, 0.0
  %vm392 = vcmp.gt.f32.partialorder %v390, 0.0
  %v393 = vmin.f32 %v389, 0.0
  %v394 = vmin.f32 %v390, 0.0
  %v395 = vmul.f32 %v393, 1.442695
  %v396 = vpow.pop %v395
  %v397 = vmul.f32 %v394, 1.442695
  %v398 = vpow.pop %v397
  %v399 = vsub.f32 %v396, 1.0
  %v400 = vsub.f32 %v398, 1.0
  %v401 = vsel %vm391, %v389, %v399
  %v402 = vsel %vm392, %v390, %v400
  %s403 = scalar_lea.vmem %s3, 96
  %v404 = vld [vmem:[%s403] sm:$0xff]
  %v405 = vlaneseq
  %v406 = vshrl.u32 %v405, 7
  %v407 = vsub.s32 0, %v406
  %v408 = vrot.slane %v401, %v407
  %v409 = vlaneseq
  %v410 = vshrl.u32 %v409, 7
  %v411 = vsub.s32 0, %v410
  %v412 = vrot.slane %v402, %v411
  %414 = vset.pattern.permute.xlu0 0
  %415 = vperm.xlu0 %414, %v404
  %v416 = vpop.permute.xlu0 %415
  %v418 = vmul.f32 %v408, %v416
  %v419 = vmul.f32 %v412, %v416
  %s420 = scalar_lea.vmem %s3, 104
  %v421 = vld [vmem:[%s420] sm:$0xff]
  %v422 = vlaneseq
  %v423 = vshrl.u32 %v422, 7
  %v424 = vsub.s32 1, %v423
  %v425 = vrot.slane %v401, %v424
  %v426 = vlaneseq
  %v427 = vshrl.u32 %v426, 7
  %v428 = vsub.s32 1, %v427
  %v429 = vrot.slane %v402, %v428
  %431 = vset.pattern.permute.xlu0 0
  %432 = vperm.xlu0 %431, %v421
  %v433 = vpop.permute.xlu0 %432
  %v435 = vmul.f32 %v425, %v433
  %v436 = vmul.f32 %v429, %v433
  %v437 = vadd.f32 %v418, %v435
  %v438 = vadd.f32 %v419, %v436
  %s439 = scalar_lea.vmem %s3, 112
  %v440 = vld [vmem:[%s439] sm:$0xff]
  %v441 = vlaneseq
  %v442 = vshrl.u32 %v441, 7
  %v443 = vsub.s32 2, %v442
  %v444 = vrot.slane %v401, %v443
  %v445 = vlaneseq
  %v446 = vshrl.u32 %v445, 7
  %v447 = vsub.s32 2, %v446
  %v448 = vrot.slane %v402, %v447
  %450 = vset.pattern.permute.xlu0 0
  %451 = vperm.xlu0 %450, %v440
  %v452 = vpop.permute.xlu0 %451
  %v454 = vmul.f32 %v444, %v452
  %v455 = vmul.f32 %v448, %v452
  %v456 = vadd.f32 %v437, %v454
  %v457 = vadd.f32 %v438, %v455
  %s458 = scalar_lea.vmem %s3, 120
  %v459 = vld [vmem:[%s458] sm:$0xff]
  %v460 = vlaneseq
  %v461 = vshrl.u32 %v460, 7
  %v462 = vsub.s32 3, %v461
  %v463 = vrot.slane %v401, %v462
  %v464 = vlaneseq
  %v465 = vshrl.u32 %v464, 7
  %v466 = vsub.s32 3, %v465
  %v467 = vrot.slane %v402, %v466
  %469 = vset.pattern.permute.xlu0 0
  %470 = vperm.xlu0 %469, %v459
  %v471 = vpop.permute.xlu0 %470
  %v473 = vmul.f32 %v463, %v471
  %v474 = vmul.f32 %v467, %v471
  %v475 = vadd.f32 %v456, %v473
  %v476 = vadd.f32 %v457, %v474
  %s477 = scalar_lea.vmem %s3, 128
  %v478 = vld [vmem:[%s477] sm:$0xff]
  %480 = vset.pattern.permute.xlu0 0
  %481 = vperm.xlu0 %480, %v478
  %v482 = vpop.permute.xlu0 %481
  %v484 = vmul.f32 %v408, %v482
  %v485 = vmul.f32 %v412, %v482
  %488 = vrot.lane.b32.xlu0 %v484, 127
  %v489 = vpop.permute.xlu0 %488
  %490 = vrot.lane.b32.xlu0 %v485, 127
  %v491 = vpop.permute.xlu0 %490
  %v494 = vadd.f32 %v475, %v489
  %v495 = vadd.f32 %v476, %v491
  %s496 = scalar_lea.vmem %s3, 136
  %v497 = vld [vmem:[%s496] sm:$0xff]
  %499 = vset.pattern.permute.xlu0 0
  %500 = vperm.xlu0 %499, %v497
  %v501 = vpop.permute.xlu0 %500
  %v503 = vmul.f32 %v425, %v501
  %v504 = vmul.f32 %v429, %v501
  %507 = vrot.lane.b32.xlu0 %v503, 127
  %v508 = vpop.permute.xlu0 %507
  %509 = vrot.lane.b32.xlu0 %v504, 127
  %v510 = vpop.permute.xlu0 %509
  %v513 = vadd.f32 %v494, %v508
  %v514 = vadd.f32 %v495, %v510
  %s515 = scalar_lea.vmem %s3, 144
  %v516 = vld [vmem:[%s515] sm:$0xff]
  %518 = vset.pattern.permute.xlu0 0
  %519 = vperm.xlu0 %518, %v516
  %v520 = vpop.permute.xlu0 %519
  %v522 = vmul.f32 %v444, %v520
  %v523 = vmul.f32 %v448, %v520
  %526 = vrot.lane.b32.xlu0 %v522, 127
  %v527 = vpop.permute.xlu0 %526
  %528 = vrot.lane.b32.xlu0 %v523, 127
  %v529 = vpop.permute.xlu0 %528
  %v532 = vadd.f32 %v513, %v527
  %v533 = vadd.f32 %v514, %v529
  %s534 = scalar_lea.vmem %s3, 152
  %v535 = vld [vmem:[%s534] sm:$0xff]
  %537 = vset.pattern.permute.xlu0 0
  %538 = vperm.xlu0 %537, %v535
  %v539 = vpop.permute.xlu0 %538
  %v541 = vmul.f32 %v463, %v539
  %v542 = vmul.f32 %v467, %v539
  %545 = vrot.lane.b32.xlu0 %v541, 127
  %v546 = vpop.permute.xlu0 %545
  %547 = vrot.lane.b32.xlu0 %v542, 127
  %v548 = vpop.permute.xlu0 %547
  %v551 = vadd.f32 %v532, %v546
  %v552 = vadd.f32 %v533, %v548
  %s553 = scalar_lea.vmem %s3, 160
  %v554 = vld [vmem:[%s553] sm:$0xff]
  %556 = vset.pattern.permute.xlu0 0
  %557 = vperm.xlu0 %556, %v554
  %v558 = vpop.permute.xlu0 %557
  %v560 = vmul.f32 %v408, %v558
  %v561 = vmul.f32 %v412, %v558
  %564 = vrot.lane.b32.xlu0 %v560, 126
  %v565 = vpop.permute.xlu0 %564
  %566 = vrot.lane.b32.xlu0 %v561, 126
  %v567 = vpop.permute.xlu0 %566
  %v570 = vadd.f32 %v551, %v565
  %v571 = vadd.f32 %v552, %v567
  %s572 = scalar_lea.vmem %s3, 168
  %v573 = vld [vmem:[%s572] sm:$0xff]
  %575 = vset.pattern.permute.xlu0 0
  %576 = vperm.xlu0 %575, %v573
  %v577 = vpop.permute.xlu0 %576
  %v579 = vmul.f32 %v425, %v577
  %v580 = vmul.f32 %v429, %v577
  %583 = vrot.lane.b32.xlu0 %v579, 126
  %v584 = vpop.permute.xlu0 %583
  %585 = vrot.lane.b32.xlu0 %v580, 126
  %v586 = vpop.permute.xlu0 %585
  %v589 = vadd.f32 %v570, %v584
  %v590 = vadd.f32 %v571, %v586
  %s591 = scalar_lea.vmem %s3, 176
  %v592 = vld [vmem:[%s591] sm:$0xff]
  %594 = vset.pattern.permute.xlu0 0
  %595 = vperm.xlu0 %594, %v592
  %v596 = vpop.permute.xlu0 %595
  %v598 = vmul.f32 %v444, %v596
  %v599 = vmul.f32 %v448, %v596
  %602 = vrot.lane.b32.xlu0 %v598, 126
  %v603 = vpop.permute.xlu0 %602
  %604 = vrot.lane.b32.xlu0 %v599, 126
  %v605 = vpop.permute.xlu0 %604
  %v608 = vadd.f32 %v589, %v603
  %v609 = vadd.f32 %v590, %v605
  %s610 = scalar_lea.vmem %s3, 184
  %v611 = vld [vmem:[%s610] sm:$0xff]
  %613 = vset.pattern.permute.xlu0 0
  %614 = vperm.xlu0 %613, %v611
  %v615 = vpop.permute.xlu0 %614
  %v617 = vmul.f32 %v463, %v615
  %v618 = vmul.f32 %v467, %v615
  %621 = vrot.lane.b32.xlu0 %v617, 126
  %v622 = vpop.permute.xlu0 %621
  %623 = vrot.lane.b32.xlu0 %v618, 126
  %v624 = vpop.permute.xlu0 %623
  %v627 = vadd.f32 %v608, %v622
  %v628 = vadd.f32 %v609, %v624
  %s629 = scalar_lea.vmem %s4, 8
  %v630 = vld [vmem:[%s629] sm:$0xff]
  %632 = vset.pattern.permute.xlu0 0
  %633 = vperm.xlu0 %632, %v630
  %v634 = vpop.permute.xlu0 %633
  %v636 = vadd.f32 %v627, %v634
  %v637 = vadd.f32 %v628, %v634
  %vm638 = vcmp.gt.f32.partialorder %v636, 0.0
  %vm639 = vcmp.gt.f32.partialorder %v637, 0.0
  %v640 = vmin.f32 %v636, 0.0
  %v641 = vmin.f32 %v637, 0.0
  %v642 = vmul.f32 %v640, 1.442695
  %v643 = vpow.pop %v642
  %v644 = vmul.f32 %v641, 1.442695
  %v645 = vpow.pop %v644
  %v646 = vsub.f32 %v643, 1.0
  %v647 = vsub.f32 %v645, 1.0
  %v648 = vsel %vm638, %v636, %v646
  %v649 = vsel %vm639, %v637, %v647
  %652 = vrot.lane.b32.xlu0 %v648, 127
  %v653 = vpop.permute.xlu0 %652
  %654 = vrot.lane.b32.xlu0 %v649, 127
  %v655 = vpop.permute.xlu0 %654
  %v658 = vmax.f32 %v648, %v653
  %v659 = vmax.f32 %v649, %v655
  %s660 = scalar_lea.vmem %s0, 4
  %v661 = vld [vmem:[%s660] sm:$0x3]
  %v664 = vunpack.c.l.s4 1966171168
  %v665 = vunpack.c.0.s8 %v664
  %v666 = vlaneseq
  %v667 = vshrl.u32 %v666, 7
  %v668 = vsub.s32 %v665, %v667
  %v669 = vrot.slane %v661, %v668
  %v670 = vcombine.high %v669, %v669
  %v672 = vunpack.c.l.s4 1966171168
  %v673 = vunpack.c.0.s8 %v672
  %v674 = vlaneseq
  %v675 = vshrl.u32 %v674, 7
  %v676 = vsub.s32 %v673, %v675
  %v677 = vrot.slane %v669, %v676
  %v679 = vunpack.c.l.s4 1966171168
  %v680 = vunpack.c.0.s8 %v679
  %v681 = vlaneseq
  %v682 = vshrl.u32 %v681, 7
  %v683 = vsub.s32 %v680, %v682
  %v684 = vrot.slane %v670, %v683
  %s685 = scalar_lea.vmem %s1, 24
  %v686 = vld [vmem:[%s685] sm:$0xf]
  %v687 = vlaneseq
  %v688 = vshrl.u32 %v687, 7
  %v689 = vsub.s32 0, %v688
  %v690 = vrot.slane %v677, %v689
  %v691 = vlaneseq
  %v692 = vshrl.u32 %v691, 7
  %v693 = vsub.s32 0, %v692
  %v694 = vrot.slane %v684, %v693
  %698 = vset.pattern.permute.xlu0 0
  %699 = vperm.xlu0 %698, %v686
  %v700 = vpop.permute.xlu0 %699
  %v702 = vmul.f32 %v690, %v700
  %v703 = vmul.f32 %v694, %v700
  %s704 = scalar_lea.vmem %s1, 28
  %v705 = vld [vmem:[%s704] sm:$0xf]
  %707 = vset.pattern.permute.xlu0 0
  %708 = vperm.xlu0 %707, %v705
  %v709 = vpop.permute.xlu0 %708
  %v711 = vmul.f32 %v690, %v709
  %v712 = vmul.f32 %v694, %v709
  %715 = vrot.lane.b32.xlu0 %v711, 127
  %v716 = vpop.permute.xlu0 %715
  %717 = vrot.lane.b32.xlu0 %v712, 127
  %v718 = vpop.permute.xlu0 %717
  %v721 = vadd.f32 %v702, %v716
  %v722 = vadd.f32 %v703, %v718
  %s723 = scalar_lea.vmem %s1, 32
  %v724 = vld [vmem:[%s723] sm:$0xf]
  %726 = vset.pattern.permute.xlu0 0
  %727 = vperm.xlu0 %726, %v724
  %v728 = vpop.permute.xlu0 %727
  %v730 = vmul.f32 %v690, %v728
  %v731 = vmul.f32 %v694, %v728
  %734 = vrot.lane.b32.xlu0 %v730, 126
  %v735 = vpop.permute.xlu0 %734
  %736 = vrot.lane.b32.xlu0 %v731, 126
  %v737 = vpop.permute.xlu0 %736
  %v740 = vadd.f32 %v721, %v735
  %v741 = vadd.f32 %v722, %v737
  %s742 = scalar_lea.vmem %s2, 8
  %v743 = vld [vmem:[%s742] sm:$0xf]
  %745 = vset.pattern.permute.xlu0 0
  %746 = vperm.xlu0 %745, %v743
  %v747 = vpop.permute.xlu0 %746
  %v749 = vadd.f32 %v740, %v747
  %v750 = vadd.f32 %v741, %v747
  %vm751 = vcmp.gt.f32.partialorder %v749, 0.0
  %vm752 = vcmp.gt.f32.partialorder %v750, 0.0
  %v753 = vmin.f32 %v749, 0.0
  %v754 = vmin.f32 %v750, 0.0
  %v755 = vmul.f32 %v753, 1.442695
  %v756 = vpow.pop %v755
  %v757 = vmul.f32 %v754, 1.442695
  %v758 = vpow.pop %v757
  %v759 = vsub.f32 %v756, 1.0
  %v760 = vsub.f32 %v758, 1.0
  %v761 = vsel %vm751, %v749, %v759
  %v762 = vsel %vm752, %v750, %v760
  %s763 = scalar_lea.vmem %s3, 192
  %v764 = vld [vmem:[%s763] sm:$0xff]
  %v765 = vlaneseq
  %v766 = vshrl.u32 %v765, 7
  %v767 = vsub.s32 0, %v766
  %v768 = vrot.slane %v761, %v767
  %v769 = vlaneseq
  %v770 = vshrl.u32 %v769, 7
  %v771 = vsub.s32 0, %v770
  %v772 = vrot.slane %v762, %v771
  %774 = vset.pattern.permute.xlu0 0
  %775 = vperm.xlu0 %774, %v764
  %v776 = vpop.permute.xlu0 %775
  %v778 = vmul.f32 %v768, %v776
  %v779 = vmul.f32 %v772, %v776
  %s780 = scalar_lea.vmem %s3, 200
  %v781 = vld [vmem:[%s780] sm:$0xff]
  %v782 = vlaneseq
  %v783 = vshrl.u32 %v782, 7
  %v784 = vsub.s32 1, %v783
  %v785 = vrot.slane %v761, %v784
  %v786 = vlaneseq
  %v787 = vshrl.u32 %v786, 7
  %v788 = vsub.s32 1, %v787
  %v789 = vrot.slane %v762, %v788
  %791 = vset.pattern.permute.xlu0 0
  %792 = vperm.xlu0 %791, %v781
  %v793 = vpop.permute.xlu0 %792
  %v795 = vmul.f32 %v785, %v793
  %v796 = vmul.f32 %v789, %v793
  %v797 = vadd.f32 %v778, %v795
  %v798 = vadd.f32 %v779, %v796
  %s799 = scalar_lea.vmem %s3, 208
  %v800 = vld [vmem:[%s799] sm:$0xff]
  %v801 = vlaneseq
  %v802 = vshrl.u32 %v801, 7
  %v803 = vsub.s32 2, %v802
  %v804 = vrot.slane %v761, %v803
  %v805 = vlaneseq
  %v806 = vshrl.u32 %v805, 7
  %v807 = vsub.s32 2, %v806
  %v808 = vrot.slane %v762, %v807
  %810 = vset.pattern.permute.xlu0 0
  %811 = vperm.xlu0 %810, %v800
  %v812 = vpop.permute.xlu0 %811
  %v814 = vmul.f32 %v804, %v812
  %v815 = vmul.f32 %v808, %v812
  %v816 = vadd.f32 %v797, %v814
  %v817 = vadd.f32 %v798, %v815
  %s818 = scalar_lea.vmem %s3, 216
  %v819 = vld [vmem:[%s818] sm:$0xff]
  %v820 = vlaneseq
  %v821 = vshrl.u32 %v820, 7
  %v822 = vsub.s32 3, %v821
  %v823 = vrot.slane %v761, %v822
  %v824 = vlaneseq
  %v825 = vshrl.u32 %v824, 7
  %v826 = vsub.s32 3, %v825
  %v827 = vrot.slane %v762, %v826
  %829 = vset.pattern.permute.xlu0 0
  %830 = vperm.xlu0 %829, %v819
  %v831 = vpop.permute.xlu0 %830
  %v833 = vmul.f32 %v823, %v831
  %v834 = vmul.f32 %v827, %v831
  %v835 = vadd.f32 %v816, %v833
  %v836 = vadd.f32 %v817, %v834
  %s837 = scalar_lea.vmem %s3, 224
  %v838 = vld [vmem:[%s837] sm:$0xff]
  %840 = vset.pattern.permute.xlu0 0
  %841 = vperm.xlu0 %840, %v838
  %v842 = vpop.permute.xlu0 %841
  %v844 = vmul.f32 %v768, %v842
  %v845 = vmul.f32 %v772, %v842
  %848 = vrot.lane.b32.xlu0 %v844, 127
  %v849 = vpop.permute.xlu0 %848
  %850 = vrot.lane.b32.xlu0 %v845, 127
  %v851 = vpop.permute.xlu0 %850
  %v854 = vadd.f32 %v835, %v849
  %v855 = vadd.f32 %v836, %v851
  %s856 = scalar_lea.vmem %s3, 232
  %v857 = vld [vmem:[%s856] sm:$0xff]
  %859 = vset.pattern.permute.xlu0 0
  %860 = vperm.xlu0 %859, %v857
  %v861 = vpop.permute.xlu0 %860
  %v863 = vmul.f32 %v785, %v861
  %v864 = vmul.f32 %v789, %v861
  %867 = vrot.lane.b32.xlu0 %v863, 127
  %v868 = vpop.permute.xlu0 %867
  %869 = vrot.lane.b32.xlu0 %v864, 127
  %v870 = vpop.permute.xlu0 %869
  %v873 = vadd.f32 %v854, %v868
  %v874 = vadd.f32 %v855, %v870
  %s875 = scalar_lea.vmem %s3, 240
  %v876 = vld [vmem:[%s875] sm:$0xff]
  %878 = vset.pattern.permute.xlu0 0
  %879 = vperm.xlu0 %878, %v876
  %v880 = vpop.permute.xlu0 %879
  %v882 = vmul.f32 %v804, %v880
  %v883 = vmul.f32 %v808, %v880
  %886 = vrot.lane.b32.xlu0 %v882, 127
  %v887 = vpop.permute.xlu0 %886
  %888 = vrot.lane.b32.xlu0 %v883, 127
  %v889 = vpop.permute.xlu0 %888
  %v892 = vadd.f32 %v873, %v887
  %v893 = vadd.f32 %v874, %v889
  %s894 = scalar_lea.vmem %s3, 248
  %v895 = vld [vmem:[%s894] sm:$0xff]
  %897 = vset.pattern.permute.xlu0 0
  %898 = vperm.xlu0 %897, %v895
  %v899 = vpop.permute.xlu0 %898
  %v901 = vmul.f32 %v823, %v899
  %v902 = vmul.f32 %v827, %v899
  %905 = vrot.lane.b32.xlu0 %v901, 127
  %v906 = vpop.permute.xlu0 %905
  %907 = vrot.lane.b32.xlu0 %v902, 127
  %v908 = vpop.permute.xlu0 %907
  %v911 = vadd.f32 %v892, %v906
  %v912 = vadd.f32 %v893, %v908
  %s913 = scalar_lea.vmem %s4, 16
  %v914 = vld [vmem:[%s913] sm:$0xff]
  %916 = vset.pattern.permute.xlu0 0
  %917 = vperm.xlu0 %916, %v914
  %v918 = vpop.permute.xlu0 %917
  %v920 = vadd.f32 %v911, %v918
  %v921 = vadd.f32 %v912, %v918
  %vm922 = vcmp.gt.f32.partialorder %v920, 0.0
  %vm923 = vcmp.gt.f32.partialorder %v921, 0.0
  %v924 = vmin.f32 %v920, 0.0
  %v925 = vmin.f32 %v921, 0.0
  %v926 = vmul.f32 %v924, 1.442695
  %v927 = vpow.pop %v926
  %v928 = vmul.f32 %v925, 1.442695
  %v929 = vpow.pop %v928
  %v930 = vsub.f32 %v927, 1.0
  %v931 = vsub.f32 %v929, 1.0
  %v932 = vsel %vm922, %v920, %v930
  %v933 = vsel %vm923, %v921, %v931
  %936 = vrot.lane.b32.xlu0 %v932, 127
  %v937 = vpop.permute.xlu0 %936
  %938 = vrot.lane.b32.xlu0 %v933, 127
  %v939 = vpop.permute.xlu0 %938
  %v942 = vmax.f32 %v932, %v937
  %v943 = vmax.f32 %v933, %v939
  %s944 = scalar_lea.vmem %s0, 6
  %v945 = vld [vmem:[%s944] sm:$0x3]
  %v948 = vunpack.c.l.s4 1966171168
  %v949 = vunpack.c.0.s8 %v948
  %v950 = vlaneseq
  %v951 = vshrl.u32 %v950, 7
  %v952 = vsub.s32 %v949, %v951
  %v953 = vrot.slane %v945, %v952
  %v954 = vcombine.high %v953, %v953
  %v956 = vunpack.c.l.s4 1966171168
  %v957 = vunpack.c.0.s8 %v956
  %v958 = vlaneseq
  %v959 = vshrl.u32 %v958, 7
  %v960 = vsub.s32 %v957, %v959
  %v961 = vrot.slane %v953, %v960
  %v963 = vunpack.c.l.s4 1966171168
  %v964 = vunpack.c.0.s8 %v963
  %v965 = vlaneseq
  %v966 = vshrl.u32 %v965, 7
  %v967 = vsub.s32 %v964, %v966
  %v968 = vrot.slane %v954, %v967
  %s969 = scalar_lea.vmem %s1, 36
  %v970 = vld [vmem:[%s969] sm:$0xf]
  %v971 = vlaneseq
  %v972 = vshrl.u32 %v971, 7
  %v973 = vsub.s32 0, %v972
  %v974 = vrot.slane %v961, %v973
  %v975 = vlaneseq
  %v976 = vshrl.u32 %v975, 7
  %v977 = vsub.s32 0, %v976
  %v978 = vrot.slane %v968, %v977
  %982 = vset.pattern.permute.xlu0 0
  %983 = vperm.xlu0 %982, %v970
  %v984 = vpop.permute.xlu0 %983
  %v986 = vmul.f32 %v974, %v984
  %v987 = vmul.f32 %v978, %v984
  %s988 = scalar_lea.vmem %s1, 40
  %v989 = vld [vmem:[%s988] sm:$0xf]
  %991 = vset.pattern.permute.xlu0 0
  %992 = vperm.xlu0 %991, %v989
  %v993 = vpop.permute.xlu0 %992
  %v995 = vmul.f32 %v974, %v993
  %v996 = vmul.f32 %v978, %v993
  %999 = vrot.lane.b32.xlu0 %v995, 127
  %v1000 = vpop.permute.xlu0 %999
  %1001 = vrot.lane.b32.xlu0 %v996, 127
  %v1002 = vpop.permute.xlu0 %1001
  %v1005 = vadd.f32 %v986, %v1000
  %v1006 = vadd.f32 %v987, %v1002
  %s1007 = scalar_lea.vmem %s2, 12
  %v1008 = vld [vmem:[%s1007] sm:$0xf]
  %1010 = vset.pattern.permute.xlu0 0
  %1011 = vperm.xlu0 %1010, %v1008
  %v1012 = vpop.permute.xlu0 %1011
  %v1014 = vadd.f32 %v1005, %v1012
  %v1015 = vadd.f32 %v1006, %v1012
  %vm1016 = vcmp.gt.f32.partialorder %v1014, 0.0
  %vm1017 = vcmp.gt.f32.partialorder %v1015, 0.0
  %v1018 = vmin.f32 %v1014, 0.0
  %v1019 = vmin.f32 %v1015, 0.0
  %v1020 = vmul.f32 %v1018, 1.442695
  %v1021 = vpow.pop %v1020
  %v1022 = vmul.f32 %v1019, 1.442695
  %v1023 = vpow.pop %v1022
  %v1024 = vsub.f32 %v1021, 1.0
  %v1025 = vsub.f32 %v1023, 1.0
  %v1026 = vsel %vm1016, %v1014, %v1024
  %v1027 = vsel %vm1017, %v1015, %v1025
  %s1028 = scalar_lea.vmem %s3, 288
  %v1029 = vld [vmem:[%s1028] sm:$0xff]
  %v1030 = vlaneseq
  %v1031 = vshrl.u32 %v1030, 7
  %v1032 = vsub.s32 0, %v1031
  %v1033 = vrot.slane %v1026, %v1032
  %v1034 = vlaneseq
  %v1035 = vshrl.u32 %v1034, 7
  %v1036 = vsub.s32 0, %v1035
  %v1037 = vrot.slane %v1027, %v1036
  %1039 = vset.pattern.permute.xlu0 0
  %1040 = vperm.xlu0 %1039, %v1029
  %v1041 = vpop.permute.xlu0 %1040
  %v1043 = vmul.f32 %v1033, %v1041
  %v1044 = vmul.f32 %v1037, %v1041
  %s1045 = scalar_lea.vmem %s3, 296
  %v1046 = vld [vmem:[%s1045] sm:$0xff]
  %v1047 = vlaneseq
  %v1048 = vshrl.u32 %v1047, 7
  %v1049 = vsub.s32 1, %v1048
  %v1050 = vrot.slane %v1026, %v1049
  %v1051 = vlaneseq
  %v1052 = vshrl.u32 %v1051, 7
  %v1053 = vsub.s32 1, %v1052
  %v1054 = vrot.slane %v1027, %v1053
  %1056 = vset.pattern.permute.xlu0 0
  %1057 = vperm.xlu0 %1056, %v1046
  %v1058 = vpop.permute.xlu0 %1057
  %v1060 = vmul.f32 %v1050, %v1058
  %v1061 = vmul.f32 %v1054, %v1058
  %v1062 = vadd.f32 %v1043, %v1060
  %v1063 = vadd.f32 %v1044, %v1061
  %s1064 = scalar_lea.vmem %s3, 304
  %v1065 = vld [vmem:[%s1064] sm:$0xff]
  %v1066 = vlaneseq
  %v1067 = vshrl.u32 %v1066, 7
  %v1068 = vsub.s32 2, %v1067
  %v1069 = vrot.slane %v1026, %v1068
  %v1070 = vlaneseq
  %v1071 = vshrl.u32 %v1070, 7
  %v1072 = vsub.s32 2, %v1071
  %v1073 = vrot.slane %v1027, %v1072
  %1075 = vset.pattern.permute.xlu0 0
  %1076 = vperm.xlu0 %1075, %v1065
  %v1077 = vpop.permute.xlu0 %1076
  %v1079 = vmul.f32 %v1069, %v1077
  %v1080 = vmul.f32 %v1073, %v1077
  %v1081 = vadd.f32 %v1062, %v1079
  %v1082 = vadd.f32 %v1063, %v1080
  %s1083 = scalar_lea.vmem %s3, 312
  %v1084 = vld [vmem:[%s1083] sm:$0xff]
  %v1085 = vlaneseq
  %v1086 = vshrl.u32 %v1085, 7
  %v1087 = vsub.s32 3, %v1086
  %v1088 = vrot.slane %v1026, %v1087
  %v1089 = vlaneseq
  %v1090 = vshrl.u32 %v1089, 7
  %v1091 = vsub.s32 3, %v1090
  %v1092 = vrot.slane %v1027, %v1091
  %1094 = vset.pattern.permute.xlu0 0
  %1095 = vperm.xlu0 %1094, %v1084
  %v1096 = vpop.permute.xlu0 %1095
  %v1098 = vmul.f32 %v1088, %v1096
  %v1099 = vmul.f32 %v1092, %v1096
  %v1100 = vadd.f32 %v1081, %v1098
  %v1101 = vadd.f32 %v1082, %v1099
  %s1102 = scalar_lea.vmem %s3, 320
  %v1103 = vld [vmem:[%s1102] sm:$0xff]
  %1105 = vset.pattern.permute.xlu0 0
  %1106 = vperm.xlu0 %1105, %v1103
  %v1107 = vpop.permute.xlu0 %1106
  %v1109 = vmul.f32 %v1033, %v1107
  %v1110 = vmul.f32 %v1037, %v1107
  %1113 = vrot.lane.b32.xlu0 %v1109, 127
  %v1114 = vpop.permute.xlu0 %1113
  %1115 = vrot.lane.b32.xlu0 %v1110, 127
  %v1116 = vpop.permute.xlu0 %1115
  %v1119 = vadd.f32 %v1100, %v1114
  %v1120 = vadd.f32 %v1101, %v1116
  %s1121 = scalar_lea.vmem %s3, 328
  %v1122 = vld [vmem:[%s1121] sm:$0xff]
  %1124 = vset.pattern.permute.xlu0 0
  %1125 = vperm.xlu0 %1124, %v1122
  %v1126 = vpop.permute.xlu0 %1125
  %v1128 = vmul.f32 %v1050, %v1126
  %v1129 = vmul.f32 %v1054, %v1126
  %1132 = vrot.lane.b32.xlu0 %v1128, 127
  %v1133 = vpop.permute.xlu0 %1132
  %1134 = vrot.lane.b32.xlu0 %v1129, 127
  %v1135 = vpop.permute.xlu0 %1134
  %v1138 = vadd.f32 %v1119, %v1133
  %v1139 = vadd.f32 %v1120, %v1135
  %s1140 = scalar_lea.vmem %s3, 336
  %v1141 = vld [vmem:[%s1140] sm:$0xff]
  %1143 = vset.pattern.permute.xlu0 0
  %1144 = vperm.xlu0 %1143, %v1141
  %v1145 = vpop.permute.xlu0 %1144
  %v1147 = vmul.f32 %v1069, %v1145
  %v1148 = vmul.f32 %v1073, %v1145
  %1151 = vrot.lane.b32.xlu0 %v1147, 127
  %v1152 = vpop.permute.xlu0 %1151
  %1153 = vrot.lane.b32.xlu0 %v1148, 127
  %v1154 = vpop.permute.xlu0 %1153
  %v1157 = vadd.f32 %v1138, %v1152
  %v1158 = vadd.f32 %v1139, %v1154
  %s1159 = scalar_lea.vmem %s3, 344
  %v1160 = vld [vmem:[%s1159] sm:$0xff]
  %1162 = vset.pattern.permute.xlu0 0
  %1163 = vperm.xlu0 %1162, %v1160
  %v1164 = vpop.permute.xlu0 %1163
  %v1166 = vmul.f32 %v1088, %v1164
  %v1167 = vmul.f32 %v1092, %v1164
  %1170 = vrot.lane.b32.xlu0 %v1166, 127
  %v1171 = vpop.permute.xlu0 %1170
  %1172 = vrot.lane.b32.xlu0 %v1167, 127
  %v1173 = vpop.permute.xlu0 %1172
  %v1176 = vadd.f32 %v1157, %v1171
  %v1177 = vadd.f32 %v1158, %v1173
  %s1178 = scalar_lea.vmem %s3, 352
  %v1179 = vld [vmem:[%s1178] sm:$0xff]
  %1181 = vset.pattern.permute.xlu0 0
  %1182 = vperm.xlu0 %1181, %v1179
  %v1183 = vpop.permute.xlu0 %1182
  %v1185 = vmul.f32 %v1033, %v1183
  %v1186 = vmul.f32 %v1037, %v1183
  %1189 = vrot.lane.b32.xlu0 %v1185, 126
  %v1190 = vpop.permute.xlu0 %1189
  %1191 = vrot.lane.b32.xlu0 %v1186, 126
  %v1192 = vpop.permute.xlu0 %1191
  %v1195 = vadd.f32 %v1176, %v1190
  %v1196 = vadd.f32 %v1177, %v1192
  %s1197 = scalar_lea.vmem %s3, 360
  %v1198 = vld [vmem:[%s1197] sm:$0xff]
  %1200 = vset.pattern.permute.xlu0 0
  %1201 = vperm.xlu0 %1200, %v1198
  %v1202 = vpop.permute.xlu0 %1201
  %v1204 = vmul.f32 %v1050, %v1202
  %v1205 = vmul.f32 %v1054, %v1202
  %1208 = vrot.lane.b32.xlu0 %v1204, 126
  %v1209 = vpop.permute.xlu0 %1208
  %1210 = vrot.lane.b32.xlu0 %v1205, 126
  %v1211 = vpop.permute.xlu0 %1210
  %v1214 = vadd.f32 %v1195, %v1209
  %v1215 = vadd.f32 %v1196, %v1211
  %s1216 = scalar_lea.vmem %s3, 368
  %v1217 = vld [vmem:[%s1216] sm:$0xff]
  %1219 = vset.pattern.permute.xlu0 0
  %1220 = vperm.xlu0 %1219, %v1217
  %v1221 = vpop.permute.xlu0 %1220
  %v1223 = vmul.f32 %v1069, %v1221
  %v1224 = vmul.f32 %v1073, %v1221
  %1227 = vrot.lane.b32.xlu0 %v1223, 126
  %v1228 = vpop.permute.xlu0 %1227
  %1229 = vrot.lane.b32.xlu0 %v1224, 126
  %v1230 = vpop.permute.xlu0 %1229
  %v1233 = vadd.f32 %v1214, %v1228
  %v1234 = vadd.f32 %v1215, %v1230
  %s1235 = scalar_lea.vmem %s3, 376
  %v1236 = vld [vmem:[%s1235] sm:$0xff]
  %1238 = vset.pattern.permute.xlu0 0
  %1239 = vperm.xlu0 %1238, %v1236
  %v1240 = vpop.permute.xlu0 %1239
  %v1242 = vmul.f32 %v1088, %v1240
  %v1243 = vmul.f32 %v1092, %v1240
  %1246 = vrot.lane.b32.xlu0 %v1242, 126
  %v1247 = vpop.permute.xlu0 %1246
  %1248 = vrot.lane.b32.xlu0 %v1243, 126
  %v1249 = vpop.permute.xlu0 %1248
  %v1252 = vadd.f32 %v1233, %v1247
  %v1253 = vadd.f32 %v1234, %v1249
  %s1254 = scalar_lea.vmem %s4, 24
  %v1255 = vld [vmem:[%s1254] sm:$0xff]
  %1257 = vset.pattern.permute.xlu0 0
  %1258 = vperm.xlu0 %1257, %v1255
  %v1259 = vpop.permute.xlu0 %1258
  %v1261 = vadd.f32 %v1252, %v1259
  %v1262 = vadd.f32 %v1253, %v1259
  %vm1263 = vcmp.gt.f32.partialorder %v1261, 0.0
  %vm1264 = vcmp.gt.f32.partialorder %v1262, 0.0
  %v1265 = vmin.f32 %v1261, 0.0
  %v1266 = vmin.f32 %v1262, 0.0
  %v1267 = vmul.f32 %v1265, 1.442695
  %v1268 = vpow.pop %v1267
  %v1269 = vmul.f32 %v1266, 1.442695
  %v1270 = vpow.pop %v1269
  %v1271 = vsub.f32 %v1268, 1.0
  %v1272 = vsub.f32 %v1270, 1.0
  %v1273 = vsel %vm1263, %v1261, %v1271
  %v1274 = vsel %vm1264, %v1262, %v1272
  %1277 = vrot.lane.b32.xlu0 %v1273, 127
  %v1278 = vpop.permute.xlu0 %1277
  %1279 = vrot.lane.b32.xlu0 %v1274, 127
  %v1280 = vpop.permute.xlu0 %1279
  %v1283 = vmax.f32 %v1273, %v1278
  %v1284 = vmax.f32 %v1274, %v1280
  %s1285 = scalar_lea.vmem %s0, 8
  %v1286 = vld [vmem:[%s1285] sm:$0x3]
  %v1289 = vunpack.c.l.s4 1966171168
  %v1290 = vunpack.c.0.s8 %v1289
  %v1291 = vlaneseq
  %v1292 = vshrl.u32 %v1291, 7
  %v1293 = vsub.s32 %v1290, %v1292
  %v1294 = vrot.slane %v1286, %v1293
  %v1295 = vcombine.high %v1294, %v1294
  %v1297 = vunpack.c.l.s4 1966171168
  %v1298 = vunpack.c.0.s8 %v1297
  %v1299 = vlaneseq
  %v1300 = vshrl.u32 %v1299, 7
  %v1301 = vsub.s32 %v1298, %v1300
  %v1302 = vrot.slane %v1294, %v1301
  %v1304 = vunpack.c.l.s4 1966171168
  %v1305 = vunpack.c.0.s8 %v1304
  %v1306 = vlaneseq
  %v1307 = vshrl.u32 %v1306, 7
  %v1308 = vsub.s32 %v1305, %v1307
  %v1309 = vrot.slane %v1295, %v1308
  %s1310 = scalar_lea.vmem %s1, 48
  %v1311 = vld [vmem:[%s1310] sm:$0xf]
  %v1312 = vlaneseq
  %v1313 = vshrl.u32 %v1312, 7
  %v1314 = vsub.s32 0, %v1313
  %v1315 = vrot.slane %v1302, %v1314
  %v1316 = vlaneseq
  %v1317 = vshrl.u32 %v1316, 7
  %v1318 = vsub.s32 0, %v1317
  %v1319 = vrot.slane %v1309, %v1318
  %1323 = vset.pattern.permute.xlu0 0
  %1324 = vperm.xlu0 %1323, %v1311
  %v1325 = vpop.permute.xlu0 %1324
  %v1327 = vmul.f32 %v1315, %v1325
  %v1328 = vmul.f32 %v1319, %v1325
  %s1329 = scalar_lea.vmem %s1, 52
  %v1330 = vld [vmem:[%s1329] sm:$0xf]
  %1332 = vset.pattern.permute.xlu0 0
  %1333 = vperm.xlu0 %1332, %v1330
  %v1334 = vpop.permute.xlu0 %1333
  %v1336 = vmul.f32 %v1315, %v1334
  %v1337 = vmul.f32 %v1319, %v1334
  %1340 = vrot.lane.b32.xlu0 %v1336, 127
  %v1341 = vpop.permute.xlu0 %1340
  %1342 = vrot.lane.b32.xlu0 %v1337, 127
  %v1343 = vpop.permute.xlu0 %1342
  %v1346 = vadd.f32 %v1327, %v1341
  %v1347 = vadd.f32 %v1328, %v1343
  %s1348 = scalar_lea.vmem %s1, 56
  %v1349 = vld [vmem:[%s1348] sm:$0xf]
  %1351 = vset.pattern.permute.xlu0 0
  %1352 = vperm.xlu0 %1351, %v1349
  %v1353 = vpop.permute.xlu0 %1352
  %v1355 = vmul.f32 %v1315, %v1353
  %v1356 = vmul.f32 %v1319, %v1353
  %1359 = vrot.lane.b32.xlu0 %v1355, 126
  %v1360 = vpop.permute.xlu0 %1359
  %1361 = vrot.lane.b32.xlu0 %v1356, 126
  %v1362 = vpop.permute.xlu0 %1361
  %v1365 = vadd.f32 %v1346, %v1360
  %v1366 = vadd.f32 %v1347, %v1362
  %s1367 = scalar_lea.vmem %s2, 16
  %v1368 = vld [vmem:[%s1367] sm:$0xf]
  %1370 = vset.pattern.permute.xlu0 0
  %1371 = vperm.xlu0 %1370, %v1368
  %v1372 = vpop.permute.xlu0 %1371
  %v1374 = vadd.f32 %v1365, %v1372
  %v1375 = vadd.f32 %v1366, %v1372
  %vm1376 = vcmp.gt.f32.partialorder %v1374, 0.0
  %vm1377 = vcmp.gt.f32.partialorder %v1375, 0.0
  %v1378 = vmin.f32 %v1374, 0.0
  %v1379 = vmin.f32 %v1375, 0.0
  %v1380 = vmul.f32 %v1378, 1.442695
  %v1381 = vpow.pop %v1380
  %v1382 = vmul.f32 %v1379, 1.442695
  %v1383 = vpow.pop %v1382
  %v1384 = vsub.f32 %v1381, 1.0
  %v1385 = vsub.f32 %v1383, 1.0
  %v1386 = vsel %vm1376, %v1374, %v1384
  %v1387 = vsel %vm1377, %v1375, %v1385
  %s1388 = scalar_lea.vmem %s3, 384
  %v1389 = vld [vmem:[%s1388] sm:$0xff]
  %v1390 = vlaneseq
  %v1391 = vshrl.u32 %v1390, 7
  %v1392 = vsub.s32 0, %v1391
  %v1393 = vrot.slane %v1386, %v1392
  %v1394 = vlaneseq
  %v1395 = vshrl.u32 %v1394, 7
  %v1396 = vsub.s32 0, %v1395
  %v1397 = vrot.slane %v1387, %v1396
  %1399 = vset.pattern.permute.xlu0 0
  %1400 = vperm.xlu0 %1399, %v1389
  %v1401 = vpop.permute.xlu0 %1400
  %v1403 = vmul.f32 %v1393, %v1401
  %v1404 = vmul.f32 %v1397, %v1401
  %s1405 = scalar_lea.vmem %s3, 392
  %v1406 = vld [vmem:[%s1405] sm:$0xff]
  %v1407 = vlaneseq
  %v1408 = vshrl.u32 %v1407, 7
  %v1409 = vsub.s32 1, %v1408
  %v1410 = vrot.slane %v1386, %v1409
  %v1411 = vlaneseq
  %v1412 = vshrl.u32 %v1411, 7
  %v1413 = vsub.s32 1, %v1412
  %v1414 = vrot.slane %v1387, %v1413
  %1416 = vset.pattern.permute.xlu0 0
  %1417 = vperm.xlu0 %1416, %v1406
  %v1418 = vpop.permute.xlu0 %1417
  %v1420 = vmul.f32 %v1410, %v1418
  %v1421 = vmul.f32 %v1414, %v1418
  %v1422 = vadd.f32 %v1403, %v1420
  %v1423 = vadd.f32 %v1404, %v1421
  %s1424 = scalar_lea.vmem %s3, 400
  %v1425 = vld [vmem:[%s1424] sm:$0xff]
  %v1426 = vlaneseq
  %v1427 = vshrl.u32 %v1426, 7
  %v1428 = vsub.s32 2, %v1427
  %v1429 = vrot.slane %v1386, %v1428
  %v1430 = vlaneseq
  %v1431 = vshrl.u32 %v1430, 7
  %v1432 = vsub.s32 2, %v1431
  %v1433 = vrot.slane %v1387, %v1432
  %1435 = vset.pattern.permute.xlu0 0
  %1436 = vperm.xlu0 %1435, %v1425
  %v1437 = vpop.permute.xlu0 %1436
  %v1439 = vmul.f32 %v1429, %v1437
  %v1440 = vmul.f32 %v1433, %v1437
  %v1441 = vadd.f32 %v1422, %v1439
  %v1442 = vadd.f32 %v1423, %v1440
  %s1443 = scalar_lea.vmem %s3, 408
  %v1444 = vld [vmem:[%s1443] sm:$0xff]
  %v1445 = vlaneseq
  %v1446 = vshrl.u32 %v1445, 7
  %v1447 = vsub.s32 3, %v1446
  %v1448 = vrot.slane %v1386, %v1447
  %v1449 = vlaneseq
  %v1450 = vshrl.u32 %v1449, 7
  %v1451 = vsub.s32 3, %v1450
  %v1452 = vrot.slane %v1387, %v1451
  %1454 = vset.pattern.permute.xlu0 0
  %1455 = vperm.xlu0 %1454, %v1444
  %v1456 = vpop.permute.xlu0 %1455
  %v1458 = vmul.f32 %v1448, %v1456
  %v1459 = vmul.f32 %v1452, %v1456
  %v1460 = vadd.f32 %v1441, %v1458
  %v1461 = vadd.f32 %v1442, %v1459
  %s1462 = scalar_lea.vmem %s3, 416
  %v1463 = vld [vmem:[%s1462] sm:$0xff]
  %1465 = vset.pattern.permute.xlu0 0
  %1466 = vperm.xlu0 %1465, %v1463
  %v1467 = vpop.permute.xlu0 %1466
  %v1469 = vmul.f32 %v1393, %v1467
  %v1470 = vmul.f32 %v1397, %v1467
  %1473 = vrot.lane.b32.xlu0 %v1469, 127
  %v1474 = vpop.permute.xlu0 %1473
  %1475 = vrot.lane.b32.xlu0 %v1470, 127
  %v1476 = vpop.permute.xlu0 %1475
  %v1479 = vadd.f32 %v1460, %v1474
  %v1480 = vadd.f32 %v1461, %v1476
  %s1481 = scalar_lea.vmem %s3, 424
  %v1482 = vld [vmem:[%s1481] sm:$0xff]
  %1484 = vset.pattern.permute.xlu0 0
  %1485 = vperm.xlu0 %1484, %v1482
  %v1486 = vpop.permute.xlu0 %1485
  %v1488 = vmul.f32 %v1410, %v1486
  %v1489 = vmul.f32 %v1414, %v1486
  %1492 = vrot.lane.b32.xlu0 %v1488, 127
  %v1493 = vpop.permute.xlu0 %1492
  %1494 = vrot.lane.b32.xlu0 %v1489, 127
  %v1495 = vpop.permute.xlu0 %1494
  %v1498 = vadd.f32 %v1479, %v1493
  %v1499 = vadd.f32 %v1480, %v1495
  %s1500 = scalar_lea.vmem %s3, 432
  %v1501 = vld [vmem:[%s1500] sm:$0xff]
  %1503 = vset.pattern.permute.xlu0 0
  %1504 = vperm.xlu0 %1503, %v1501
  %v1505 = vpop.permute.xlu0 %1504
  %v1507 = vmul.f32 %v1429, %v1505
  %v1508 = vmul.f32 %v1433, %v1505
  %1511 = vrot.lane.b32.xlu0 %v1507, 127
  %v1512 = vpop.permute.xlu0 %1511
  %1513 = vrot.lane.b32.xlu0 %v1508, 127
  %v1514 = vpop.permute.xlu0 %1513
  %v1517 = vadd.f32 %v1498, %v1512
  %v1518 = vadd.f32 %v1499, %v1514
  %s1519 = scalar_lea.vmem %s3, 440
  %v1520 = vld [vmem:[%s1519] sm:$0xff]
  %1522 = vset.pattern.permute.xlu0 0
  %1523 = vperm.xlu0 %1522, %v1520
  %v1524 = vpop.permute.xlu0 %1523
  %v1526 = vmul.f32 %v1448, %v1524
  %v1527 = vmul.f32 %v1452, %v1524
  %1530 = vrot.lane.b32.xlu0 %v1526, 127
  %v1531 = vpop.permute.xlu0 %1530
  %1532 = vrot.lane.b32.xlu0 %v1527, 127
  %v1533 = vpop.permute.xlu0 %1532
  %v1536 = vadd.f32 %v1517, %v1531
  %v1537 = vadd.f32 %v1518, %v1533
  %s1538 = scalar_lea.vmem %s4, 32
  %v1539 = vld [vmem:[%s1538] sm:$0xff]
  %1541 = vset.pattern.permute.xlu0 0
  %1542 = vperm.xlu0 %1541, %v1539
  %v1543 = vpop.permute.xlu0 %1542
  %v1545 = vadd.f32 %v1536, %v1543
  %v1546 = vadd.f32 %v1537, %v1543
  %vm1547 = vcmp.gt.f32.partialorder %v1545, 0.0
  %vm1548 = vcmp.gt.f32.partialorder %v1546, 0.0
  %v1549 = vmin.f32 %v1545, 0.0
  %v1550 = vmin.f32 %v1546, 0.0
  %v1551 = vmul.f32 %v1549, 1.442695
  %v1552 = vpow.pop %v1551
  %v1553 = vmul.f32 %v1550, 1.442695
  %v1554 = vpow.pop %v1553
  %v1555 = vsub.f32 %v1552, 1.0
  %v1556 = vsub.f32 %v1554, 1.0
  %v1557 = vsel %vm1547, %v1545, %v1555
  %v1558 = vsel %vm1548, %v1546, %v1556
  %1561 = vrot.lane.b32.xlu0 %v1557, 127
  %v1562 = vpop.permute.xlu0 %1561
  %1563 = vrot.lane.b32.xlu0 %v1558, 127
  %v1564 = vpop.permute.xlu0 %1563
  %v1567 = vmax.f32 %v1557, %v1562
  %v1568 = vmax.f32 %v1558, %v1564
  %s1569 = scalar_lea.vmem %s0, 10
  %v1570 = vld [vmem:[%s1569] sm:$0x3]
  %v1573 = vunpack.c.l.s4 1966171168
  %v1574 = vunpack.c.0.s8 %v1573
  %v1575 = vlaneseq
  %v1576 = vshrl.u32 %v1575, 7
  %v1577 = vsub.s32 %v1574, %v1576
  %v1578 = vrot.slane %v1570, %v1577
  %v1579 = vcombine.high %v1578, %v1578
  %v1581 = vunpack.c.l.s4 1966171168
  %v1582 = vunpack.c.0.s8 %v1581
  %v1583 = vlaneseq
  %v1584 = vshrl.u32 %v1583, 7
  %v1585 = vsub.s32 %v1582, %v1584
  %v1586 = vrot.slane %v1578, %v1585
  %v1588 = vunpack.c.l.s4 1966171168
  %v1589 = vunpack.c.0.s8 %v1588
  %v1590 = vlaneseq
  %v1591 = vshrl.u32 %v1590, 7
  %v1592 = vsub.s32 %v1589, %v1591
  %v1593 = vrot.slane %v1579, %v1592
  %s1594 = scalar_lea.vmem %s1, 60
  %v1595 = vld [vmem:[%s1594] sm:$0xf]
  %v1596 = vlaneseq
  %v1597 = vshrl.u32 %v1596, 7
  %v1598 = vsub.s32 0, %v1597
  %v1599 = vrot.slane %v1586, %v1598
  %v1600 = vlaneseq
  %v1601 = vshrl.u32 %v1600, 7
  %v1602 = vsub.s32 0, %v1601
  %v1603 = vrot.slane %v1593, %v1602
  %1607 = vset.pattern.permute.xlu0 0
  %1608 = vperm.xlu0 %1607, %v1595
  %v1609 = vpop.permute.xlu0 %1608
  %v1611 = vmul.f32 %v1599, %v1609
  %v1612 = vmul.f32 %v1603, %v1609
  %s1613 = scalar_lea.vmem %s1, 64
  %v1614 = vld [vmem:[%s1613] sm:$0xf]
  %1616 = vset.pattern.permute.xlu0 0
  %1617 = vperm.xlu0 %1616, %v1614
  %v1618 = vpop.permute.xlu0 %1617
  %v1620 = vmul.f32 %v1599, %v1618
  %v1621 = vmul.f32 %v1603, %v1618
  %1624 = vrot.lane.b32.xlu0 %v1620, 127
  %v1625 = vpop.permute.xlu0 %1624
  %1626 = vrot.lane.b32.xlu0 %v1621, 127
  %v1627 = vpop.permute.xlu0 %1626
  %v1630 = vadd.f32 %v1611, %v1625
  %v1631 = vadd.f32 %v1612, %v1627
  %s1632 = scalar_lea.vmem %s2, 20
  %v1633 = vld [vmem:[%s1632] sm:$0xf]
  %1635 = vset.pattern.permute.xlu0 0
  %1636 = vperm.xlu0 %1635, %v1633
  %v1637 = vpop.permute.xlu0 %1636
  %v1639 = vadd.f32 %v1630, %v1637
  %v1640 = vadd.f32 %v1631, %v1637
  %vm1641 = vcmp.gt.f32.partialorder %v1639, 0.0
  %vm1642 = vcmp.gt.f32.partialorder %v1640, 0.0
  %v1643 = vmin.f32 %v1639, 0.0
  %v1644 = vmin.f32 %v1640, 0.0
  %v1645 = vmul.f32 %v1643, 1.442695
  %v1646 = vpow.pop %v1645
  %v1647 = vmul.f32 %v1644, 1.442695
  %v1648 = vpow.pop %v1647
  %v1649 = vsub.f32 %v1646, 1.0
  %v1650 = vsub.f32 %v1648, 1.0
  %v1651 = vsel %vm1641, %v1639, %v1649
  %v1652 = vsel %vm1642, %v1640, %v1650
  %s1653 = scalar_lea.vmem %s3, 480
  %v1654 = vld [vmem:[%s1653] sm:$0xff]
  %v1655 = vlaneseq
  %v1656 = vshrl.u32 %v1655, 7
  %v1657 = vsub.s32 0, %v1656
  %v1658 = vrot.slane %v1651, %v1657
  %v1659 = vlaneseq
  %v1660 = vshrl.u32 %v1659, 7
  %v1661 = vsub.s32 0, %v1660
  %v1662 = vrot.slane %v1652, %v1661
  %1664 = vset.pattern.permute.xlu0 0
  %1665 = vperm.xlu0 %1664, %v1654
  %v1666 = vpop.permute.xlu0 %1665
  %v1668 = vmul.f32 %v1658, %v1666
  %v1669 = vmul.f32 %v1662, %v1666
  %s1670 = scalar_lea.vmem %s3, 488
  %v1671 = vld [vmem:[%s1670] sm:$0xff]
  %v1672 = vlaneseq
  %v1673 = vshrl.u32 %v1672, 7
  %v1674 = vsub.s32 1, %v1673
  %v1675 = vrot.slane %v1651, %v1674
  %v1676 = vlaneseq
  %v1677 = vshrl.u32 %v1676, 7
  %v1678 = vsub.s32 1, %v1677
  %v1679 = vrot.slane %v1652, %v1678
  %1681 = vset.pattern.permute.xlu0 0
  %1682 = vperm.xlu0 %1681, %v1671
  %v1683 = vpop.permute.xlu0 %1682
  %v1685 = vmul.f32 %v1675, %v1683
  %v1686 = vmul.f32 %v1679, %v1683
  %v1687 = vadd.f32 %v1668, %v1685
  %v1688 = vadd.f32 %v1669, %v1686
  %s1689 = scalar_lea.vmem %s3, 496
  %v1690 = vld [vmem:[%s1689] sm:$0xff]
  %v1691 = vlaneseq
  %v1692 = vshrl.u32 %v1691, 7
  %v1693 = vsub.s32 2, %v1692
  %v1694 = vrot.slane %v1651, %v1693
  %v1695 = vlaneseq
  %v1696 = vshrl.u32 %v1695, 7
  %v1697 = vsub.s32 2, %v1696
  %v1698 = vrot.slane %v1652, %v1697
  %1700 = vset.pattern.permute.xlu0 0
  %1701 = vperm.xlu0 %1700, %v1690
  %v1702 = vpop.permute.xlu0 %1701
  %v1704 = vmul.f32 %v1694, %v1702
  %v1705 = vmul.f32 %v1698, %v1702
  %v1706 = vadd.f32 %v1687, %v1704
  %v1707 = vadd.f32 %v1688, %v1705
  %s1708 = scalar_lea.vmem %s3, 504
  %v1709 = vld [vmem:[%s1708] sm:$0xff]
  %v1710 = vlaneseq
  %v1711 = vshrl.u32 %v1710, 7
  %v1712 = vsub.s32 3, %v1711
  %v1713 = vrot.slane %v1651, %v1712
  %v1714 = vlaneseq
  %v1715 = vshrl.u32 %v1714, 7
  %v1716 = vsub.s32 3, %v1715
  %v1717 = vrot.slane %v1652, %v1716
  %1719 = vset.pattern.permute.xlu0 0
  %1720 = vperm.xlu0 %1719, %v1709
  %v1721 = vpop.permute.xlu0 %1720
  %v1723 = vmul.f32 %v1713, %v1721
  %v1724 = vmul.f32 %v1717, %v1721
  %v1725 = vadd.f32 %v1706, %v1723
  %v1726 = vadd.f32 %v1707, %v1724
  %s1727 = scalar_lea.vmem %s3, 512
  %v1728 = vld [vmem:[%s1727] sm:$0xff]
  %1730 = vset.pattern.permute.xlu0 0
  %1731 = vperm.xlu0 %1730, %v1728
  %v1732 = vpop.permute.xlu0 %1731
  %v1734 = vmul.f32 %v1658, %v1732
  %v1735 = vmul.f32 %v1662, %v1732
  %1738 = vrot.lane.b32.xlu0 %v1734, 127
  %v1739 = vpop.permute.xlu0 %1738
  %1740 = vrot.lane.b32.xlu0 %v1735, 127
  %v1741 = vpop.permute.xlu0 %1740
  %v1744 = vadd.f32 %v1725, %v1739
  %v1745 = vadd.f32 %v1726, %v1741
  %s1746 = scalar_lea.vmem %s3, 520
  %v1747 = vld [vmem:[%s1746] sm:$0xff]
  %1749 = vset.pattern.permute.xlu0 0
  %1750 = vperm.xlu0 %1749, %v1747
  %v1751 = vpop.permute.xlu0 %1750
  %v1753 = vmul.f32 %v1675, %v1751
  %v1754 = vmul.f32 %v1679, %v1751
  %1757 = vrot.lane.b32.xlu0 %v1753, 127
  %v1758 = vpop.permute.xlu0 %1757
  %1759 = vrot.lane.b32.xlu0 %v1754, 127
  %v1760 = vpop.permute.xlu0 %1759
  %v1763 = vadd.f32 %v1744, %v1758
  %v1764 = vadd.f32 %v1745, %v1760
  %s1765 = scalar_lea.vmem %s3, 528
  %v1766 = vld [vmem:[%s1765] sm:$0xff]
  %1768 = vset.pattern.permute.xlu0 0
  %1769 = vperm.xlu0 %1768, %v1766
  %v1770 = vpop.permute.xlu0 %1769
  %v1772 = vmul.f32 %v1694, %v1770
  %v1773 = vmul.f32 %v1698, %v1770
  %1776 = vrot.lane.b32.xlu0 %v1772, 127
  %v1777 = vpop.permute.xlu0 %1776
  %1778 = vrot.lane.b32.xlu0 %v1773, 127
  %v1779 = vpop.permute.xlu0 %1778
  %v1782 = vadd.f32 %v1763, %v1777
  %v1783 = vadd.f32 %v1764, %v1779
  %s1784 = scalar_lea.vmem %s3, 536
  %v1785 = vld [vmem:[%s1784] sm:$0xff]
  %1787 = vset.pattern.permute.xlu0 0
  %1788 = vperm.xlu0 %1787, %v1785
  %v1789 = vpop.permute.xlu0 %1788
  %v1791 = vmul.f32 %v1713, %v1789
  %v1792 = vmul.f32 %v1717, %v1789
  %1795 = vrot.lane.b32.xlu0 %v1791, 127
  %v1796 = vpop.permute.xlu0 %1795
  %1797 = vrot.lane.b32.xlu0 %v1792, 127
  %v1798 = vpop.permute.xlu0 %1797
  %v1801 = vadd.f32 %v1782, %v1796
  %v1802 = vadd.f32 %v1783, %v1798
  %s1803 = scalar_lea.vmem %s3, 544
  %v1804 = vld [vmem:[%s1803] sm:$0xff]
  %1806 = vset.pattern.permute.xlu0 0
  %1807 = vperm.xlu0 %1806, %v1804
  %v1808 = vpop.permute.xlu0 %1807
  %v1810 = vmul.f32 %v1658, %v1808
  %v1811 = vmul.f32 %v1662, %v1808
  %1814 = vrot.lane.b32.xlu0 %v1810, 126
  %v1815 = vpop.permute.xlu0 %1814
  %1816 = vrot.lane.b32.xlu0 %v1811, 126
  %v1817 = vpop.permute.xlu0 %1816
  %v1820 = vadd.f32 %v1801, %v1815
  %v1821 = vadd.f32 %v1802, %v1817
  %s1822 = scalar_lea.vmem %s3, 552
  %v1823 = vld [vmem:[%s1822] sm:$0xff]
  %1825 = vset.pattern.permute.xlu0 0
  %1826 = vperm.xlu0 %1825, %v1823
  %v1827 = vpop.permute.xlu0 %1826
  %v1829 = vmul.f32 %v1675, %v1827
  %v1830 = vmul.f32 %v1679, %v1827
  %1833 = vrot.lane.b32.xlu0 %v1829, 126
  %v1834 = vpop.permute.xlu0 %1833
  %1835 = vrot.lane.b32.xlu0 %v1830, 126
  %v1836 = vpop.permute.xlu0 %1835
  %v1839 = vadd.f32 %v1820, %v1834
  %v1840 = vadd.f32 %v1821, %v1836
  %s1841 = scalar_lea.vmem %s3, 560
  %v1842 = vld [vmem:[%s1841] sm:$0xff]
  %1844 = vset.pattern.permute.xlu0 0
  %1845 = vperm.xlu0 %1844, %v1842
  %v1846 = vpop.permute.xlu0 %1845
  %v1848 = vmul.f32 %v1694, %v1846
  %v1849 = vmul.f32 %v1698, %v1846
  %1852 = vrot.lane.b32.xlu0 %v1848, 126
  %v1853 = vpop.permute.xlu0 %1852
  %1854 = vrot.lane.b32.xlu0 %v1849, 126
  %v1855 = vpop.permute.xlu0 %1854
  %v1858 = vadd.f32 %v1839, %v1853
  %v1859 = vadd.f32 %v1840, %v1855
  %s1860 = scalar_lea.vmem %s3, 568
  %v1861 = vld [vmem:[%s1860] sm:$0xff]
  %1863 = vset.pattern.permute.xlu0 0
  %1864 = vperm.xlu0 %1863, %v1861
  %v1865 = vpop.permute.xlu0 %1864
  %v1867 = vmul.f32 %v1713, %v1865
  %v1868 = vmul.f32 %v1717, %v1865
  %1871 = vrot.lane.b32.xlu0 %v1867, 126
  %v1872 = vpop.permute.xlu0 %1871
  %1873 = vrot.lane.b32.xlu0 %v1868, 126
  %v1874 = vpop.permute.xlu0 %1873
  %v1877 = vadd.f32 %v1858, %v1872
  %v1878 = vadd.f32 %v1859, %v1874
  %s1879 = scalar_lea.vmem %s4, 40
  %v1880 = vld [vmem:[%s1879] sm:$0xff]
  %1882 = vset.pattern.permute.xlu0 0
  %1883 = vperm.xlu0 %1882, %v1880
  %v1884 = vpop.permute.xlu0 %1883
  %v1886 = vadd.f32 %v1877, %v1884
  %v1887 = vadd.f32 %v1878, %v1884
  %vm1888 = vcmp.gt.f32.partialorder %v1886, 0.0
  %vm1889 = vcmp.gt.f32.partialorder %v1887, 0.0
  %v1890 = vmin.f32 %v1886, 0.0
  %v1891 = vmin.f32 %v1887, 0.0
  %v1892 = vmul.f32 %v1890, 1.442695
  %v1893 = vpow.pop %v1892
  %v1894 = vmul.f32 %v1891, 1.442695
  %v1895 = vpow.pop %v1894
  %v1896 = vsub.f32 %v1893, 1.0
  %v1897 = vsub.f32 %v1895, 1.0
  %v1898 = vsel %vm1888, %v1886, %v1896
  %v1899 = vsel %vm1889, %v1887, %v1897
  %1902 = vrot.lane.b32.xlu0 %v1898, 127
  %v1903 = vpop.permute.xlu0 %1902
  %1904 = vrot.lane.b32.xlu0 %v1899, 127
  %v1905 = vpop.permute.xlu0 %1904
  %v1908 = vmax.f32 %v1898, %v1903
  %v1909 = vmax.f32 %v1899, %v1905
  %s1910 = scalar_lea.vmem %s0, 12
  %v1911 = vld [vmem:[%s1910] sm:$0x3]
  %v1914 = vunpack.c.l.s4 1966171168
  %v1915 = vunpack.c.0.s8 %v1914
  %v1916 = vlaneseq
  %v1917 = vshrl.u32 %v1916, 7
  %v1918 = vsub.s32 %v1915, %v1917
  %v1919 = vrot.slane %v1911, %v1918
  %v1920 = vcombine.high %v1919, %v1919
  %v1922 = vunpack.c.l.s4 1966171168
  %v1923 = vunpack.c.0.s8 %v1922
  %v1924 = vlaneseq
  %v1925 = vshrl.u32 %v1924, 7
  %v1926 = vsub.s32 %v1923, %v1925
  %v1927 = vrot.slane %v1919, %v1926
  %v1929 = vunpack.c.l.s4 1966171168
  %v1930 = vunpack.c.0.s8 %v1929
  %v1931 = vlaneseq
  %v1932 = vshrl.u32 %v1931, 7
  %v1933 = vsub.s32 %v1930, %v1932
  %v1934 = vrot.slane %v1920, %v1933
  %s1935 = scalar_lea.vmem %s1, 72
  %v1936 = vld [vmem:[%s1935] sm:$0xf]
  %v1937 = vlaneseq
  %v1938 = vshrl.u32 %v1937, 7
  %v1939 = vsub.s32 0, %v1938
  %v1940 = vrot.slane %v1927, %v1939
  %v1941 = vlaneseq
  %v1942 = vshrl.u32 %v1941, 7
  %v1943 = vsub.s32 0, %v1942
  %v1944 = vrot.slane %v1934, %v1943
  %1948 = vset.pattern.permute.xlu0 0
  %1949 = vperm.xlu0 %1948, %v1936
  %v1950 = vpop.permute.xlu0 %1949
  %v1952 = vmul.f32 %v1940, %v1950
  %v1953 = vmul.f32 %v1944, %v1950
  %s1954 = scalar_lea.vmem %s1, 76
  %v1955 = vld [vmem:[%s1954] sm:$0xf]
  %1957 = vset.pattern.permute.xlu0 0
  %1958 = vperm.xlu0 %1957, %v1955
  %v1959 = vpop.permute.xlu0 %1958
  %v1961 = vmul.f32 %v1940, %v1959
  %v1962 = vmul.f32 %v1944, %v1959
  %1965 = vrot.lane.b32.xlu0 %v1961, 127
  %v1966 = vpop.permute.xlu0 %1965
  %1967 = vrot.lane.b32.xlu0 %v1962, 127
  %v1968 = vpop.permute.xlu0 %1967
  %v1971 = vadd.f32 %v1952, %v1966
  %v1972 = vadd.f32 %v1953, %v1968
  %s1973 = scalar_lea.vmem %s1, 80
  %v1974 = vld [vmem:[%s1973] sm:$0xf]
  %1976 = vset.pattern.permute.xlu0 0
  %1977 = vperm.xlu0 %1976, %v1974
  %v1978 = vpop.permute.xlu0 %1977
  %v1980 = vmul.f32 %v1940, %v1978
  %v1981 = vmul.f32 %v1944, %v1978
  %1984 = vrot.lane.b32.xlu0 %v1980, 126
  %v1985 = vpop.permute.xlu0 %1984
  %1986 = vrot.lane.b32.xlu0 %v1981, 126
  %v1987 = vpop.permute.xlu0 %1986
  %v1990 = vadd.f32 %v1971, %v1985
  %v1991 = vadd.f32 %v1972, %v1987
  %s1992 = scalar_lea.vmem %s2, 24
  %v1993 = vld [vmem:[%s1992] sm:$0xf]
  %1995 = vset.pattern.permute.xlu0 0
  %1996 = vperm.xlu0 %1995, %v1993
  %v1997 = vpop.permute.xlu0 %1996
  %v1999 = vadd.f32 %v1990, %v1997
  %v2000 = vadd.f32 %v1991, %v1997
  %vm2001 = vcmp.gt.f32.partialorder %v1999, 0.0
  %vm2002 = vcmp.gt.f32.partialorder %v2000, 0.0
  %v2003 = vmin.f32 %v1999, 0.0
  %v2004 = vmin.f32 %v2000, 0.0
  %v2005 = vmul.f32 %v2003, 1.442695
  %v2006 = vpow.pop %v2005
  %v2007 = vmul.f32 %v2004, 1.442695
  %v2008 = vpow.pop %v2007
  %v2009 = vsub.f32 %v2006, 1.0
  %v2010 = vsub.f32 %v2008, 1.0
  %v2011 = vsel %vm2001, %v1999, %v2009
  %v2012 = vsel %vm2002, %v2000, %v2010
  %s2013 = scalar_lea.vmem %s3, 576
  %v2014 = vld [vmem:[%s2013] sm:$0xff]
  %v2015 = vlaneseq
  %v2016 = vshrl.u32 %v2015, 7
  %v2017 = vsub.s32 0, %v2016
  %v2018 = vrot.slane %v2011, %v2017
  %v2019 = vlaneseq
  %v2020 = vshrl.u32 %v2019, 7
  %v2021 = vsub.s32 0, %v2020
  %v2022 = vrot.slane %v2012, %v2021
  %2024 = vset.pattern.permute.xlu0 0
  %2025 = vperm.xlu0 %2024, %v2014
  %v2026 = vpop.permute.xlu0 %2025
  %v2028 = vmul.f32 %v2018, %v2026
  %v2029 = vmul.f32 %v2022, %v2026
  %s2030 = scalar_lea.vmem %s3, 584
  %v2031 = vld [vmem:[%s2030] sm:$0xff]
  %v2032 = vlaneseq
  %v2033 = vshrl.u32 %v2032, 7
  %v2034 = vsub.s32 1, %v2033
  %v2035 = vrot.slane %v2011, %v2034
  %v2036 = vlaneseq
  %v2037 = vshrl.u32 %v2036, 7
  %v2038 = vsub.s32 1, %v2037
  %v2039 = vrot.slane %v2012, %v2038
  %2041 = vset.pattern.permute.xlu0 0
  %2042 = vperm.xlu0 %2041, %v2031
  %v2043 = vpop.permute.xlu0 %2042
  %v2045 = vmul.f32 %v2035, %v2043
  %v2046 = vmul.f32 %v2039, %v2043
  %v2047 = vadd.f32 %v2028, %v2045
  %v2048 = vadd.f32 %v2029, %v2046
  %s2049 = scalar_lea.vmem %s3, 592
  %v2050 = vld [vmem:[%s2049] sm:$0xff]
  %v2051 = vlaneseq
  %v2052 = vshrl.u32 %v2051, 7
  %v2053 = vsub.s32 2, %v2052
  %v2054 = vrot.slane %v2011, %v2053
  %v2055 = vlaneseq
  %v2056 = vshrl.u32 %v2055, 7
  %v2057 = vsub.s32 2, %v2056
  %v2058 = vrot.slane %v2012, %v2057
  %2060 = vset.pattern.permute.xlu0 0
  %2061 = vperm.xlu0 %2060, %v2050
  %v2062 = vpop.permute.xlu0 %2061
  %v2064 = vmul.f32 %v2054, %v2062
  %v2065 = vmul.f32 %v2058, %v2062
  %v2066 = vadd.f32 %v2047, %v2064
  %v2067 = vadd.f32 %v2048, %v2065
  %s2068 = scalar_lea.vmem %s3, 600
  %v2069 = vld [vmem:[%s2068] sm:$0xff]
  %v2070 = vlaneseq
  %v2071 = vshrl.u32 %v2070, 7
  %v2072 = vsub.s32 3, %v2071
  %v2073 = vrot.slane %v2011, %v2072
  %v2074 = vlaneseq
  %v2075 = vshrl.u32 %v2074, 7
  %v2076 = vsub.s32 3, %v2075
  %v2077 = vrot.slane %v2012, %v2076
  %2079 = vset.pattern.permute.xlu0 0
  %2080 = vperm.xlu0 %2079, %v2069
  %v2081 = vpop.permute.xlu0 %2080
  %v2083 = vmul.f32 %v2073, %v2081
  %v2084 = vmul.f32 %v2077, %v2081
  %v2085 = vadd.f32 %v2066, %v2083
  %v2086 = vadd.f32 %v2067, %v2084
  %s2087 = scalar_lea.vmem %s3, 608
  %v2088 = vld [vmem:[%s2087] sm:$0xff]
  %2090 = vset.pattern.permute.xlu0 0
  %2091 = vperm.xlu0 %2090, %v2088
  %v2092 = vpop.permute.xlu0 %2091
  %v2094 = vmul.f32 %v2018, %v2092
  %v2095 = vmul.f32 %v2022, %v2092
  %2098 = vrot.lane.b32.xlu0 %v2094, 127
  %v2099 = vpop.permute.xlu0 %2098
  %2100 = vrot.lane.b32.xlu0 %v2095, 127
  %v2101 = vpop.permute.xlu0 %2100
  %v2104 = vadd.f32 %v2085, %v2099
  %v2105 = vadd.f32 %v2086, %v2101
  %s2106 = scalar_lea.vmem %s3, 616
  %v2107 = vld [vmem:[%s2106] sm:$0xff]
  %2109 = vset.pattern.permute.xlu0 0
  %2110 = vperm.xlu0 %2109, %v2107
  %v2111 = vpop.permute.xlu0 %2110
  %v2113 = vmul.f32 %v2035, %v2111
  %v2114 = vmul.f32 %v2039, %v2111
  %2117 = vrot.lane.b32.xlu0 %v2113, 127
  %v2118 = vpop.permute.xlu0 %2117
  %2119 = vrot.lane.b32.xlu0 %v2114, 127
  %v2120 = vpop.permute.xlu0 %2119
  %v2123 = vadd.f32 %v2104, %v2118
  %v2124 = vadd.f32 %v2105, %v2120
  %s2125 = scalar_lea.vmem %s3, 624
  %v2126 = vld [vmem:[%s2125] sm:$0xff]
  %2128 = vset.pattern.permute.xlu0 0
  %2129 = vperm.xlu0 %2128, %v2126
  %v2130 = vpop.permute.xlu0 %2129
  %v2132 = vmul.f32 %v2054, %v2130
  %v2133 = vmul.f32 %v2058, %v2130
  %2136 = vrot.lane.b32.xlu0 %v2132, 127
  %v2137 = vpop.permute.xlu0 %2136
  %2138 = vrot.lane.b32.xlu0 %v2133, 127
  %v2139 = vpop.permute.xlu0 %2138
  %v2142 = vadd.f32 %v2123, %v2137
  %v2143 = vadd.f32 %v2124, %v2139
  %s2144 = scalar_lea.vmem %s3, 632
  %v2145 = vld [vmem:[%s2144] sm:$0xff]
  %2147 = vset.pattern.permute.xlu0 0
  %2148 = vperm.xlu0 %2147, %v2145
  %v2149 = vpop.permute.xlu0 %2148
  %v2151 = vmul.f32 %v2073, %v2149
  %v2152 = vmul.f32 %v2077, %v2149
  %2155 = vrot.lane.b32.xlu0 %v2151, 127
  %v2156 = vpop.permute.xlu0 %2155
  %2157 = vrot.lane.b32.xlu0 %v2152, 127
  %v2158 = vpop.permute.xlu0 %2157
  %v2161 = vadd.f32 %v2142, %v2156
  %v2162 = vadd.f32 %v2143, %v2158
  %s2163 = scalar_lea.vmem %s4, 48
  %v2164 = vld [vmem:[%s2163] sm:$0xff]
  %2166 = vset.pattern.permute.xlu0 0
  %2167 = vperm.xlu0 %2166, %v2164
  %v2168 = vpop.permute.xlu0 %2167
  %v2170 = vadd.f32 %v2161, %v2168
  %v2171 = vadd.f32 %v2162, %v2168
  %vm2172 = vcmp.gt.f32.partialorder %v2170, 0.0
  %vm2173 = vcmp.gt.f32.partialorder %v2171, 0.0
  %v2174 = vmin.f32 %v2170, 0.0
  %v2175 = vmin.f32 %v2171, 0.0
  %v2176 = vmul.f32 %v2174, 1.442695
  %v2177 = vpow.pop %v2176
  %v2178 = vmul.f32 %v2175, 1.442695
  %v2179 = vpow.pop %v2178
  %v2180 = vsub.f32 %v2177, 1.0
  %v2181 = vsub.f32 %v2179, 1.0
  %v2182 = vsel %vm2172, %v2170, %v2180
  %v2183 = vsel %vm2173, %v2171, %v2181
  %2186 = vrot.lane.b32.xlu0 %v2182, 127
  %v2187 = vpop.permute.xlu0 %2186
  %2188 = vrot.lane.b32.xlu0 %v2183, 127
  %v2189 = vpop.permute.xlu0 %2188
  %v2192 = vmax.f32 %v2182, %v2187
  %v2193 = vmax.f32 %v2183, %v2189
  %2196 = vrot.lane.b32.xlu0 %v658, 12
  %v2197 = vpop.permute.xlu0 %2196
  %2198 = vrot.lane.b32.xlu0 %v659, 12
  %v2199 = vpop.permute.xlu0 %2198
  %2204 = vrot.lane.b32.xlu0 %v942, 24
  %v2205 = vpop.permute.xlu0 %2204
  %2206 = vrot.lane.b32.xlu0 %v943, 24
  %v2207 = vpop.permute.xlu0 %2206
  %2212 = vrot.lane.b32.xlu0 %v1283, 36
  %v2213 = vpop.permute.xlu0 %2212
  %2214 = vrot.lane.b32.xlu0 %v1284, 36
  %v2215 = vpop.permute.xlu0 %2214
  %2220 = vrot.lane.b32.xlu0 %v1567, 48
  %v2221 = vpop.permute.xlu0 %2220
  %2222 = vrot.lane.b32.xlu0 %v1568, 48
  %v2223 = vpop.permute.xlu0 %2222
  %2228 = vrot.lane.b32.xlu0 %v1908, 60
  %v2229 = vpop.permute.xlu0 %2228
  %2230 = vrot.lane.b32.xlu0 %v1909, 60
  %v2231 = vpop.permute.xlu0 %2230
  %2236 = vrot.lane.b32.xlu0 %v2192, 72
  %v2237 = vpop.permute.xlu0 %2236
  %2238 = vrot.lane.b32.xlu0 %v2193, 72
  %v2239 = vpop.permute.xlu0 %2238
  %vm2242 = vcmask 97280
  %v2243 = vsel %vm2242, %v317, %v2197
  %v2244 = vsel %vm2242, %v318, %v2199
  %vm2245 = vcmask 195584
  %v2246 = vsel %vm2245, %v2243, %v2205
  %v2247 = vsel %vm2245, %v2244, %v2207
  %vm2248 = vcmask 293888
  %v2249 = vsel %vm2248, %v2246, %v2213
  %v2250 = vsel %vm2248, %v2247, %v2215
  %vm2251 = vcmask 392192
  %v2252 = vsel %vm2251, %v2249, %v2221
  %v2253 = vsel %vm2251, %v2250, %v2223
  %vm2254 = vcmask 490496
  %v2255 = vsel %vm2254, %v2252, %v2229
  %v2256 = vsel %vm2254, %v2253, %v2231
  %vm2257 = vcmask 588800
  %v2258 = vsel %vm2257, %v2255, %v2237
  %v2259 = vsel %vm2257, %v2256, %v2239
  %v2262 = vrot.slane %v2258, 1
  %v2263 = vrot.slane %v2259, 1
  %2264 = vrot.lane.b32.xlu0 %v2262, 84
  %v2265 = vpop.permute.xlu0 %2264
  %2266 = vrot.lane.b32.xlu0 %v2263, 84
  %v2267 = vpop.permute.xlu0 %2266
  %v2270 = vrot.slane %v2258, 2
  %v2271 = vrot.slane %v2259, 2
  %2272 = vrot.lane.b32.xlu0 %v2270, 40
  %v2273 = vpop.permute.xlu0 %2272
  %2274 = vrot.lane.b32.xlu0 %v2271, 40
  %v2275 = vpop.permute.xlu0 %2274
  %v2278 = vrot.slane %v2258, 3
  %v2279 = vrot.slane %v2259, 3
  %2280 = vrot.lane.b32.xlu0 %v2278, 124
  %v2281 = vpop.permute.xlu0 %2280
  %2282 = vrot.lane.b32.xlu0 %v2279, 124
  %v2283 = vpop.permute.xlu0 %2282
  %v2286 = vrot.slane %v2258, 4
  %v2287 = vrot.slane %v2259, 4
  %2288 = vrot.lane.b32.xlu0 %v2286, 80
  %v2289 = vpop.permute.xlu0 %2288
  %2290 = vrot.lane.b32.xlu0 %v2287, 80
  %v2291 = vpop.permute.xlu0 %2290
  %v2294 = vrot.slane %v2258, 5
  %v2295 = vrot.slane %v2259, 5
  %2296 = vrot.lane.b32.xlu0 %v2294, 36
  %v2297 = vpop.permute.xlu0 %2296
  %2298 = vrot.lane.b32.xlu0 %v2295, 36
  %v2299 = vpop.permute.xlu0 %2298
  %v2302 = vrot.slane %v2258, 6
  %v2303 = vrot.slane %v2259, 6
  %2304 = vrot.lane.b32.xlu0 %v2302, 120
  %v2305 = vpop.permute.xlu0 %2304
  %2306 = vrot.lane.b32.xlu0 %v2303, 120
  %v2307 = vpop.permute.xlu0 %2306
  %v2310 = vrot.slane %v2258, 7
  %v2311 = vrot.slane %v2259, 7
  %2312 = vrot.lane.b32.xlu0 %v2310, 76
  %v2313 = vpop.permute.xlu0 %2312
  %2314 = vrot.lane.b32.xlu0 %v2311, 76
  %v2315 = vpop.permute.xlu0 %2314
  %vm2318 = vcmask 687104
  %v2319 = vsel %vm2318, %v2258, %v2265
  %v2320 = vsel %vm2318, %v2259, %v2267
  %vm2321 = vcmask 326656
  %v2322 = vsel %vm2321, %v2265, %v2273
  %v2323 = vsel %vm2321, %v2267, %v2275
  %vm2324 = vcmask 1014784
  %v2325 = vsel %vm2324, %v2322, %v2281
  %v2326 = vsel %vm2324, %v2323, %v2283
  %vm2327 = vcmask 654336
  %v2328 = vsel %vm2327, %v2281, %v2289
  %v2329 = vsel %vm2327, %v2283, %v2291
  %v2330 = vsel %vm2248, %v2289, %v2297
  %v2331 = vsel %vm2248, %v2291, %v2299
  %vm2332 = vcmask 982016
  %v2333 = vsel %vm2332, %v2330, %v2305
  %v2334 = vsel %vm2332, %v2331, %v2307
  %vm2335 = vcmask 621568
  %v2336 = vsel %vm2335, %v2305, %v2313
  %v2337 = vsel %vm2335, %v2307, %v2315
  %v2338 = vld [vmem:[%s5] sm:$0xff]
  %v2339 = vld [vmem:[%s5 + $0x8] sm:$0xff]
  %v2340 = vld [vmem:[%s5 + $0x10] sm:$0xff]
  %v2341 = vld [vmem:[%s5 + $0x18] sm:$0xff]
  %v2342 = vld [vmem:[%s5 + $0x20] sm:$0xff]
  %v2343 = vld [vmem:[%s5 + $0x28] sm:$0xff]
  %v2344 = vld [vmem:[%s5 + $0x30] sm:$0xff]
  %v2345 = vld [vmem:[%s5 + $0x38] sm:$0xff]
  %v2346 = vld [vmem:[%s5 + $0x40] sm:$0xff]
  %v2347 = vld [vmem:[%s5 + $0x48] sm:$0xff]
  %v2348 = vld [vmem:[%s5 + $0x50] sm:$0xff]
  %v2349 = vld [vmem:[%s5 + $0x58] sm:$0xff]
  %v2350 = vld [vmem:[%s5 + $0x60] sm:$0xff]
  %v2351 = vld [vmem:[%s5 + $0x68] sm:$0xff]
  %v2352 = vld [vmem:[%s5 + $0x70] sm:$0xff]
  %v2353 = vld [vmem:[%s5 + $0x78] sm:$0xff]
  %v2354 = vld [vmem:[%s5 + $0x80] sm:$0xff]
  %v2355 = vld [vmem:[%s5 + $0x88] sm:$0xff]
  %v2356 = vld [vmem:[%s5 + $0x90] sm:$0xff]
  %v2357 = vld [vmem:[%s5 + $0x98] sm:$0xff]
  %v2358 = vld [vmem:[%s5 + $0xa0] sm:$0xff]
  %v2359 = vld [vmem:[%s5 + $0xa8] sm:$0xff]
  %v2360 = vld [vmem:[%s5 + $0xb0] sm:$0xff]
  %v2361 = vld [vmem:[%s5 + $0xb8] sm:$0xff]
  %v2362 = vld [vmem:[%s5 + $0xc0] sm:$0xff]
  %v2363 = vld [vmem:[%s5 + $0xc8] sm:$0xff]
  %v2364 = vld [vmem:[%s5 + $0xd0] sm:$0xff]
  %v2365 = vld [vmem:[%s5 + $0xd8] sm:$0xff]
  %v2366 = vld [vmem:[%s5 + $0xe0] sm:$0xff]
  %v2367 = vld [vmem:[%s5 + $0xe8] sm:$0xff]
  %v2368 = vld [vmem:[%s5 + $0xf0] sm:$0xff]
  %v2369 = vld [vmem:[%s5 + $0xf8] sm:$0xff]
  %v2370 = vld [vmem:[%s5 + $0x100] sm:$0xff]
  %v2371 = vld [vmem:[%s5 + $0x108] sm:$0xff]
  %v2372 = vld [vmem:[%s5 + $0x110] sm:$0xff]
  %v2373 = vld [vmem:[%s5 + $0x118] sm:$0xff]
  %v2374 = vld [vmem:[%s5 + $0x120] sm:$0xff]
  %v2375 = vld [vmem:[%s5 + $0x128] sm:$0xff]
  %v2376 = vld [vmem:[%s5 + $0x130] sm:$0xff]
  %v2377 = vld [vmem:[%s5 + $0x138] sm:$0xff]
  %v2378 = vld [vmem:[%s5 + $0x140] sm:$0xff]
  %v2379 = vld [vmem:[%s5 + $0x148] sm:$0xff]
  %v2380 = vld [vmem:[%s5 + $0x150] sm:$0xff]
  %v2381 = vld [vmem:[%s5 + $0x158] sm:$0xff]
  %v2382 = vld [vmem:[%s5 + $0x160] sm:$0xff]
  %v2383 = vld [vmem:[%s5 + $0x168] sm:$0xff]
  %v2384 = vld [vmem:[%s5 + $0x170] sm:$0xff]
  %v2385 = vld [vmem:[%s5 + $0x178] sm:$0xff]
  %v2386 = vld [vmem:[%s5 + $0x180] sm:$0xff]
  %v2387 = vld [vmem:[%s5 + $0x188] sm:$0xff]
  %v2388 = vld [vmem:[%s5 + $0x190] sm:$0xff]
  %v2389 = vld [vmem:[%s5 + $0x198] sm:$0xff]
  %v2390 = vld [vmem:[%s5 + $0x1a0] sm:$0xff]
  %v2391 = vld [vmem:[%s5 + $0x1a8] sm:$0xff]
  %v2392 = vld [vmem:[%s5 + $0x1b0] sm:$0xff]
  %v2393 = vld [vmem:[%s5 + $0x1b8] sm:$0xff]
  %v2394 = vld [vmem:[%s5 + $0x1c0] sm:$0xff]
  %v2395 = vld [vmem:[%s5 + $0x1c8] sm:$0xff]
  %v2396 = vld [vmem:[%s5 + $0x1d0] sm:$0xff]
  %v2397 = vld [vmem:[%s5 + $0x1d8] sm:$0xff]
  %v2398 = vld [vmem:[%s5 + $0x1e0] sm:$0xff]
  %v2399 = vld [vmem:[%s5 + $0x1e8] sm:$0xff]
  %v2400 = vld [vmem:[%s5 + $0x1f0] sm:$0xff]
  %v2401 = vld [vmem:[%s5 + $0x1f8] sm:$0xff]
  %v2402 = vld [vmem:[%s5 + $0x200] sm:$0xff]
  %v2403 = vld [vmem:[%s5 + $0x208] sm:$0xff]
  %v2404 = vld [vmem:[%s5 + $0x210] sm:$0xff]
  %v2405 = vld [vmem:[%s5 + $0x218] sm:$0xff]
  %v2406 = vld [vmem:[%s5 + $0x220] sm:$0xff]
  %v2407 = vld [vmem:[%s5 + $0x228] sm:$0xff]
  %v2408 = vld [vmem:[%s5 + $0x230] sm:$0xff]
  %v2409 = vld [vmem:[%s5 + $0x238] sm:$0xff]
  %v2410 = vld [vmem:[%s5 + $0x240] sm:$0xff]
  %v2411 = vld [vmem:[%s5 + $0x248] sm:$0xff]
  %v2412 = vld [vmem:[%s5 + $0x250] sm:$0xff]
  %v2413 = vld [vmem:[%s5 + $0x258] sm:$0xff]
  %v2414 = vld [vmem:[%s5 + $0x260] sm:$0xff]
  %v2415 = vld [vmem:[%s5 + $0x268] sm:$0xff]
  %v2416 = vld [vmem:[%s5 + $0x270] sm:$0xff]
  %v2417 = vld [vmem:[%s5 + $0x278] sm:$0xff]
  %v2418 = vld [vmem:[%s5 + $0x280] sm:$0xff]
  %v2419 = vld [vmem:[%s5 + $0x288] sm:$0xff]
  %v2420 = vld [vmem:[%s5 + $0x290] sm:$0xff]
  %v2421 = vld [vmem:[%s5 + $0x298] sm:$0xff]
  %v2422 = vld [vmem:[%s5 + $0x2a0] sm:$0xff]
  %v2423 = vld [vmem:[%s5 + $0x2a8] sm:$0xff]
  %v2424 = vld [vmem:[%s5 + $0x2b0] sm:$0xff]
  %v2425 = vld [vmem:[%s5 + $0x2b8] sm:$0xff]
  %v2426 = vld [vmem:[%s5 + $0x2c0] sm:$0xff]
  %v2427 = vld [vmem:[%s5 + $0x2c8] sm:$0xff]
  %v2428 = vld [vmem:[%s5 + $0x2d0] sm:$0xff]
  %v2429 = vld [vmem:[%s5 + $0x2d8] sm:$0xff]
  %v2430 = vld [vmem:[%s5 + $0x2e0] sm:$0xff]
  %v2431 = vld [vmem:[%s5 + $0x2e8] sm:$0xff]
  %v2432 = vld [vmem:[%s5 + $0x2f0] sm:$0xff]
  %v2433 = vld [vmem:[%s5 + $0x2f8] sm:$0xff]
  %v2434 = vld [vmem:[%s5 + $0x300] sm:$0xff]
  %v2435 = vld [vmem:[%s5 + $0x308] sm:$0xff]
  %v2436 = vld [vmem:[%s5 + $0x310] sm:$0xff]
  %v2437 = vld [vmem:[%s5 + $0x318] sm:$0xff]
  %v2438 = vld [vmem:[%s5 + $0x320] sm:$0xff]
  %v2439 = vld [vmem:[%s5 + $0x328] sm:$0xff]
  %v2440 = vld [vmem:[%s5 + $0x330] sm:$0xff]
  %v2441 = vld [vmem:[%s5 + $0x338] sm:$0xff]
  %v2442 = vld [vmem:[%s5 + $0x340] sm:$0xff]
  %v2443 = vld [vmem:[%s5 + $0x348] sm:$0xff]
  %v2444 = vld [vmem:[%s5 + $0x350] sm:$0xff]
  %v2445 = vld [vmem:[%s5 + $0x358] sm:$0xff]
  %v2446 = vld [vmem:[%s5 + $0x360] sm:$0xff]
  %v2447 = vld [vmem:[%s5 + $0x368] sm:$0xff]
  %v2448 = vld [vmem:[%s5 + $0x370] sm:$0xff]
  %v2449 = vld [vmem:[%s5 + $0x378] sm:$0xff]
  %v2450 = vld [vmem:[%s5 + $0x380] sm:$0xff]
  %v2451 = vld [vmem:[%s5 + $0x388] sm:$0xff]
  %v2452 = vld [vmem:[%s5 + $0x390] sm:$0xff]
  %v2453 = vld [vmem:[%s5 + $0x398] sm:$0xff]
  %v2454 = vld [vmem:[%s5 + $0x3a0] sm:$0xff]
  %v2455 = vld [vmem:[%s5 + $0x3a8] sm:$0xff]
  %v2456 = vld [vmem:[%s5 + $0x3b0] sm:$0xff]
  %v2457 = vld [vmem:[%s5 + $0x3b8] sm:$0xff]
  %v2458 = vld [vmem:[%s5 + $0x3c0] sm:$0xff]
  %v2459 = vld [vmem:[%s5 + $0x3c8] sm:$0xff]
  %v2460 = vld [vmem:[%s5 + $0x3d0] sm:$0xff]
  %v2461 = vld [vmem:[%s5 + $0x3d8] sm:$0xff]
  %v2462 = vld [vmem:[%s5 + $0x3e0] sm:$0xff]
  %v2463 = vld [vmem:[%s5 + $0x3e8] sm:$0xff]
  %v2464 = vld [vmem:[%s5 + $0x3f0] sm:$0xff]
  %v2465 = vld [vmem:[%s5 + $0x3f8] sm:$0xff]
  %v2466 = vld [vmem:[%s5 + $0x400] sm:$0xff]
  %v2467 = vld [vmem:[%s5 + $0x408] sm:$0xff]
  %v2468 = vld [vmem:[%s5 + $0x410] sm:$0xff]
  %v2469 = vld [vmem:[%s5 + $0x418] sm:$0xff]
  %v2470 = vld [vmem:[%s5 + $0x420] sm:$0xff]
  %v2471 = vld [vmem:[%s5 + $0x428] sm:$0xff]
  %v2472 = vld [vmem:[%s5 + $0x430] sm:$0xff]
  %v2473 = vld [vmem:[%s5 + $0x438] sm:$0xff]
  %v2474 = vld [vmem:[%s5 + $0x440] sm:$0xff]
  %v2475 = vld [vmem:[%s5 + $0x448] sm:$0xff]
  %v2476 = vld [vmem:[%s5 + $0x450] sm:$0xff]
  %v2477 = vld [vmem:[%s5 + $0x458] sm:$0xff]
  %v2478 = vld [vmem:[%s5 + $0x460] sm:$0xff]
  %v2479 = vld [vmem:[%s5 + $0x468] sm:$0xff]
  %v2480 = vld [vmem:[%s5 + $0x470] sm:$0xff]
  %v2481 = vld [vmem:[%s5 + $0x478] sm:$0xff]
  %v2482 = vld [vmem:[%s5 + $0x480] sm:$0xff]
  %v2483 = vld [vmem:[%s5 + $0x488] sm:$0xff]
  %v2484 = vld [vmem:[%s5 + $0x490] sm:$0xff]
  %v2485 = vld [vmem:[%s5 + $0x498] sm:$0xff]
  %v2486 = vld [vmem:[%s5 + $0x4a0] sm:$0xff]
  %v2487 = vld [vmem:[%s5 + $0x4a8] sm:$0xff]
  %v2488 = vld [vmem:[%s5 + $0x4b0] sm:$0xff]
  %v2489 = vld [vmem:[%s5 + $0x4b8] sm:$0xff]
  %v2490 = vld [vmem:[%s5 + $0x4c0] sm:$0xff]
  %v2491 = vld [vmem:[%s5 + $0x4c8] sm:$0xff]
  %v2492 = vld [vmem:[%s5 + $0x4d0] sm:$0xff]
  %v2493 = vld [vmem:[%s5 + $0x4d8] sm:$0xff]
  %v2494 = vld [vmem:[%s5 + $0x4e0] sm:$0xff]
  %v2495 = vld [vmem:[%s5 + $0x4e8] sm:$0xff]
  %v2496 = vld [vmem:[%s5 + $0x4f0] sm:$0xff]
  %v2497 = vld [vmem:[%s5 + $0x4f8] sm:$0xff]
  %v2498 = vld [vmem:[%s5 + $0x500] sm:$0xff]
  %v2499 = vld [vmem:[%s5 + $0x508] sm:$0xff]
  %v2500 = vld [vmem:[%s5 + $0x510] sm:$0xff]
  %v2501 = vld [vmem:[%s5 + $0x518] sm:$0xff]
  %v2502 = vld [vmem:[%s5 + $0x520] sm:$0xff]
  %v2503 = vld [vmem:[%s5 + $0x528] sm:$0xff]
  %v2504 = vld [vmem:[%s5 + $0x530] sm:$0xff]
  %v2505 = vld [vmem:[%s5 + $0x538] sm:$0xff]
  %v2506 = vld [vmem:[%s5 + $0x540] sm:$0xff]
  %v2507 = vld [vmem:[%s5 + $0x548] sm:$0xff]
  %v2508 = vld [vmem:[%s5 + $0x550] sm:$0xff]
  %v2509 = vld [vmem:[%s5 + $0x558] sm:$0xff]
  %v2510 = vld [vmem:[%s5 + $0x560] sm:$0xff]
  %v2511 = vld [vmem:[%s5 + $0x568] sm:$0xff]
  %v2512 = vld [vmem:[%s5 + $0x570] sm:$0xff]
  %v2513 = vld [vmem:[%s5 + $0x578] sm:$0xff]
  %v2514 = vld [vmem:[%s5 + $0x580] sm:$0xff]
  %v2515 = vld [vmem:[%s5 + $0x588] sm:$0xff]
  %v2516 = vld [vmem:[%s5 + $0x590] sm:$0xff]
  %v2517 = vld [vmem:[%s5 + $0x598] sm:$0xff]
  %v2518 = vld [vmem:[%s5 + $0x5a0] sm:$0xff]
  %v2519 = vld [vmem:[%s5 + $0x5a8] sm:$0xff]
  %v2520 = vld [vmem:[%s5 + $0x5b0] sm:$0xff]
  %v2521 = vld [vmem:[%s5 + $0x5b8] sm:$0xff]
  %v2522 = vld [vmem:[%s5 + $0x5c0] sm:$0xff]
  %v2523 = vld [vmem:[%s5 + $0x5c8] sm:$0xff]
  %v2524 = vld [vmem:[%s5 + $0x5d0] sm:$0xff]
  %v2525 = vld [vmem:[%s5 + $0x5d8] sm:$0xff]
  %v2526 = vld [vmem:[%s5 + $0x5e0] sm:$0xff]
  %v2527 = vld [vmem:[%s5 + $0x5e8] sm:$0xff]
  %v2528 = vld [vmem:[%s5 + $0x5f0] sm:$0xff]
  %v2529 = vld [vmem:[%s5 + $0x5f8] sm:$0xff]
  %v2530 = vld [vmem:[%s5 + $0x600] sm:$0xff]
  %v2531 = vld [vmem:[%s5 + $0x608] sm:$0xff]
  %v2532 = vld [vmem:[%s5 + $0x610] sm:$0xff]
  %v2533 = vld [vmem:[%s5 + $0x618] sm:$0xff]
  %v2534 = vld [vmem:[%s5 + $0x620] sm:$0xff]
  %v2535 = vld [vmem:[%s5 + $0x628] sm:$0xff]
  %v2536 = vld [vmem:[%s5 + $0x630] sm:$0xff]
  %v2537 = vld [vmem:[%s5 + $0x638] sm:$0xff]
  %v2538 = vld [vmem:[%s5 + $0x640] sm:$0xff]
  %v2539 = vld [vmem:[%s5 + $0x648] sm:$0xff]
  %v2540 = vld [vmem:[%s5 + $0x650] sm:$0xff]
  %v2541 = vld [vmem:[%s5 + $0x658] sm:$0xff]
  %v2542 = vld [vmem:[%s5 + $0x660] sm:$0xff]
  %v2543 = vld [vmem:[%s5 + $0x668] sm:$0xff]
  %v2544 = vld [vmem:[%s5 + $0x670] sm:$0xff]
  %v2545 = vld [vmem:[%s5 + $0x678] sm:$0xff]
  %v2546 = vld [vmem:[%s5 + $0x680] sm:$0xff]
  %v2547 = vld [vmem:[%s5 + $0x688] sm:$0xff]
  %v2548 = vld [vmem:[%s5 + $0x690] sm:$0xff]
  %v2549 = vld [vmem:[%s5 + $0x698] sm:$0xff]
  %v2550 = vld [vmem:[%s5 + $0x6a0] sm:$0xff]
  %v2551 = vld [vmem:[%s5 + $0x6a8] sm:$0xff]
  %v2552 = vld [vmem:[%s5 + $0x6b0] sm:$0xff]
  %v2553 = vld [vmem:[%s5 + $0x6b8] sm:$0xff]
  %v2554 = vld [vmem:[%s5 + $0x6c0] sm:$0xff]
  %v2555 = vld [vmem:[%s5 + $0x6c8] sm:$0xff]
  %v2556 = vld [vmem:[%s5 + $0x6d0] sm:$0xff]
  %v2557 = vld [vmem:[%s5 + $0x6d8] sm:$0xff]
  %v2558 = vld [vmem:[%s5 + $0x6e0] sm:$0xff]
  %v2559 = vld [vmem:[%s5 + $0x6e8] sm:$0xff]
  %v2560 = vld [vmem:[%s5 + $0x6f0] sm:$0xff]
  %v2561 = vld [vmem:[%s5 + $0x6f8] sm:$0xff]
  %v2562 = vld [vmem:[%s5 + $0x700] sm:$0xff]
  %v2563 = vld [vmem:[%s5 + $0x708] sm:$0xff]
  %v2564 = vld [vmem:[%s5 + $0x710] sm:$0xff]
  %v2565 = vld [vmem:[%s5 + $0x718] sm:$0xff]
  %v2566 = vld [vmem:[%s5 + $0x720] sm:$0xff]
  %v2567 = vld [vmem:[%s5 + $0x728] sm:$0xff]
  %v2568 = vld [vmem:[%s5 + $0x730] sm:$0xff]
  %v2569 = vld [vmem:[%s5 + $0x738] sm:$0xff]
  %v2570 = vld [vmem:[%s5 + $0x740] sm:$0xff]
  %v2571 = vld [vmem:[%s5 + $0x748] sm:$0xff]
  %v2572 = vld [vmem:[%s5 + $0x750] sm:$0xff]
  %v2573 = vld [vmem:[%s5 + $0x758] sm:$0xff]
  %v2574 = vld [vmem:[%s5 + $0x760] sm:$0xff]
  %v2575 = vld [vmem:[%s5 + $0x768] sm:$0xff]
  %v2576 = vld [vmem:[%s5 + $0x770] sm:$0xff]
  %v2577 = vld [vmem:[%s5 + $0x778] sm:$0xff]
  %v2578 = vld [vmem:[%s5 + $0x780] sm:$0xff]
  %v2579 = vld [vmem:[%s5 + $0x788] sm:$0xff]
  %v2580 = vld [vmem:[%s5 + $0x790] sm:$0xff]
  %v2581 = vld [vmem:[%s5 + $0x798] sm:$0xff]
  %v2582 = vld [vmem:[%s5 + $0x7a0] sm:$0xff]
  %v2583 = vld [vmem:[%s5 + $0x7a8] sm:$0xff]
  %v2584 = vld [vmem:[%s5 + $0x7b0] sm:$0xff]
  %v2585 = vld [vmem:[%s5 + $0x7b8] sm:$0xff]
  %v2586 = vld [vmem:[%s5 + $0x7c0] sm:$0xff]
  %v2587 = vld [vmem:[%s5 + $0x7c8] sm:$0xff]
  %v2588 = vld [vmem:[%s5 + $0x7d0] sm:$0xff]
  %v2589 = vld [vmem:[%s5 + $0x7d8] sm:$0xff]
  %v2590 = vld [vmem:[%s6] sm:$0x7]
  %v2592 = vlaneseq
  %v2593 = vshrl.u32 %v2592, 7
  %v2594 = vsub.s32 0, %v2593
  %v2595 = vrot.slane %v2590, %v2594
  %v2596 = vlaneseq
  %v2597 = vshrl.u32 %v2596, 7
  %v2598 = vsub.s32 1, %v2597
  %v2599 = vrot.slane %v2590, %v2598
  %v2600 = vlaneseq
  %v2601 = vshrl.u32 %v2600, 7
  %v2602 = vsub.s32 2, %v2601
  %v2603 = vrot.slane %v2590, %v2602
  %v2617 = vrot.slane %v2320, 7
  %vm2618 = vcmask 1041409
  %v2619 = vsel %vm2618, %v2617, %v2319
  %v2620 = vrot.slane %v2326, 7
  %v2621 = vsel %vm2618, %v2620, %v2325
  %v2622 = vrot.slane %v2329, 7
  %v2623 = vsel %vm2618, %v2622, %v2328
  %v2624 = vrot.slane %v2334, 7
  %v2625 = vsel %vm2618, %v2624, %v2333
  %v2626 = vrot.slane %v2337, 7
  %v2627 = vsel %vm2618, %v2626, %v2336
  %v2628 = vrot.slane %v2315, 7
  %v2629 = vsel %vm2618, %v2628, %v2313
  %vm2635 = vcmask 261120
  %v2636 = vsel %vm2635, %v2629, 0
  %2638 = vmatprep.subr.mxu0 %v2339
  %2639 = vmatpush1.msra.mxu0 %v2338
  %2640 = vmatprep.subr.mxu0 %v2342
  %2641 = vmatpush1.msra.mxu0 %v2341
  %2642 = vmatprep.subr.mxu0 %v2345
  %2643 = vmatpush1.msra.mxu0 %v2344
  %2644 = vmatprep.subr.mxu0 %v2348
  %2645 = vmatpush1.msra.mxu0 %v2347
  %2646 = vmatprep.subr.mxu0 %v2351
  %2647 = vmatpush1.msra.mxu0 %v2350
  %2648 = vmatprep.subr.mxu0 %v2354
  %2649 = vmatpush1.msra.mxu0 %v2353
  %2650 = vmatprep.subr.mxu0 %v2357
  %2651 = vmatpush1.msra.mxu0 %v2356
  %2652 = vmatprep.subr.mxu0 %v2360
  %2653 = vmatpush1.msra.mxu0 %v2359
  %2654 = vmatprep.subr.mxu0 %v2363
  %2655 = vmatpush1.msra.mxu0 %v2362
  %2656 = vmatprep.subr.mxu0 %v2366
  %2657 = vmatpush1.msra.mxu0 %v2365
  %2658 = vmatprep.subr.mxu0 %v2369
  %2659 = vmatpush1.msra.mxu0 %v2368
  %2660 = vmatprep.subr.mxu0 %v2372
  %2661 = vmatpush1.msra.mxu0 %v2371
  %2662 = vmatprep.subr.mxu0 %v2375
  %2663 = vmatpush1.msra.mxu0 %v2374
  %2664 = vmatprep.subr.mxu0 %v2378
  %2665 = vmatpush1.msra.mxu0 %v2377
  %2666 = vmatprep.subr.mxu0 %v2381
  %2667 = vmatpush1.msra.mxu0 %v2380
  %2668 = vmatprep.subr.mxu0 %v2384
  %2669 = vmatpush1.msra.mxu0 %v2383
  %2670 = vmatprep.subr.mxu0 %v2387
  %2671 = vmatpush1.msra.mxu0 %v2386
  %2672 = vmatprep.subr.mxu0 %v2390
  %2673 = vmatpush1.msra.mxu0 %v2389
  %2674 = vmatprep.subr.mxu0 %v2393
  %2675 = vmatpush1.msra.mxu0 %v2392
  %2676 = vmatprep.subr.mxu0 %v2396
  %2677 = vmatpush1.msra.mxu0 %v2395
  %2678 = vmatprep.subr.mxu0 %v2399
  %2679 = vmatpush1.msra.mxu0 %v2398
  %2680 = vmatprep.subr.mxu0 %v2402
  %2681 = vmatpush1.msra.mxu0 %v2401
  %2682 = vmatprep.subr.mxu0 %v2405
  %2683 = vmatpush1.msra.mxu0 %v2404
  %2684 = vmatprep.subr.mxu0 %v2408
  %2685 = vmatpush1.msra.mxu0 %v2407
  %2686 = vmatprep.subr.mxu0 %v2411
  %2687 = vmatpush1.msra.mxu0 %v2410
  %2688 = vmatprep.subr.mxu0 %v2414
  %2689 = vmatpush1.msra.mxu0 %v2413
  %2690 = vmatprep.subr.mxu0 %v2417
  %2691 = vmatpush1.msra.mxu0 %v2416
  %2692 = vmatprep.subr.mxu0 %v2420
  %2693 = vmatpush1.msra.mxu0 %v2419
  %2694 = vmatprep.subr.mxu0 %v2423
  %2695 = vmatpush1.msra.mxu0 %v2422
  %2696 = vmatprep.subr.mxu0 %v2426
  %2697 = vmatpush1.msra.mxu0 %v2425
  %2698 = vmatprep.subr.mxu0 %v2429
  %2699 = vmatpush1.msra.mxu0 %v2428
  %2700 = vmatprep.subr.mxu0 %v2432
  %2701 = vmatpush1.msra.mxu0 %v2431
  %2702 = vmatprep.mubr.f32.mxu0 %v2621
  %2703 = vmatmul.mubr.f32.gmra.mrb[0].mxu0 %v2619
  %v2704 = vpop.f32.mrb[0].mxu0
  %v2705 = vadd.f32 %v2595, %v2704
  %v2706 = vpop.f32.mrb[0].mxu0
  %v2707 = vadd.f32 %v2599, %v2706
  %2708 = vdwg.mxu0
  %2709 = vmatprep.subr.mxu0 %v2435
  %2710 = vmatpush1.msra.mxu0 %v2434
  %2711 = vmatprep.subr.mxu0 %v2438
  %2712 = vmatpush1.msra.mxu0 %v2437
  %2713 = vmatprep.subr.mxu0 %v2441
  %2714 = vmatpush1.msra.mxu0 %v2440
  %2715 = vmatprep.subr.mxu0 %v2444
  %2716 = vmatpush1.msra.mxu0 %v2443
  %2717 = vmatprep.subr.mxu0 %v2447
  %2718 = vmatpush1.msra.mxu0 %v2446
  %2719 = vmatprep.subr.mxu0 %v2450
  %2720 = vmatpush1.msra.mxu0 %v2449
  %2721 = vmatprep.subr.mxu0 %v2453
  %2722 = vmatpush1.msra.mxu0 %v2452
  %2723 = vmatprep.subr.mxu0 %v2456
  %2724 = vmatpush1.msra.mxu0 %v2455
  %2725 = vmatprep.subr.mxu0 %v2459
  %2726 = vmatpush1.msra.mxu0 %v2458
  %2727 = vmatprep.subr.mxu0 %v2462
  %2728 = vmatpush1.msra.mxu0 %v2461
  %2729 = vmatprep.subr.mxu0 %v2465
  %2730 = vmatpush1.msra.mxu0 %v2464
  %2731 = vmatprep.subr.mxu0 %v2468
  %2732 = vmatpush1.msra.mxu0 %v2467
  %2733 = vmatprep.subr.mxu0 %v2471
  %2734 = vmatpush1.msra.mxu0 %v2470
  %2735 = vmatprep.subr.mxu0 %v2474
  %2736 = vmatpush1.msra.mxu0 %v2473
  %2737 = vmatprep.subr.mxu0 %v2477
  %2738 = vmatpush1.msra.mxu0 %v2476
  %2739 = vmatprep.subr.mxu0 %v2480
  %2740 = vmatpush1.msra.mxu0 %v2479
  %2741 = vmatprep.subr.mxu0 %v2483
  %2742 = vmatpush1.msra.mxu0 %v2482
  %2743 = vmatprep.subr.mxu0 %v2486
  %2744 = vmatpush1.msra.mxu0 %v2485
  %2745 = vmatprep.subr.mxu0 %v2489
  %2746 = vmatpush1.msra.mxu0 %v2488
  %2747 = vmatprep.subr.mxu0 %v2492
  %2748 = vmatpush1.msra.mxu0 %v2491
  %2749 = vmatprep.subr.mxu0 %v2495
  %2750 = vmatpush1.msra.mxu0 %v2494
  %2751 = vmatprep.subr.mxu0 %v2498
  %2752 = vmatpush1.msra.mxu0 %v2497
  %2753 = vmatprep.subr.mxu0 %v2501
  %2754 = vmatpush1.msra.mxu0 %v2500
  %2755 = vmatprep.subr.mxu0 %v2504
  %2756 = vmatpush1.msra.mxu0 %v2503
  %2757 = vmatprep.subr.mxu0 %v2507
  %2758 = vmatpush1.msra.mxu0 %v2506
  %2759 = vmatprep.subr.mxu0 %v2510
  %2760 = vmatpush1.msra.mxu0 %v2509
  %2761 = vmatprep.subr.mxu0 %v2513
  %2762 = vmatpush1.msra.mxu0 %v2512
  %2763 = vmatprep.subr.mxu0 %v2516
  %2764 = vmatpush1.msra.mxu0 %v2515
  %2765 = vmatprep.subr.mxu0 %v2519
  %2766 = vmatpush1.msra.mxu0 %v2518
  %2767 = vmatprep.subr.mxu0 %v2522
  %2768 = vmatpush1.msra.mxu0 %v2521
  %2769 = vmatprep.subr.mxu0 %v2525
  %2770 = vmatpush1.msra.mxu0 %v2524
  %2771 = vmatprep.subr.mxu0 %v2528
  %2772 = vmatpush1.msra.mxu0 %v2527
  %2773 = vmatprep.mubr.f32.mxu0 %v2625
  %2774 = vmatmul.mubr.f32.gmra.mrb[0].mxu0 %v2623
  %v2775 = vpop.f32.mrb[0].mxu0
  %v2776 = vadd.f32 %v2705, %v2775
  %v2777 = vpop.f32.mrb[0].mxu0
  %v2778 = vadd.f32 %v2707, %v2777
  %2779 = vdwg.mxu0
  %2780 = vmatprep.subr.mxu0 %v2531
  %2781 = vmatpush1.msra.mxu0 %v2530
  %2782 = vmatprep.subr.mxu0 %v2534
  %2783 = vmatpush1.msra.mxu0 %v2533
  %2784 = vmatprep.subr.mxu0 %v2537
  %2785 = vmatpush1.msra.mxu0 %v2536
  %2786 = vmatprep.subr.mxu0 %v2540
  %2787 = vmatpush1.msra.mxu0 %v2539
  %2788 = vmatprep.subr.mxu0 %v2543
  %2789 = vmatpush1.msra.mxu0 %v2542
  %2790 = vmatprep.subr.mxu0 %v2546
  %2791 = vmatpush1.msra.mxu0 %v2545
  %2792 = vmatprep.subr.mxu0 %v2549
  %2793 = vmatpush1.msra.mxu0 %v2548
  %2794 = vmatprep.subr.mxu0 %v2552
  %2795 = vmatpush1.msra.mxu0 %v2551
  %2796 = vmatprep.subr.mxu0 %v2555
  %2797 = vmatpush1.msra.mxu0 %v2554
  %2798 = vmatprep.subr.mxu0 %v2558
  %2799 = vmatpush1.msra.mxu0 %v2557
  %2800 = vmatprep.subr.mxu0 %v2561
  %2801 = vmatpush1.msra.mxu0 %v2560
  %2802 = vmatprep.subr.mxu0 %v2564
  %2803 = vmatpush1.msra.mxu0 %v2563
  %2804 = vmatprep.subr.mxu0 %v2567
  %2805 = vmatpush1.msra.mxu0 %v2566
  %2806 = vmatprep.subr.mxu0 %v2570
  %2807 = vmatpush1.msra.mxu0 %v2569
  %2808 = vmatprep.subr.mxu0 %v2573
  %2809 = vmatpush1.msra.mxu0 %v2572
  %2810 = vmatprep.subr.mxu0 %v2576
  %2811 = vmatpush1.msra.mxu0 %v2575
  %2812 = vmatprep.subr.mxu0 %v2579
  %2813 = vmatpush1.msra.mxu0 %v2578
  %2814 = vmatprep.subr.mxu0 %v2582
  %2815 = vmatpush1.msra.mxu0 %v2581
  %2816 = vmatprep.subr.mxu0 %v2585
  %2817 = vmatpush1.msra.mxu0 %v2584
  %2818 = vmatprep.subr.mxu0 %v2588
  %2819 = vmatpush1.msra.mxu0 %v2587
  %2820 = vmatprep.subr.mxu0 0.0
  %2821 = vmatpush1.msra.mxu0 0.0
  %2822 = vmatprep.subr.mxu0 0.0
  %2823 = vmatpush1.msra.mxu0 0.0
  %2824 = vmatprep.subr.mxu0 0.0
  %2825 = vmatpush1.msra.mxu0 0.0
  %2826 = vmatprep.subr.mxu0 0.0
  %2827 = vmatpush1.msra.mxu0 0.0
  %2828 = vmatprep.subr.mxu0 0.0
  %2829 = vmatpush1.msra.mxu0 0.0
  %2830 = vmatprep.subr.mxu0 0.0
  %2831 = vmatpush1.msra.mxu0 0.0
  %2832 = vmatprep.subr.mxu0 0.0
  %2833 = vmatpush1.msra.mxu0 0.0
  %2834 = vmatprep.subr.mxu0 0.0
  %2835 = vmatpush1.msra.mxu0 0.0
  %2836 = vmatprep.subr.mxu0 0.0
  %2837 = vmatpush1.msra.mxu0 0.0
  %2838 = vmatprep.subr.mxu0 0.0
  %2839 = vmatpush1.msra.mxu0 0.0
  %2840 = vmatprep.subr.mxu0 0.0
  %2841 = vmatpush1.msra.mxu0 0.0
  %2842 = vmatprep.subr.mxu0 0.0
  %2843 = vmatpush1.msra.mxu0 0.0
  %2844 = vmatprep.mubr.f32.mxu0 %v2636
  %2845 = vmatmul.mubr.f32.gmra.mrb[0].mxu0 %v2627
  %v2846 = vpop.f32.mrb[0].mxu0
  %v2847 = vadd.f32 %v2776, %v2846
  %v2848 = vpop.f32.mrb[0].mxu0
  %v2849 = vadd.f32 %v2778, %v2848
  %2850 = vdwg.mxu0
  %2851 = vmatprep.subr.mxu0 0.0
  %2852 = vmatpush1.msra.mxu0 %v2340
  %2853 = vmatprep.subr.mxu0 0.0
  %2854 = vmatpush1.msra.mxu0 %v2343
  %2855 = vmatprep.subr.mxu0 0.0
  %2856 = vmatpush1.msra.mxu0 %v2346
  %2857 = vmatprep.subr.mxu0 0.0
  %2858 = vmatpush1.msra.mxu0 %v2349
  %2859 = vmatprep.subr.mxu0 0.0
  %2860 = vmatpush1.msra.mxu0 %v2352
  %2861 = vmatprep.subr.mxu0 0.0
  %2862 = vmatpush1.msra.mxu0 %v2355
  %2863 = vmatprep.subr.mxu0 0.0
  %2864 = vmatpush1.msra.mxu0 %v2358
  %2865 = vmatprep.subr.mxu0 0.0
  %2866 = vmatpush1.msra.mxu0 %v2361
  %2867 = vmatprep.subr.mxu0 0.0
  %2868 = vmatpush1.msra.mxu0 %v2364
  %2869 = vmatprep.subr.mxu0 0.0
  %2870 = vmatpush1.msra.mxu0 %v2367
  %2871 = vmatprep.subr.mxu0 0.0
  %2872 = vmatpush1.msra.mxu0 %v2370
  %2873 = vmatprep.subr.mxu0 0.0
  %2874 = vmatpush1.msra.mxu0 %v2373
  %2875 = vmatprep.subr.mxu0 0.0
  %2876 = vmatpush1.msra.mxu0 %v2376
  %2877 = vmatprep.subr.mxu0 0.0
  %2878 = vmatpush1.msra.mxu0 %v2379
  %2879 = vmatprep.subr.mxu0 0.0
  %2880 = vmatpush1.msra.mxu0 %v2382
  %2881 = vmatprep.subr.mxu0 0.0
  %2882 = vmatpush1.msra.mxu0 %v2385
  %2883 = vmatprep.subr.mxu0 0.0
  %2884 = vmatpush1.msra.mxu0 %v2388
  %2885 = vmatprep.subr.mxu0 0.0
  %2886 = vmatpush1.msra.mxu0 %v2391
  %2887 = vmatprep.subr.mxu0 0.0
  %2888 = vmatpush1.msra.mxu0 %v2394
  %2889 = vmatprep.subr.mxu0 0.0
  %2890 = vmatpush1.msra.mxu0 %v2397
  %2891 = vmatprep.subr.mxu0 0.0
  %2892 = vmatpush1.msra.mxu0 %v2400
  %2893 = vmatprep.subr.mxu0 0.0
  %2894 = vmatpush1.msra.mxu0 %v2403
  %2895 = vmatprep.subr.mxu0 0.0
  %2896 = vmatpush1.msra.mxu0 %v2406
  %2897 = vmatprep.subr.mxu0 0.0
  %2898 = vmatpush1.msra.mxu0 %v2409
  %2899 = vmatprep.subr.mxu0 0.0
  %2900 = vmatpush1.msra.mxu0 %v2412
  %2901 = vmatprep.subr.mxu0 0.0
  %2902 = vmatpush1.msra.mxu0 %v2415
  %2903 = vmatprep.subr.mxu0 0.0
  %2904 = vmatpush1.msra.mxu0 %v2418
  %2905 = vmatprep.subr.mxu0 0.0
  %2906 = vmatpush1.msra.mxu0 %v2421
  %2907 = vmatprep.subr.mxu0 0.0
  %2908 = vmatpush1.msra.mxu0 %v2424
  %2909 = vmatprep.subr.mxu0 0.0
  %2910 = vmatpush1.msra.mxu0 %v2427
  %2911 = vmatprep.subr.mxu0 0.0
  %2912 = vmatpush1.msra.mxu0 %v2430
  %2913 = vmatprep.subr.mxu0 0.0
  %2914 = vmatpush1.msra.mxu0 %v2433
  %2915 = vmatprep.mubr.f32.mxu0 %v2621
  %2916 = vmatmul.mubr.f32.gmra.mrb[0].mxu0 %v2619
  %v2917 = vpop.f32.mrb[0].mxu0
  %v2918 = vadd.f32 %v2603, %v2917
  %v2919 = vpop.f32.mrb[0].mxu0
  %2920 = vdwg.mxu0
  %2921 = vmatprep.subr.mxu0 0.0
  %2922 = vmatpush1.msra.mxu0 %v2436
  %2923 = vmatprep.subr.mxu0 0.0
  %2924 = vmatpush1.msra.mxu0 %v2439
  %2925 = vmatprep.subr.mxu0 0.0
  %2926 = vmatpush1.msra.mxu0 %v2442
  %2927 = vmatprep.subr.mxu0 0.0
  %2928 = vmatpush1.msra.mxu0 %v2445
  %2929 = vmatprep.subr.mxu0 0.0
  %2930 = vmatpush1.msra.mxu0 %v2448
  %2931 = vmatprep.subr.mxu0 0.0
  %2932 = vmatpush1.msra.mxu0 %v2451
  %2933 = vmatprep.subr.mxu0 0.0
  %2934 = vmatpush1.msra.mxu0 %v2454
  %2935 = vmatprep.subr.mxu0 0.0
  %2936 = vmatpush1.msra.mxu0 %v2457
  %2937 = vmatprep.subr.mxu0 0.0
  %2938 = vmatpush1.msra.mxu0 %v2460
  %2939 = vmatprep.subr.mxu0 0.0
  %2940 = vmatpush1.msra.mxu0 %v2463
  %2941 = vmatprep.subr.mxu0 0.0
  %2942 = vmatpush1.msra.mxu0 %v2466
  %2943 = vmatprep.subr.mxu0 0.0
  %2944 = vmatpush1.msra.mxu0 %v2469
  %2945 = vmatprep.subr.mxu0 0.0
  %2946 = vmatpush1.msra.mxu0 %v2472
  %2947 = vmatprep.subr.mxu0 0.0
  %2948 = vmatpush1.msra.mxu0 %v2475
  %2949 = vmatprep.subr.mxu0 0.0
  %2950 = vmatpush1.msra.mxu0 %v2478
  %2951 = vmatprep.subr.mxu0 0.0
  %2952 = vmatpush1.msra.mxu0 %v2481
  %2953 = vmatprep.subr.mxu0 0.0
  %2954 = vmatpush1.msra.mxu0 %v2484
  %2955 = vmatprep.subr.mxu0 0.0
  %2956 = vmatpush1.msra.mxu0 %v2487
  %2957 = vmatprep.subr.mxu0 0.0
  %2958 = vmatpush1.msra.mxu0 %v2490
  %2959 = vmatprep.subr.mxu0 0.0
  %2960 = vmatpush1.msra.mxu0 %v2493
  %2961 = vmatprep.subr.mxu0 0.0
  %2962 = vmatpush1.msra.mxu0 %v2496
  %2963 = vmatprep.subr.mxu0 0.0
  %2964 = vmatpush1.msra.mxu0 %v2499
  %2965 = vmatprep.subr.mxu0 0.0
  %2966 = vmatpush1.msra.mxu0 %v2502
  %2967 = vmatprep.subr.mxu0 0.0
  %2968 = vmatpush1.msra.mxu0 %v2505
  %2969 = vmatprep.subr.mxu0 0.0
  %2970 = vmatpush1.msra.mxu0 %v2508
  %2971 = vmatprep.subr.mxu0 0.0
  %2972 = vmatpush1.msra.mxu0 %v2511
  %2973 = vmatprep.subr.mxu0 0.0
  %2974 = vmatpush1.msra.mxu0 %v2514
  %2975 = vmatprep.subr.mxu0 0.0
  %2976 = vmatpush1.msra.mxu0 %v2517
  %2977 = vmatprep.subr.mxu0 0.0
  %2978 = vmatpush1.msra.mxu0 %v2520
  %2979 = vmatprep.subr.mxu0 0.0
  %2980 = vmatpush1.msra.mxu0 %v2523
  %2981 = vmatprep.subr.mxu0 0.0
  %2982 = vmatpush1.msra.mxu0 %v2526
  %2983 = vmatprep.subr.mxu0 0.0
  %2984 = vmatpush1.msra.mxu0 %v2529
  %2985 = vmatprep.mubr.f32.mxu0 %v2625
  %2986 = vmatmul.mubr.f32.gmra.mrb[0].mxu0 %v2623
  %v2987 = vpop.f32.mrb[0].mxu0
  %v2988 = vadd.f32 %v2918, %v2987
  %v2989 = vpop.f32.mrb[0].mxu0
  %2990 = vdwg.mxu0
  %2991 = vmatprep.subr.mxu0 0.0
  %2992 = vmatpush1.msra.mxu0 %v2532
  %2993 = vmatprep.subr.mxu0 0.0
  %2994 = vmatpush1.msra.mxu0 %v2535
  %2995 = vmatprep.subr.mxu0 0.0
  %2996 = vmatpush1.msra.mxu0 %v2538
  %2997 = vmatprep.subr.mxu0 0.0
  %2998 = vmatpush1.msra.mxu0 %v2541
  %2999 = vmatprep.subr.mxu0 0.0
  %3000 = vmatpush1.msra.mxu0 %v2544
  %3001 = vmatprep.subr.mxu0 0.0
  %3002 = vmatpush1.msra.mxu0 %v2547
  %3003 = vmatprep.subr.mxu0 0.0
  %3004 = vmatpush1.msra.mxu0 %v2550
  %3005 = vmatprep.subr.mxu0 0.0
  %3006 = vmatpush1.msra.mxu0 %v2553
  %3007 = vmatprep.subr.mxu0 0.0
  %3008 = vmatpush1.msra.mxu0 %v2556
  %3009 = vmatprep.subr.mxu0 0.0
  %3010 = vmatpush1.msra.mxu0 %v2559
  %3011 = vmatprep.subr.mxu0 0.0
  %3012 = vmatpush1.msra.mxu0 %v2562
  %3013 = vmatprep.subr.mxu0 0.0
  %3014 = vmatpush1.msra.mxu0 %v2565
  %3015 = vmatprep.subr.mxu0 0.0
  %3016 = vmatpush1.msra.mxu0 %v2568
  %3017 = vmatprep.subr.mxu0 0.0
  %3018 = vmatpush1.msra.mxu0 %v2571
  %3019 = vmatprep.subr.mxu0 0.0
  %3020 = vmatpush1.msra.mxu0 %v2574
  %3021 = vmatprep.subr.mxu0 0.0
  %3022 = vmatpush1.msra.mxu0 %v2577
  %3023 = vmatprep.subr.mxu0 0.0
  %3024 = vmatpush1.msra.mxu0 %v2580
  %3025 = vmatprep.subr.mxu0 0.0
  %3026 = vmatpush1.msra.mxu0 %v2583
  %3027 = vmatprep.subr.mxu0 0.0
  %3028 = vmatpush1.msra.mxu0 %v2586
  %3029 = vmatprep.subr.mxu0 0.0
  %3030 = vmatpush1.msra.mxu0 %v2589
  %3031 = vmatprep.subr.mxu0 0.0
  %3032 = vmatpush1.msra.mxu0 0.0
  %3033 = vmatprep.subr.mxu0 0.0
  %3034 = vmatpush1.msra.mxu0 0.0
  %3035 = vmatprep.subr.mxu0 0.0
  %3036 = vmatpush1.msra.mxu0 0.0
  %3037 = vmatprep.subr.mxu0 0.0
  %3038 = vmatpush1.msra.mxu0 0.0
  %3039 = vmatprep.subr.mxu0 0.0
  %3040 = vmatpush1.msra.mxu0 0.0
  %3041 = vmatprep.subr.mxu0 0.0
  %3042 = vmatpush1.msra.mxu0 0.0
  %3043 = vmatprep.subr.mxu0 0.0
  %3044 = vmatpush1.msra.mxu0 0.0
  %3045 = vmatprep.subr.mxu0 0.0
  %3046 = vmatpush1.msra.mxu0 0.0
  %3047 = vmatprep.subr.mxu0 0.0
  %3048 = vmatpush1.msra.mxu0 0.0
  %3049 = vmatprep.subr.mxu0 0.0
  %3050 = vmatpush1.msra.mxu0 0.0
  %3051 = vmatprep.subr.mxu0 0.0
  %3052 = vmatpush1.msra.mxu0 0.0
  %3053 = vmatprep.subr.mxu0 0.0
  %3054 = vmatpush1.msra.mxu0 0.0
  %3055 = vmatprep.mubr.f32.mxu0 %v2636
  %3056 = vmatmul.mubr.f32.gmra.mrb[0].mxu0 %v2627
  %v3057 = vpop.f32.mrb[0].mxu0
  %v3058 = vadd.f32 %v2988, %v3057
  %v3059 = vpop.f32.mrb[0].mxu0
  %3060 = vdwg.mxu0
  %vm3061 = vcmp.gt.f32.partialorder %v2847, 0.0
  %vm3062 = vcmp.gt.f32.partialorder %v2849, 0.0
  %vm3063 = vcmp.gt.f32.partialorder %v3058, 0.0
  %v3064 = vmin.f32 %v2847, 0.0
  %v3065 = vmin.f32 %v2849, 0.0
  %v3066 = vmin.f32 %v3058, 0.0
  %v3067 = vmul.f32 %v3064, 1.442695
  %v3068 = vpow.pop %v3067
  %v3069 = vmul.f32 %v3065, 1.442695
  %v3070 = vpow.pop %v3069
  %v3071 = vmul.f32 %v3066, 1.442695
  %v3072 = vpow.pop %v3071
  %v3073 = vsub.f32 %v3068, 1.0
  %v3074 = vsub.f32 %v3070, 1.0
  %v3075 = vsub.f32 %v3072, 1.0
  %v3076 = vsel %vm3061, %v2847, %v3073
  %v3077 = vsel %vm3062, %v2849, %v3074
  %v3078 = vsel %vm3063, %v3058, %v3075
  %v3079 = vld [vmem:[%s7] sm:$0xff]
  %v3080 = vld [vmem:[%s7 + $0x8] sm:$0xff]
  %v3081 = vld [vmem:[%s7 + $0x10] sm:$0xff]
  %v3082 = vld [vmem:[%s7 + $0x18] sm:$0xff]
  %v3083 = vld [vmem:[%s7 + $0x20] sm:$0xff]
  %v3084 = vld [vmem:[%s7 + $0x28] sm:$0xff]
  %v3085 = vld [vmem:[%s7 + $0x30] sm:$0xff]
  %v3086 = vld [vmem:[%s7 + $0x38] sm:$0xff]
  %v3087 = vld [vmem:[%s7 + $0x40] sm:$0xff]
  %v3088 = vld [vmem:[%s7 + $0x48] sm:$0xff]
  %v3089 = vld [vmem:[%s7 + $0x50] sm:$0xff]
  %v3090 = vld [vmem:[%s7 + $0x58] sm:$0xff]
  %v3091 = vld [vmem:[%s7 + $0x60] sm:$0xff]
  %v3092 = vld [vmem:[%s7 + $0x68] sm:$0xff]
  %v3093 = vld [vmem:[%s7 + $0x70] sm:$0xff]
  %v3094 = vld [vmem:[%s7 + $0x78] sm:$0xff]
  %v3095 = vld [vmem:[%s7 + $0x80] sm:$0xff]
  %v3096 = vld [vmem:[%s7 + $0x88] sm:$0xff]
  %v3097 = vld [vmem:[%s7 + $0x90] sm:$0xff]
  %v3098 = vld [vmem:[%s7 + $0x98] sm:$0xff]
  %v3099 = vld [vmem:[%s7 + $0xa0] sm:$0xff]
  %v3100 = vld [vmem:[%s7 + $0xa8] sm:$0xff]
  %v3101 = vld [vmem:[%s7 + $0xb0] sm:$0xff]
  %v3102 = vld [vmem:[%s7 + $0xb8] sm:$0xff]
  %v3103 = vld [vmem:[%s7 + $0xc0] sm:$0xff]
  %v3104 = vld [vmem:[%s7 + $0xc8] sm:$0xff]
  %v3105 = vld [vmem:[%s7 + $0xd0] sm:$0xff]
  %v3106 = vld [vmem:[%s7 + $0xd8] sm:$0xff]
  %v3107 = vld [vmem:[%s7 + $0xe0] sm:$0xff]
  %v3108 = vld [vmem:[%s7 + $0xe8] sm:$0xff]
  %v3109 = vld [vmem:[%s7 + $0xf0] sm:$0xff]
  %v3110 = vld [vmem:[%s7 + $0xf8] sm:$0xff]
  %v3111 = vld [vmem:[%s7 + $0x100] sm:$0xff]
  %v3112 = vld [vmem:[%s7 + $0x108] sm:$0xff]
  %v3113 = vld [vmem:[%s7 + $0x110] sm:$0xff]
  %v3114 = vld [vmem:[%s7 + $0x118] sm:$0xff]
  %v3115 = vld [vmem:[%s7 + $0x120] sm:$0xff]
  %v3116 = vld [vmem:[%s7 + $0x128] sm:$0xff]
  %v3117 = vld [vmem:[%s7 + $0x130] sm:$0xff]
  %v3118 = vld [vmem:[%s7 + $0x138] sm:$0xff]
  %v3119 = vld [vmem:[%s7 + $0x140] sm:$0xff]
  %v3120 = vld [vmem:[%s8] sm:$0x1]
  %v3122 = vlaneseq
  %v3123 = vshrl.u32 %v3122, 7
  %v3124 = vsub.s32 0, %v3123
  %v3125 = vrot.slane %v3120, %v3124
  %v3128 = vsel %vm2257, %v3078, 0
  %3130 = vmatprep.subr.mxu0 0.0
  %3131 = vmatpush1.msra.mxu0 %v3079
  %3132 = vmatprep.subr.mxu0 0.0
  %3133 = vmatpush1.msra.mxu0 %v3080
  %3134 = vmatprep.subr.mxu0 0.0
  %3135 = vmatpush1.msra.mxu0 %v3081
  %3136 = vmatprep.subr.mxu0 0.0
  %3137 = vmatpush1.msra.mxu0 %v3082
  %3138 = vmatprep.subr.mxu0 0.0
  %3139 = vmatpush1.msra.mxu0 %v3083
  %3140 = vmatprep.subr.mxu0 0.0
  %3141 = vmatpush1.msra.mxu0 %v3084
  %3142 = vmatprep.subr.mxu0 0.0
  %3143 = vmatpush1.msra.mxu0 %v3085
  %3144 = vmatprep.subr.mxu0 0.0
  %3145 = vmatpush1.msra.mxu0 %v3086
  %3146 = vmatprep.subr.mxu0 0.0
  %3147 = vmatpush1.msra.mxu0 %v3087
  %3148 = vmatprep.subr.mxu0 0.0
  %3149 = vmatpush1.msra.mxu0 %v3088
  %3150 = vmatprep.subr.mxu0 0.0
  %3151 = vmatpush1.msra.mxu0 %v3089
  %3152 = vmatprep.subr.mxu0 0.0
  %3153 = vmatpush1.msra.mxu0 %v3090
  %3154 = vmatprep.subr.mxu0 0.0
  %3155 = vmatpush1.msra.mxu0 %v3091
  %3156 = vmatprep.subr.mxu0 0.0
  %3157 = vmatpush1.msra.mxu0 %v3092
  %3158 = vmatprep.subr.mxu0 0.0
  %3159 = vmatpush1.msra.mxu0 %v3093
  %3160 = vmatprep.subr.mxu0 0.0
  %3161 = vmatpush1.msra.mxu0 %v3094
  %3162 = vmatprep.subr.mxu0 0.0
  %3163 = vmatpush1.msra.mxu0 %v3095
  %3164 = vmatprep.subr.mxu0 0.0
  %3165 = vmatpush1.msra.mxu0 %v3096
  %3166 = vmatprep.subr.mxu0 0.0
  %3167 = vmatpush1.msra.mxu0 %v3097
  %3168 = vmatprep.subr.mxu0 0.0
  %3169 = vmatpush1.msra.mxu0 %v3098
  %3170 = vmatprep.subr.mxu0 0.0
  %3171 = vmatpush1.msra.mxu0 %v3099
  %3172 = vmatprep.subr.mxu0 0.0
  %3173 = vmatpush1.msra.mxu0 %v3100
  %3174 = vmatprep.subr.mxu0 0.0
  %3175 = vmatpush1.msra.mxu0 %v3101
  %3176 = vmatprep.subr.mxu0 0.0
  %3177 = vmatpush1.msra.mxu0 %v3102
  %3178 = vmatprep.subr.mxu0 0.0
  %3179 = vmatpush1.msra.mxu0 %v3103
  %3180 = vmatprep.subr.mxu0 0.0
  %3181 = vmatpush1.msra.mxu0 %v3104
  %3182 = vmatprep.subr.mxu0 0.0
  %3183 = vmatpush1.msra.mxu0 %v3105
  %3184 = vmatprep.subr.mxu0 0.0
  %3185 = vmatpush1.msra.mxu0 %v3106
  %3186 = vmatprep.subr.mxu0 0.0
  %3187 = vmatpush1.msra.mxu0 %v3107
  %3188 = vmatprep.subr.mxu0 0.0
  %3189 = vmatpush1.msra.mxu0 %v3108
  %3190 = vmatprep.subr.mxu0 0.0
  %3191 = vmatpush1.msra.mxu0 %v3109
  %3192 = vmatprep.subr.mxu0 0.0
  %3193 = vmatpush1.msra.mxu0 %v3110
  %3194 = vmatprep.mubr.f32.mxu0 %v3077
  %3195 = vmatmul.mubr.f32.gmra.mrb[0].mxu0 %v3076
  %v3196 = vpop.f32.mrb[0].mxu0
  %v3197 = vadd.f32 %v3125, %v3196
  %v3198 = vpop.f32.mrb[0].mxu0
  %3199 = vdwg.mxu0
  %3200 = vmatprep.subr.mxu0 0.0
  %3201 = vmatpush1.msra.mxu0 %v3111
  %3202 = vmatprep.subr.mxu0 0.0
  %3203 = vmatpush1.msra.mxu0 %v3112
  %3204 = vmatprep.subr.mxu0 0.0
  %3205 = vmatpush1.msra.mxu0 %v3113
  %3206 = vmatprep.subr.mxu0 0.0
  %3207 = vmatpush1.msra.mxu0 %v3114
  %3208 = vmatprep.subr.mxu0 0.0
  %3209 = vmatpush1.msra.mxu0 %v3115
  %3210 = vmatprep.subr.mxu0 0.0
  %3211 = vmatpush1.msra.mxu0 %v3116
  %3212 = vmatprep.subr.mxu0 0.0
  %3213 = vmatpush1.msra.mxu0 %v3117
  %3214 = vmatprep.subr.mxu0 0.0
  %3215 = vmatpush1.msra.mxu0 %v3118
  %3216 = vmatprep.subr.mxu0 0.0
  %3217 = vmatpush1.msra.mxu0 %v3119
  %3218 = vmatprep.subr.mxu0 0.0
  %3219 = vmatpush1.msra.mxu0 0.0
  %3220 = vmatprep.subr.mxu0 0.0
  %3221 = vmatpush1.msra.mxu0 0.0
  %3222 = vmatprep.subr.mxu0 0.0
  %3223 = vmatpush1.msra.mxu0 0.0
  %3224 = vmatprep.subr.mxu0 0.0
  %3225 = vmatpush1.msra.mxu0 0.0
  %3226 = vmatprep.subr.mxu0 0.0
  %3227 = vmatpush1.msra.mxu0 0.0
  %3228 = vmatprep.subr.mxu0 0.0
  %3229 = vmatpush1.msra.mxu0 0.0
  %3230 = vmatprep.subr.mxu0 0.0
  %3231 = vmatpush1.msra.mxu0 0.0
  %3232 = vmatprep.subr.mxu0 0.0
  %3233 = vmatpush1.msra.mxu0 0.0
  %3234 = vmatprep.subr.mxu0 0.0
  %3235 = vmatpush1.msra.mxu0 0.0
  %3236 = vmatprep.subr.mxu0 0.0
  %3237 = vmatpush1.msra.mxu0 0.0
  %3238 = vmatprep.subr.mxu0 0.0
  %3239 = vmatpush1.msra.mxu0 0.0
  %3240 = vmatprep.subr.mxu0 0.0
  %3241 = vmatpush1.msra.mxu0 0.0
  %3242 = vmatprep.subr.mxu0 0.0
  %3243 = vmatpush1.msra.mxu0 0.0
  %3244 = vmatprep.subr.mxu0 0.0
  %3245 = vmatpush1.msra.mxu0 0.0
  %3246 = vmatprep.subr.mxu0 0.0
  %3247 = vmatpush1.msra.mxu0 0.0
  %3248 = vmatprep.subr.mxu0 0.0
  %3249 = vmatpush1.msra.mxu0 0.0
  %3250 = vmatprep.subr.mxu0 0.0
  %3251 = vmatpush1.msra.mxu0 0.0
  %3252 = vmatprep.subr.mxu0 0.0
  %3253 = vmatpush1.msra.mxu0 0.0
  %3254 = vmatprep.subr.mxu0 0.0
  %3255 = vmatpush1.msra.mxu0 0.0
  %3256 = vmatprep.subr.mxu0 0.0
  %3257 = vmatpush1.msra.mxu0 0.0
  %3258 = vmatprep.subr.mxu0 0.0
  %3259 = vmatpush1.msra.mxu0 0.0
  %3260 = vmatprep.subr.mxu0 0.0
  %3261 = vmatpush1.msra.mxu0 0.0
  %3262 = vmatprep.subr.mxu0 0.0
  %3263 = vmatpush1.msra.mxu0 0.0
  %3264 = vmatprep.mubr.f32.mxu0 0.0
  %3265 = vmatmul.mubr.f32.gmra.mrb[0].mxu0 %v3128
  %v3266 = vpop.f32.mrb[0].mxu0
  %v3267 = vadd.f32 %v3197, %v3266
  %v3268 = vpop.f32.mrb[0].mxu0
  %3269 = vdwg.mxu0
  %vm3270 = vcmp.gt.f32.partialorder %v3267, 0.0
  %v3271 = vmin.f32 %v3267, 0.0
  %v3272 = vmul.f32 %v3271, 1.442695
  %v3273 = vpow.pop %v3272
  %v3274 = vsub.f32 %v3273, 1.0
  %v3275 = vsel %vm3270, %v3267, %v3274
  %v3276 = vld [vmem:[%s9] sm:$0x1]
  %v3278 = vlaneseq
  %v3279 = vshrl.u32 %v3278, 7
  %v3280 = vsub.s32 0, %v3279
  %v3281 = vrot.slane %v3276, %v3280
  %v3283 = vmul.f32 %v3275, %v3281
  %vm3284 = vcmask 320512
  %v3285 = vsel %vm3284, %v3283, 0.0
  %3286 = vadd.xlane.f32.xlu0 %v3285
  %v3287 = vpop.xlane.xlu0 %3286
  %v3288 = vld [vmem:[#allocation2] sm:$0x1]
  %v3290 = vlaneseq
  %v3291 = vshrl.u32 %v3290, 7
  %v3292 = vsub.s32 0, %v3291
  %v3293 = vrot.slane %v3288, %v3292
  %v3295 = vadd.f32 %v3287, %v3293
  %v3296 = vsub.f32 0.0, %v3295
  %v3297 = vmul.f32 %v3296, 1.442695
  %v3298 = vpow.pop %v3297
  %v3299 = vadd.f32 %v3298, 1.0
  %v3300 = vrcp.pop %v3299
  %vm3301 = vcmask 1024
  %3302 = vst.msk [vmem:[%s11] sm:$0x3] %vm3301, %v3300
  // Predicated region
  $region46: #{forward.1} parent=0 // pred_check
    _
  $region47: #{forward.1} parent=0 // pred_check_branch
    %3304 = sbr.rel (0) target = $region49
  $region48: #{forward.1} parent=0 // pred_region
    _
  $region49: #{forward.1} parent=0 // pred_fallthru
    _
  // Predicated region
  $region50: #{forward.1} parent=0 // pred_check
    _
  $region51: #{forward.1} parent=0 // pred_check_branch
    %3306 = sbr.rel (0) target = $region53
  $region52: #{forward.1} parent=0 // pred_region
    _
  $region53: #{forward.1} parent=0 // pred_fallthru
    _

</llo_original>
